<compile_context>
chip_gen: v6e
topology: v6e:2x2x1
jax: 0.10.0
libtpu: 0.0.40
codegen_flags: <defaults>
</compile_context>

<pallas_src>
import math
import functools

import jax
import jax.numpy as jnp
from jax.experimental import pallas as pl
from jax.experimental.pallas import tpu as pltpu

LN_EPS = 1e-5  # torch nn.LayerNorm default


# ---------------------------------------------------------------- in-kernel math
def _layernorm(x, w, b):
    mu = jnp.mean(x, axis=-1, keepdims=True)
    var = jnp.mean(jnp.square(x - mu), axis=-1, keepdims=True)
    return (x - mu) * jax.lax.rsqrt(var + LN_EPS) * w + b


def _erf(x):
    # float32-accurate erf (Abramowitz & Stegun 7.1.26, |err| <= 1.5e-7).
    # lax.erf has no Pallas-TPU lowering rule; exp / div / mul do.
    a1, a2, a3, a4, a5 = (0.254829592, -0.284496736, 1.421413741,
                          -1.453152027, 1.061405429)
    p = 0.3275911
    s = jnp.where(x >= 0.0, 1.0, -1.0)
    ax = jnp.abs(x)
    # exact divide: approx EUP reciprocal (~1e-3 rel err) was the accuracy
    # killer in the previous version.
    t = 1.0 / (1.0 + p * ax)
    poly = ((((a5 * t + a4) * t + a3) * t + a2) * t + a1) * t
    return s * (1.0 - poly * jnp.exp(-ax * ax))


def _gelu_exact(x):
    # matches torch nn.GELU() (erf-based) to well within 1e-5
    return 0.5 * x * (1.0 + _erf(x * (1.0 / math.sqrt(2.0))))


def _softmax_lastdim(s):
    s = s - jnp.max(s, axis=-1, keepdims=True)
    e = jnp.exp(s)
    return e / jnp.sum(e, axis=-1, keepdims=True)


# ---------------------------------------------------------------- fused kernel
def fused_transformer_kernel(x_ref, ln_ref, wqkv_ref, bqkv_ref, wp_ref, bp_ref,
                             w1_ref, b1_ref, w2_ref, b2_ref,
                             lnf_w_ref, lnf_b_ref, head_w_ref, o_ref,
                             *, n_layers, n_head, B, T):
    """Entire transformer (all layers + final LN + head) for all batch
    elements in one kernel invocation.  Activations live as [B*T, C]."""
    x = x_ref[...]                              # [B*T, C]
    BT, C = x.shape
    hs = C // n_head

    for l in range(n_layers):                   # static unroll over layers
        lnp = ln_ref[l]                         # [4, C]: ln1_w, ln1_b, ln2_w, ln2_b

        # ---- attention branch (1/sqrt(hs) already folded into Q weights/bias)
        h1 = _layernorm(x, lnp[0:1], lnp[1:2])
        qkv = jnp.dot(h1, wqkv_ref[l],
                      preferred_element_type=jnp.float32) + bqkv_ref[l]  # [BT, 3C]
        q = qkv[:, 0:C]
        k = qkv[:, C:2 * C]
        v = qkv[:, 2 * C:3 * C]

        wp = wp_ref[l]                          # [C, C]
        y = jnp.zeros((BT, C), jnp.float32)
        for h in range(n_head):                 # static unroll over heads
            qh = q[:, h * hs:(h + 1) * hs].reshape(B, T, hs)
            kh = k[:, h * hs:(h + 1) * hs].reshape(B, T, hs)
            vh = v[:, h * hs:(h + 1) * hs].reshape(B, T, hs)
            # batched over B in a single MXU pass per head (no per-batch loop)
            att = jnp.einsum('bqd,bkd->bqk', qh, kh,
                             preferred_element_type=jnp.float32)         # [B, T, T]
            att = _softmax_lastdim(att)
            yh = jnp.einsum('bqk,bkd->bqd', att, vh,
                            preferred_element_type=jnp.float32)          # [B, T, hs]
            # accumulate straight into the output projection (no concat)
            y = y + jnp.dot(yh.reshape(BT, hs), wp[h * hs:(h + 1) * hs, :],
                            preferred_element_type=jnp.float32)
        x = x + y + bp_ref[l]                   # residual 1 (+ proj bias)

        # ---- MLP branch
        h2 = _layernorm(x, lnp[2:3], lnp[3:4])
        m = jnp.dot(h2, w1_ref[l], preferred_element_type=jnp.float32) + b1_ref[l]
        m = _gelu_exact(m)
        x = x + jnp.dot(m, w2_ref[l], preferred_element_type=jnp.float32) + b2_ref[l]

    # ---- final LayerNorm + bias-free logit head
    xf = _layernorm(x, lnf_w_ref[...], lnf_b_ref[...])
    o_ref[...] = jnp.dot(xf, head_w_ref[...], preferred_element_type=jnp.float32)


# ---------------------------------------------------------------- wrappers
def _full_spec(shape):
    nd = len(shape)
    return pl.BlockSpec(shape, lambda i, _nd=nd: (0,) * _nd)


def pack_params(params, n_head):
    """Stack per-layer params along a leading layer axis, fuse Q|K|V, and fold
    the 1/sqrt(head_size) attention scale into the Q projection (one-time
    host-side transform, not a runtime op)."""
    C = params["tok_emb"].shape[1]
    hs = C // n_head
    scale = 1.0 / math.sqrt(hs)

    ln_l, wqkv_l, bqkv_l, wp_l, bp_l, w1_l, b1_l, w2_l, b2_l = ([] for _ in range(9))
    for (ln1_w, ln1_b, wq, bq, wk, bk, wv, bv, wp, bp,
         ln2_w, ln2_b, w1, b1, w2, b2) in params["blocks"]:
        ln_l.append(jnp.stack([ln1_w[0], ln1_b[0], ln2_w[0], ln2_b[0]]))   # [4, C]
        wqkv_l.append(jnp.concatenate([wq * scale, wk, wv], axis=1))       # [C, 3C]
        bqkv_l.append(jnp.concatenate([bq * scale, bk, bv], axis=1))       # [1, 3C]
        wp_l.append(wp); bp_l.append(bp)
        w1_l.append(w1); b1_l.append(b1)
        w2_l.append(w2); b2_l.append(b2)

    return dict(
        ln=jnp.stack(ln_l), wqkv=jnp.stack(wqkv_l), bqkv=jnp.stack(bqkv_l),
        wp=jnp.stack(wp_l), bp=jnp.stack(bp_l),
        w1=jnp.stack(w1_l), b1=jnp.stack(b1_l),
        w2=jnp.stack(w2_l), b2=jnp.stack(b2_l))


def transformer_forward(idx, params, n_head):
    """Full forward pass. Embedding gather + pos add is plain-JAX glue; the
    entire transformer stack runs inside a single fused Pallas kernel."""
    tok_emb = params["tok_emb"]
    pos_emb = params["pos_emb"]
    B, T = idx.shape
    C = tok_emb.shape[1]
    V = params["head_w"].shape[1]

    x = jnp.take(tok_emb, idx, axis=0) + pos_emb[:, :T, :]      # [B, T, C]
    x = x.reshape(B * T, C)                                     # collapse B into rows
    # self.drop is identity in eval mode

    packed = pack_params(params, n_head)
    n_layers = packed["ln"].shape[0]

    inputs = [x, packed["ln"], packed["wqkv"], packed["bqkv"], packed["wp"],
              packed["bp"], packed["w1"], packed["b1"], packed["w2"],
              packed["b2"], params["lnf_w"], params["lnf_b"], params["head_w"]]

    out = pl.pallas_call(
        functools.partial(fused_transformer_kernel, n_layers=n_layers,
                          n_head=n_head, B=B, T=T),
        out_shape=jax.ShapeDtypeStruct((B * T, V), jnp.float32),
        grid=(1,),
        in_specs=[_full_spec(a.shape) for a in inputs],
        out_specs=_full_spec((B * T, V)),
        compiler_params=pltpu.CompilerParams(
            dimension_semantics=("arbitrary",)),
    )(*inputs)
    return out.reshape(B, T, V)


# ---------------------------------------------------------------- pure-JAX reference
def reference_forward(idx, params, n_head):
    tok_emb, pos_emb = params["tok_emb"], params["pos_emb"]
    T = idx.shape[1]
    x = jnp.take(tok_emb, idx, axis=0) + pos_emb[:, :T, :]
    B, T, C = x.shape
    hs = C // n_head
    hi = jax.lax.Precision.HIGHEST

    def ln(z, w, b):
        mu = jnp.mean(z, axis=-1, keepdims=True)
        var = jnp.mean(jnp.square(z - mu), axis=-1, keepdims=True)
        return (z - mu) * jax.lax.rsqrt(var + LN_EPS) * w + b

    for (ln1_w, ln1_b, wq, bq, wk, bk, wv, bv, wp, bp,
         ln2_w, ln2_b, w1, b1, w2, b2) in params["blocks"]:
        h1 = ln(x, ln1_w, ln1_b)
        q = (h1 @ wq + bq).reshape(B, T, n_head, hs).transpose(0, 2, 1, 3)
        k = (h1 @ wk + bk).reshape(B, T, n_head, hs).transpose(0, 2, 1, 3)
        v = (h1 @ wv + bv).reshape(B, T, n_head, hs).transpose(0, 2, 1, 3)
        att = jnp.einsum("bhtd,bhsd->bhts", q, k, precision=hi) / math.sqrt(hs)
        att = jax.nn.softmax(att, axis=-1)
        y = jnp.einsum("bhts,bhsd->bhtd", att, v, precision=hi)
        y = y.transpose(0, 2, 1, 3).reshape(B, T, C)
        x = x + (y @ wp + bp)
        h2 = ln(x, ln2_w, ln2_b)
        m = jax.nn.gelu(h2 @ w1 + b1, approximate=False)
        x = x + (m @ w2 + b2)
    x = ln(x, params["lnf_w"], params["lnf_b"])
    return x @ params["head_w"]


# ---------------------------------------------------------------- setup / main
def init_params(key, vocab_size, block_size, n_embd, n_head, n_layers,
                codebook_size):
    ks = iter(jax.random.split(key, 8 + 12 * n_layers))

    def lin(fan_in, fan_out):
        w = 0.02 * jax.random.normal(next(ks), (fan_in, fan_out), jnp.float32)
        b = jnp.zeros((1, fan_out), jnp.float32)
        return w, b

    params = {
        "tok_emb": 0.02 * jax.random.normal(next(ks), (vocab_size, n_embd),
                                            jnp.float32),
        "pos_emb": 0.02 * jax.random.normal(next(ks), (1, block_size, n_embd),
                                            jnp.float32),
        "lnf_w": jnp.ones((1, n_embd), jnp.float32),
        "lnf_b": jnp.zeros((1, n_embd), jnp.float32),
        "head_w": 0.02 * jax.random.normal(next(ks), (n_embd, codebook_size),
                                           jnp.float32),
        "blocks": [],
    }
    for _ in range(n_layers):
        wq, bq = lin(n_embd, n_embd)
        wk, bk = lin(n_embd, n_embd)
        wv, bv = lin(n_embd, n_embd)
        wp, bp = lin(n_embd, n_embd)
        w1, b1 = lin(n_embd, 4 * n_embd)
        w2, b2 = lin(4 * n_embd, n_embd)
        params["blocks"].append((
            jnp.ones((1, n_embd), jnp.float32), jnp.zeros((1, n_embd), jnp.float32),
            wq, bq, wk, bk, wv, bv, wp, bp,
            jnp.ones((1, n_embd), jnp.float32), jnp.zeros((1, n_embd), jnp.float32),
            w1, b1, w2, b2))
    return params


if __name__ == "__main__":
    # Small config implied by the module: H.bert_n_emb=32, H.bert_n_head=4,
    # H.bert_n_layers=2, H.codebook_size=16, H.block_size=16,
    # sampler != 'autoregressive' (non-causal), use_hydra_na=False.
    B, T = 2, 8
    n_embd, n_head, n_layers = 32, 4, 2
    codebook_size, block_size = 16, 16
    vocab_size = codebook_size + 1

    key = jax.random.PRNGKey(0)
    k_param, k_idx = jax.random.split(key)
    params = init_params(k_param, vocab_size, block_size, n_embd, n_head,
                         n_layers, codebook_size)
    idx = jax.random.randint(k_idx, (B, T), 0, vocab_size, dtype=jnp.int32)

    logits = transformer_forward(idx, params, n_head)
    logits = jax.block_until_ready(logits)

    ref = jax.block_until_ready(reference_forward(idx, params, n_head))
    assert logits.shape == (B, T, codebook_size), logits.shape
    assert jnp.allclose(logits, ref, atol=2e-3, rtol=2e-3), (
        float(jnp.max(jnp.abs(logits - ref))))

    # TODO(synk): causal (autoregressive) masking and the Hydra neighborhood-
    # attention branch (na1d / rotary) are not exercised by this config path.
    # TODO(synk): for large C on v6e/v7x, cast weights/activations to bf16 and
    # tile the MLP hidden dim with a grid axis (weights no longer fit VMEM).
    print("KERNEL_OK")
</pallas_src>

<mosaic_0001>
module attributes {stable_mosaic.version = 11 : i64} {
  func.func @fused_transformer_kernel(%arg0: i32, %arg1: memref<16x32xf32, #tpu.memory_space<vmem>>, %arg2: memref<2x4x32xf32, #tpu.memory_space<vmem>>, %arg3: memref<2x32x96xf32, #tpu.memory_space<vmem>>, %arg4: memref<2x1x96xf32, #tpu.memory_space<vmem>>, %arg5: memref<2x32x32xf32, #tpu.memory_space<vmem>>, %arg6: memref<2x1x32xf32, #tpu.memory_space<vmem>>, %arg7: memref<2x32x128xf32, #tpu.memory_space<vmem>>, %arg8: memref<2x1x128xf32, #tpu.memory_space<vmem>>, %arg9: memref<2x128x32xf32, #tpu.memory_space<vmem>>, %arg10: memref<2x1x32xf32, #tpu.memory_space<vmem>>, %arg11: memref<1x32xf32, #tpu.memory_space<vmem>>, %arg12: memref<1x32xf32, #tpu.memory_space<vmem>>, %arg13: memref<32x16xf32, #tpu.memory_space<vmem>>, %arg14: memref<16x16xf32, #tpu.memory_space<vmem>>) attributes {dimension_semantics = [#tpu.dimension_semantics<arbitrary>], iteration_bounds = array<i64: 1>, scalar_prefetch = 0 : i64, scratch_operands = 0 : i64, tpu.core_type = #tpu.core_type<tc>, window_params = [{pipeline_mode = #tpu.pipeline_mode<synchronous>, transform_indices = @transform_0, window_bounds = array<i64: 16, 32>}, {pipeline_mode = #tpu.pipeline_mode<synchronous>, transform_indices = @transform_1, window_bounds = array<i64: 2, 4, 32>}, {pipeline_mode = #tpu.pipeline_mode<synchronous>, transform_indices = @transform_2, window_bounds = array<i64: 2, 32, 96>}, {pipeline_mode = #tpu.pipeline_mode<synchronous>, transform_indices = @transform_3, window_bounds = array<i64: 2, 1, 96>}, {pipeline_mode = #tpu.pipeline_mode<synchronous>, transform_indices = @transform_4, window_bounds = array<i64: 2, 32, 32>}, {pipeline_mode = #tpu.pipeline_mode<synchronous>, transform_indices = @transform_5, window_bounds = array<i64: 2, 1, 32>}, {pipeline_mode = #tpu.pipeline_mode<synchronous>, transform_indices = @transform_6, window_bounds = array<i64: 2, 32, 128>}, {pipeline_mode = #tpu.pipeline_mode<synchronous>, transform_indices = @transform_7, window_bounds = array<i64: 2, 1, 128>}, {pipeline_mode = #tpu.pipeline_mode<synchronous>, transform_indices = @transform_8, window_bounds = array<i64: 2, 128, 32>}, {pipeline_mode = #tpu.pipeline_mode<synchronous>, transform_indices = @transform_9, window_bounds = array<i64: 2, 1, 32>}, {pipeline_mode = #tpu.pipeline_mode<synchronous>, transform_indices = @transform_10, window_bounds = array<i64: 1, 32>}, {pipeline_mode = #tpu.pipeline_mode<synchronous>, transform_indices = @transform_11, window_bounds = array<i64: 1, 32>}, {pipeline_mode = #tpu.pipeline_mode<synchronous>, transform_indices = @transform_12, window_bounds = array<i64: 32, 16>}, {pipeline_mode = #tpu.pipeline_mode<synchronous>, transform_indices = @transform_13, window_bounds = array<i64: 16, 16>}]} {
    %c0 = arith.constant 0 : index
    %c0_0 = arith.constant 0 : index
    %0 = vector.load %arg1[%c0, %c0_0] : memref<16x32xf32, #tpu.memory_space<vmem>>, vector<16x32xf32>
    %c0_1 = arith.constant 0 : index
    %c0_2 = arith.constant 0 : index
    %c0_3 = arith.constant 0 : index
    %1 = vector.load %arg2[%c0_1, %c0_2, %c0_3] : memref<2x4x32xf32, #tpu.memory_space<vmem>>, vector<1x4x32xf32>
    %2 = vector.shape_cast %1 : vector<1x4x32xf32> to vector<4x32xf32>
    %3 = vector.extract_strided_slice %2 {offsets = [0, 0], sizes = [1, 32], strides = [1, 1]} : vector<4x32xf32> to vector<1x32xf32>
    %4 = vector.extract_strided_slice %2 {offsets = [1, 0], sizes = [1, 32], strides = [1, 1]} : vector<4x32xf32> to vector<1x32xf32>
    %cst = arith.constant dense<0.000000e+00> : vector<16xf32>
    %5 = vector.multi_reduction <add>, %0, %cst [1] : vector<16x32xf32> to vector<16xf32>
    %6 = vector.shape_cast %5 : vector<16xf32> to vector<16x1xf32>
    %cst_4 = arith.constant 3.200000e+01 : f32
    %7 = vector.broadcast %cst_4 : f32 to vector<16x1xf32>
    %8 = arith.divf %6, %7 : vector<16x1xf32>
    %9 = vector.broadcast %8 : vector<16x1xf32> to vector<16x32xf32>
    %10 = arith.subf %0, %9 : vector<16x32xf32>
    %11 = arith.mulf %10, %10 : vector<16x32xf32>
    %cst_5 = arith.constant dense<0.000000e+00> : vector<16xf32>
    %12 = vector.multi_reduction <add>, %11, %cst_5 [1] : vector<16x32xf32> to vector<16xf32>
    %13 = vector.shape_cast %12 : vector<16xf32> to vector<16x1xf32>
    %cst_6 = arith.constant 3.200000e+01 : f32
    %14 = vector.broadcast %cst_6 : f32 to vector<16x1xf32>
    %15 = arith.divf %13, %14 : vector<16x1xf32>
    %16 = vector.broadcast %8 : vector<16x1xf32> to vector<16x32xf32>
    %17 = arith.subf %0, %16 : vector<16x32xf32>
    %cst_7 = arith.constant 9.99999974E-6 : f32
    %18 = vector.broadcast %cst_7 : f32 to vector<16x1xf32>
    %19 = arith.addf %15, %18 : vector<16x1xf32>
    %20 = math.rsqrt %19 : vector<16x1xf32>
    %21 = vector.broadcast %20 : vector<16x1xf32> to vector<16x32xf32>
    %22 = arith.mulf %17, %21 : vector<16x32xf32>
    %23 = vector.broadcast %3 : vector<1x32xf32> to vector<16x32xf32>
    %24 = arith.mulf %22, %23 : vector<16x32xf32>
    %25 = vector.broadcast %4 : vector<1x32xf32> to vector<16x32xf32>
    %26 = arith.addf %24, %25 : vector<16x32xf32>
    %c0_8 = arith.constant 0 : index
    %c0_9 = arith.constant 0 : index
    %c0_10 = arith.constant 0 : index
    %27 = vector.load %arg3[%c0_8, %c0_9, %c0_10] : memref<2x32x96xf32, #tpu.memory_space<vmem>>, vector<1x32x96xf32>
    %28 = vector.shape_cast %27 : vector<1x32x96xf32> to vector<32x96xf32>
    %cst_11 = arith.constant dense<0.000000e+00> : vector<16x96xf32>
    %29 = tpu.matmul %26, %28, %cst_11 {dimension_numbers = #tpu.dot_dimension_numbers<[1], [0], [0], [1], [0, 0, 1, 1], [], []>} : vector<16x32xf32>, vector<32x96xf32>, vector<16x96xf32> -> vector<16x96xf32>
    %c0_12 = arith.constant 0 : index
    %c0_13 = arith.constant 0 : index
    %c0_14 = arith.constant 0 : index
    %30 = vector.load %arg4[%c0_12, %c0_13, %c0_14] : memref<2x1x96xf32, #tpu.memory_space<vmem>>, vector<1x1x96xf32>
    %31 = vector.shape_cast %30 : vector<1x1x96xf32> to vector<1x96xf32>
    %32 = vector.broadcast %31 : vector<1x96xf32> to vector<16x96xf32>
    %33 = arith.addf %29, %32 : vector<16x96xf32>
    %34 = vector.extract_strided_slice %33 {offsets = [0, 0], sizes = [16, 32], strides = [1, 1]} : vector<16x96xf32> to vector<16x32xf32>
    %35 = vector.extract_strided_slice %33 {offsets = [0, 32], sizes = [16, 32], strides = [1, 1]} : vector<16x96xf32> to vector<16x32xf32>
    %36 = vector.extract_strided_slice %33 {offsets = [0, 64], sizes = [16, 32], strides = [1, 1]} : vector<16x96xf32> to vector<16x32xf32>
    %c0_15 = arith.constant 0 : index
    %c0_16 = arith.constant 0 : index
    %c0_17 = arith.constant 0 : index
    %37 = vector.load %arg5[%c0_15, %c0_16, %c0_17] : memref<2x32x32xf32, #tpu.memory_space<vmem>>, vector<1x32x32xf32>
    %38 = vector.shape_cast %37 : vector<1x32x32xf32> to vector<32x32xf32>
    %cst_18 = arith.constant 0.000000e+00 : f32
    %39 = vector.broadcast %cst_18 : f32 to vector<16x32xf32>
    %40 = vector.extract_strided_slice %34 {offsets = [0, 0], sizes = [16, 8], strides = [1, 1]} : vector<16x32xf32> to vector<16x8xf32>
    %41 = vector.shape_cast %40 : vector<16x8xf32> to vector<2x8x8xf32>
    %42 = vector.extract_strided_slice %35 {offsets = [0, 0], sizes = [16, 8], strides = [1, 1]} : vector<16x32xf32> to vector<16x8xf32>
    %43 = vector.shape_cast %42 : vector<16x8xf32> to vector<2x8x8xf32>
    %44 = vector.extract_strided_slice %36 {offsets = [0, 0], sizes = [16, 8], strides = [1, 1]} : vector<16x32xf32> to vector<16x8xf32>
    %45 = vector.shape_cast %44 : vector<16x8xf32> to vector<2x8x8xf32>
    "tpu.trace_start"() <{level = 10 : i32, message = "bqd,bkd->bqk"}> : () -> ()
    %cst_19 = arith.constant dense<0.000000e+00> : vector<2x8x8xf32>
    %46 = tpu.matmul %41, %43, %cst_19 {dimension_numbers = #tpu.dot_dimension_numbers<[2], [2], [1], [1], [0, 0, 0, 1, 1, 1], [0], [0]>} : vector<2x8x8xf32>, vector<2x8x8xf32>, vector<2x8x8xf32> -> vector<2x8x8xf32>
    "tpu.trace_stop"() : () -> ()
    %cst_20 = arith.constant dense<0xFF800000> : vector<2x8xf32>
    %47 = vector.multi_reduction <maximumf>, %46, %cst_20 [2] : vector<2x8x8xf32> to vector<2x8xf32>
    %48 = vector.shape_cast %47 : vector<2x8xf32> to vector<2x8x1xf32>
    %49 = vector.broadcast %48 : vector<2x8x1xf32> to vector<2x8x8xf32>
    %50 = arith.subf %46, %49 : vector<2x8x8xf32>
    %51 = math.exp %50 : vector<2x8x8xf32>
    %cst_21 = arith.constant dense<0.000000e+00> : vector<2x8xf32>
    %52 = vector.multi_reduction <add>, %51, %cst_21 [2] : vector<2x8x8xf32> to vector<2x8xf32>
    %53 = vector.shape_cast %52 : vector<2x8xf32> to vector<2x8x1xf32>
    %54 = vector.broadcast %53 : vector<2x8x1xf32> to vector<2x8x8xf32>
    %55 = arith.divf %51, %54 : vector<2x8x8xf32>
    "tpu.trace_start"() <{level = 10 : i32, message = "bqk,bkd->bqd"}> : () -> ()
    %cst_22 = arith.constant dense<0.000000e+00> : vector<2x8x8xf32>
    %56 = tpu.matmul %55, %45, %cst_22 {dimension_numbers = #tpu.dot_dimension_numbers<[2], [1], [1], [2], [0, 0, 0, 1, 1, 2], [0], [0]>} : vector<2x8x8xf32>, vector<2x8x8xf32>, vector<2x8x8xf32> -> vector<2x8x8xf32>
    "tpu.trace_stop"() : () -> ()
    %57 = vector.shape_cast %56 : vector<2x8x8xf32> to vector<16x8xf32>
    %58 = vector.extract_strided_slice %38 {offsets = [0, 0], sizes = [8, 32], strides = [1, 1]} : vector<32x32xf32> to vector<8x32xf32>
    %cst_23 = arith.constant dense<0.000000e+00> : vector<16x32xf32>
    %59 = tpu.matmul %57, %58, %cst_23 {dimension_numbers = #tpu.dot_dimension_numbers<[1], [0], [0], [1], [0, 0, 1, 1], [], []>} : vector<16x8xf32>, vector<8x32xf32>, vector<16x32xf32> -> vector<16x32xf32>
    %60 = arith.addf %39, %59 : vector<16x32xf32>
    %61 = vector.extract_strided_slice %34 {offsets = [0, 8], sizes = [16, 8], strides = [1, 1]} : vector<16x32xf32> to vector<16x8xf32>
    %62 = vector.shape_cast %61 : vector<16x8xf32> to vector<2x8x8xf32>
    %63 = vector.extract_strided_slice %35 {offsets = [0, 8], sizes = [16, 8], strides = [1, 1]} : vector<16x32xf32> to vector<16x8xf32>
    %64 = vector.shape_cast %63 : vector<16x8xf32> to vector<2x8x8xf32>
    %65 = vector.extract_strided_slice %36 {offsets = [0, 8], sizes = [16, 8], strides = [1, 1]} : vector<16x32xf32> to vector<16x8xf32>
    %66 = vector.shape_cast %65 : vector<16x8xf32> to vector<2x8x8xf32>
    "tpu.trace_start"() <{level = 10 : i32, message = "bqd,bkd->bqk"}> : () -> ()
    %cst_24 = arith.constant dense<0.000000e+00> : vector<2x8x8xf32>
    %67 = tpu.matmul %62, %64, %cst_24 {dimension_numbers = #tpu.dot_dimension_numbers<[2], [2], [1], [1], [0, 0, 0, 1, 1, 1], [0], [0]>} : vector<2x8x8xf32>, vector<2x8x8xf32>, vector<2x8x8xf32> -> vector<2x8x8xf32>
    "tpu.trace_stop"() : () -> ()
    %cst_25 = arith.constant dense<0xFF800000> : vector<2x8xf32>
    %68 = vector.multi_reduction <maximumf>, %67, %cst_25 [2] : vector<2x8x8xf32> to vector<2x8xf32>
    %69 = vector.shape_cast %68 : vector<2x8xf32> to vector<2x8x1xf32>
    %70 = vector.broadcast %69 : vector<2x8x1xf32> to vector<2x8x8xf32>
    %71 = arith.subf %67, %70 : vector<2x8x8xf32>
    %72 = math.exp %71 : vector<2x8x8xf32>
    %cst_26 = arith.constant dense<0.000000e+00> : vector<2x8xf32>
    %73 = vector.multi_reduction <add>, %72, %cst_26 [2] : vector<2x8x8xf32> to vector<2x8xf32>
    %74 = vector.shape_cast %73 : vector<2x8xf32> to vector<2x8x1xf32>
    %75 = vector.broadcast %74 : vector<2x8x1xf32> to vector<2x8x8xf32>
    %76 = arith.divf %72, %75 : vector<2x8x8xf32>
    "tpu.trace_start"() <{level = 10 : i32, message = "bqk,bkd->bqd"}> : () -> ()
    %cst_27 = arith.constant dense<0.000000e+00> : vector<2x8x8xf32>
    %77 = tpu.matmul %76, %66, %cst_27 {dimension_numbers = #tpu.dot_dimension_numbers<[2], [1], [1], [2], [0, 0, 0, 1, 1, 2], [0], [0]>} : vector<2x8x8xf32>, vector<2x8x8xf32>, vector<2x8x8xf32> -> vector<2x8x8xf32>
    "tpu.trace_stop"() : () -> ()
    %78 = vector.shape_cast %77 : vector<2x8x8xf32> to vector<16x8xf32>
    %79 = vector.extract_strided_slice %38 {offsets = [8, 0], sizes = [8, 32], strides = [1, 1]} : vector<32x32xf32> to vector<8x32xf32>
    %cst_28 = arith.constant dense<0.000000e+00> : vector<16x32xf32>
    %80 = tpu.matmul %78, %79, %cst_28 {dimension_numbers = #tpu.dot_dimension_numbers<[1], [0], [0], [1], [0, 0, 1, 1], [], []>} : vector<16x8xf32>, vector<8x32xf32>, vector<16x32xf32> -> vector<16x32xf32>
    %81 = arith.addf %60, %80 : vector<16x32xf32>
    %82 = vector.extract_strided_slice %34 {offsets = [0, 16], sizes = [16, 8], strides = [1, 1]} : vector<16x32xf32> to vector<16x8xf32>
    %83 = vector.shape_cast %82 : vector<16x8xf32> to vector<2x8x8xf32>
    %84 = vector.extract_strided_slice %35 {offsets = [0, 16], sizes = [16, 8], strides = [1, 1]} : vector<16x32xf32> to vector<16x8xf32>
    %85 = vector.shape_cast %84 : vector<16x8xf32> to vector<2x8x8xf32>
    %86 = vector.extract_strided_slice %36 {offsets = [0, 16], sizes = [16, 8], strides = [1, 1]} : vector<16x32xf32> to vector<16x8xf32>
    %87 = vector.shape_cast %86 : vector<16x8xf32> to vector<2x8x8xf32>
    "tpu.trace_start"() <{level = 10 : i32, message = "bqd,bkd->bqk"}> : () -> ()
    %cst_29 = arith.constant dense<0.000000e+00> : vector<2x8x8xf32>
    %88 = tpu.matmul %83, %85, %cst_29 {dimension_numbers = #tpu.dot_dimension_numbers<[2], [2], [1], [1], [0, 0, 0, 1, 1, 1], [0], [0]>} : vector<2x8x8xf32>, vector<2x8x8xf32>, vector<2x8x8xf32> -> vector<2x8x8xf32>
    "tpu.trace_stop"() : () -> ()
    %cst_30 = arith.constant dense<0xFF800000> : vector<2x8xf32>
    %89 = vector.multi_reduction <maximumf>, %88, %cst_30 [2] : vector<2x8x8xf32> to vector<2x8xf32>
    %90 = vector.shape_cast %89 : vector<2x8xf32> to vector<2x8x1xf32>
    %91 = vector.broadcast %90 : vector<2x8x1xf32> to vector<2x8x8xf32>
    %92 = arith.subf %88, %91 : vector<2x8x8xf32>
    %93 = math.exp %92 : vector<2x8x8xf32>
    %cst_31 = arith.constant dense<0.000000e+00> : vector<2x8xf32>
    %94 = vector.multi_reduction <add>, %93, %cst_31 [2] : vector<2x8x8xf32> to vector<2x8xf32>
    %95 = vector.shape_cast %94 : vector<2x8xf32> to vector<2x8x1xf32>
    %96 = vector.broadcast %95 : vector<2x8x1xf32> to vector<2x8x8xf32>
    %97 = arith.divf %93, %96 : vector<2x8x8xf32>
    "tpu.trace_start"() <{level = 10 : i32, message = "bqk,bkd->bqd"}> : () -> ()
    %cst_32 = arith.constant dense<0.000000e+00> : vector<2x8x8xf32>
    %98 = tpu.matmul %97, %87, %cst_32 {dimension_numbers = #tpu.dot_dimension_numbers<[2], [1], [1], [2], [0, 0, 0, 1, 1, 2], [0], [0]>} : vector<2x8x8xf32>, vector<2x8x8xf32>, vector<2x8x8xf32> -> vector<2x8x8xf32>
    "tpu.trace_stop"() : () -> ()
    %99 = vector.shape_cast %98 : vector<2x8x8xf32> to vector<16x8xf32>
    %100 = vector.extract_strided_slice %38 {offsets = [16, 0], sizes = [8, 32], strides = [1, 1]} : vector<32x32xf32> to vector<8x32xf32>
    %cst_33 = arith.constant dense<0.000000e+00> : vector<16x32xf32>
    %101 = tpu.matmul %99, %100, %cst_33 {dimension_numbers = #tpu.dot_dimension_numbers<[1], [0], [0], [1], [0, 0, 1, 1], [], []>} : vector<16x8xf32>, vector<8x32xf32>, vector<16x32xf32> -> vector<16x32xf32>
    %102 = arith.addf %81, %101 : vector<16x32xf32>
    %103 = vector.extract_strided_slice %34 {offsets = [0, 24], sizes = [16, 8], strides = [1, 1]} : vector<16x32xf32> to vector<16x8xf32>
    %104 = vector.shape_cast %103 : vector<16x8xf32> to vector<2x8x8xf32>
    %105 = vector.extract_strided_slice %35 {offsets = [0, 24], sizes = [16, 8], strides = [1, 1]} : vector<16x32xf32> to vector<16x8xf32>
    %106 = vector.shape_cast %105 : vector<16x8xf32> to vector<2x8x8xf32>
    %107 = vector.extract_strided_slice %36 {offsets = [0, 24], sizes = [16, 8], strides = [1, 1]} : vector<16x32xf32> to vector<16x8xf32>
    %108 = vector.shape_cast %107 : vector<16x8xf32> to vector<2x8x8xf32>
    "tpu.trace_start"() <{level = 10 : i32, message = "bqd,bkd->bqk"}> : () -> ()
    %cst_34 = arith.constant dense<0.000000e+00> : vector<2x8x8xf32>
    %109 = tpu.matmul %104, %106, %cst_34 {dimension_numbers = #tpu.dot_dimension_numbers<[2], [2], [1], [1], [0, 0, 0, 1, 1, 1], [0], [0]>} : vector<2x8x8xf32>, vector<2x8x8xf32>, vector<2x8x8xf32> -> vector<2x8x8xf32>
    "tpu.trace_stop"() : () -> ()
    %cst_35 = arith.constant dense<0xFF800000> : vector<2x8xf32>
    %110 = vector.multi_reduction <maximumf>, %109, %cst_35 [2] : vector<2x8x8xf32> to vector<2x8xf32>
    %111 = vector.shape_cast %110 : vector<2x8xf32> to vector<2x8x1xf32>
    %112 = vector.broadcast %111 : vector<2x8x1xf32> to vector<2x8x8xf32>
    %113 = arith.subf %109, %112 : vector<2x8x8xf32>
    %114 = math.exp %113 : vector<2x8x8xf32>
    %cst_36 = arith.constant dense<0.000000e+00> : vector<2x8xf32>
    %115 = vector.multi_reduction <add>, %114, %cst_36 [2] : vector<2x8x8xf32> to vector<2x8xf32>
    %116 = vector.shape_cast %115 : vector<2x8xf32> to vector<2x8x1xf32>
    %117 = vector.broadcast %116 : vector<2x8x1xf32> to vector<2x8x8xf32>
    %118 = arith.divf %114, %117 : vector<2x8x8xf32>
    "tpu.trace_start"() <{level = 10 : i32, message = "bqk,bkd->bqd"}> : () -> ()
    %cst_37 = arith.constant dense<0.000000e+00> : vector<2x8x8xf32>
    %119 = tpu.matmul %118, %108, %cst_37 {dimension_numbers = #tpu.dot_dimension_numbers<[2], [1], [1], [2], [0, 0, 0, 1, 1, 2], [0], [0]>} : vector<2x8x8xf32>, vector<2x8x8xf32>, vector<2x8x8xf32> -> vector<2x8x8xf32>
    "tpu.trace_stop"() : () -> ()
    %120 = vector.shape_cast %119 : vector<2x8x8xf32> to vector<16x8xf32>
    %121 = vector.extract_strided_slice %38 {offsets = [24, 0], sizes = [8, 32], strides = [1, 1]} : vector<32x32xf32> to vector<8x32xf32>
    %cst_38 = arith.constant dense<0.000000e+00> : vector<16x32xf32>
    %122 = tpu.matmul %120, %121, %cst_38 {dimension_numbers = #tpu.dot_dimension_numbers<[1], [0], [0], [1], [0, 0, 1, 1], [], []>} : vector<16x8xf32>, vector<8x32xf32>, vector<16x32xf32> -> vector<16x32xf32>
    %123 = arith.addf %102, %122 : vector<16x32xf32>
    %124 = arith.addf %0, %123 : vector<16x32xf32>
    %c0_39 = arith.constant 0 : index
    %c0_40 = arith.constant 0 : index
    %c0_41 = arith.constant 0 : index
    %125 = vector.load %arg6[%c0_39, %c0_40, %c0_41] : memref<2x1x32xf32, #tpu.memory_space<vmem>>, vector<1x1x32xf32>
    %126 = vector.shape_cast %125 : vector<1x1x32xf32> to vector<1x32xf32>
    %127 = vector.broadcast %126 : vector<1x32xf32> to vector<16x32xf32>
    %128 = arith.addf %124, %127 : vector<16x32xf32>
    %129 = vector.extract_strided_slice %2 {offsets = [2, 0], sizes = [1, 32], strides = [1, 1]} : vector<4x32xf32> to vector<1x32xf32>
    %130 = vector.extract_strided_slice %2 {offsets = [3, 0], sizes = [1, 32], strides = [1, 1]} : vector<4x32xf32> to vector<1x32xf32>
    %cst_42 = arith.constant dense<0.000000e+00> : vector<16xf32>
    %131 = vector.multi_reduction <add>, %128, %cst_42 [1] : vector<16x32xf32> to vector<16xf32>
    %132 = vector.shape_cast %131 : vector<16xf32> to vector<16x1xf32>
    %cst_43 = arith.constant 3.200000e+01 : f32
    %133 = vector.broadcast %cst_43 : f32 to vector<16x1xf32>
    %134 = arith.divf %132, %133 : vector<16x1xf32>
    %135 = vector.broadcast %134 : vector<16x1xf32> to vector<16x32xf32>
    %136 = arith.subf %128, %135 : vector<16x32xf32>
    %137 = arith.mulf %136, %136 : vector<16x32xf32>
    %cst_44 = arith.constant dense<0.000000e+00> : vector<16xf32>
    %138 = vector.multi_reduction <add>, %137, %cst_44 [1] : vector<16x32xf32> to vector<16xf32>
    %139 = vector.shape_cast %138 : vector<16xf32> to vector<16x1xf32>
    %cst_45 = arith.constant 3.200000e+01 : f32
    %140 = vector.broadcast %cst_45 : f32 to vector<16x1xf32>
    %141 = arith.divf %139, %140 : vector<16x1xf32>
    %142 = vector.broadcast %134 : vector<16x1xf32> to vector<16x32xf32>
    %143 = arith.subf %128, %142 : vector<16x32xf32>
    %cst_46 = arith.constant 9.99999974E-6 : f32
    %144 = vector.broadcast %cst_46 : f32 to vector<16x1xf32>
    %145 = arith.addf %141, %144 : vector<16x1xf32>
    %146 = math.rsqrt %145 : vector<16x1xf32>
    %147 = vector.broadcast %146 : vector<16x1xf32> to vector<16x32xf32>
    %148 = arith.mulf %143, %147 : vector<16x32xf32>
    %149 = vector.broadcast %129 : vector<1x32xf32> to vector<16x32xf32>
    %150 = arith.mulf %148, %149 : vector<16x32xf32>
    %151 = vector.broadcast %130 : vector<1x32xf32> to vector<16x32xf32>
    %152 = arith.addf %150, %151 : vector<16x32xf32>
    %c0_47 = arith.constant 0 : index
    %c0_48 = arith.constant 0 : index
    %c0_49 = arith.constant 0 : index
    %153 = vector.load %arg7[%c0_47, %c0_48, %c0_49] : memref<2x32x128xf32, #tpu.memory_space<vmem>>, vector<1x32x128xf32>
    %154 = vector.shape_cast %153 : vector<1x32x128xf32> to vector<32x128xf32>
    %cst_50 = arith.constant dense<0.000000e+00> : vector<16x128xf32>
    %155 = tpu.matmul %152, %154, %cst_50 {dimension_numbers = #tpu.dot_dimension_numbers<[1], [0], [0], [1], [0, 0, 1, 1], [], []>} : vector<16x32xf32>, vector<32x128xf32>, vector<16x128xf32> -> vector<16x128xf32>
    %c0_51 = arith.constant 0 : index
    %c0_52 = arith.constant 0 : index
    %c0_53 = arith.constant 0 : index
    %156 = vector.load %arg8[%c0_51, %c0_52, %c0_53] : memref<2x1x128xf32, #tpu.memory_space<vmem>>, vector<1x1x128xf32>
    %157 = vector.shape_cast %156 : vector<1x1x128xf32> to vector<1x128xf32>
    %158 = vector.broadcast %157 : vector<1x128xf32> to vector<16x128xf32>
    %159 = arith.addf %155, %158 : vector<16x128xf32>
    %cst_54 = arith.constant 5.000000e-01 : f32
    %160 = vector.broadcast %cst_54 : f32 to vector<16x128xf32>
    %161 = arith.mulf %160, %159 : vector<16x128xf32>
    %cst_55 = arith.constant 0.707106769 : f32
    %162 = vector.broadcast %cst_55 : f32 to vector<16x128xf32>
    %163 = arith.mulf %159, %162 : vector<16x128xf32>
    %cst_56 = arith.constant 0.000000e+00 : f32
    %164 = vector.broadcast %cst_56 : f32 to vector<16x128xf32>
    %165 = arith.cmpf oge, %163, %164 : vector<16x128xf32>
    %cst_57 = arith.constant 1.000000e+00 : f32
    %cst_58 = arith.constant -1.000000e+00 : f32
    %166 = vector.broadcast %cst_57 : f32 to vector<16x128xf32>
    %167 = vector.broadcast %cst_58 : f32 to vector<16x128xf32>
    %168 = arith.select %165, %166, %167 : vector<16x128xi1>, vector<16x128xf32>
    %169 = math.absf %163 : vector<16x128xf32>
    %cst_59 = arith.constant 0.327591091 : f32
    %170 = vector.broadcast %cst_59 : f32 to vector<16x128xf32>
    %171 = arith.mulf %170, %169 : vector<16x128xf32>
    %cst_60 = arith.constant 1.000000e+00 : f32
    %172 = vector.broadcast %cst_60 : f32 to vector<16x128xf32>
    %173 = arith.addf %172, %171 : vector<16x128xf32>
    %cst_61 = arith.constant 1.000000e+00 : f32
    %174 = vector.broadcast %cst_61 : f32 to vector<16x128xf32>
    %175 = arith.divf %174, %173 : vector<16x128xf32>
    %cst_62 = arith.constant 1.06140542 : f32
    %176 = vector.broadcast %cst_62 : f32 to vector<16x128xf32>
    %177 = arith.mulf %176, %175 : vector<16x128xf32>
    %cst_63 = arith.constant -1.45315206 : f32
    %178 = vector.broadcast %cst_63 : f32 to vector<16x128xf32>
    %179 = arith.addf %177, %178 : vector<16x128xf32>
    %180 = arith.mulf %179, %175 : vector<16x128xf32>
    %cst_64 = arith.constant 1.42141378 : f32
    %181 = vector.broadcast %cst_64 : f32 to vector<16x128xf32>
    %182 = arith.addf %180, %181 : vector<16x128xf32>
    %183 = arith.mulf %182, %175 : vector<16x128xf32>
    %cst_65 = arith.constant -0.284496725 : f32
    %184 = vector.broadcast %cst_65 : f32 to vector<16x128xf32>
    %185 = arith.addf %183, %184 : vector<16x128xf32>
    %186 = arith.mulf %185, %175 : vector<16x128xf32>
    %cst_66 = arith.constant 0.254829586 : f32
    %187 = vector.broadcast %cst_66 : f32 to vector<16x128xf32>
    %188 = arith.addf %186, %187 : vector<16x128xf32>
    %189 = arith.mulf %188, %175 : vector<16x128xf32>
    %cst_67 = arith.constant 0.000000e+00 : f32
    %190 = vector.broadcast %cst_67 : f32 to vector<16x128xf32>
    %191 = arith.subf %190, %169 : vector<16x128xf32>
    %192 = arith.mulf %191, %169 : vector<16x128xf32>
    %193 = math.exp %192 : vector<16x128xf32>
    %194 = arith.mulf %189, %193 : vector<16x128xf32>
    %cst_68 = arith.constant 1.000000e+00 : f32
    %195 = vector.broadcast %cst_68 : f32 to vector<16x128xf32>
    %196 = arith.subf %195, %194 : vector<16x128xf32>
    %197 = arith.mulf %168, %196 : vector<16x128xf32>
    %cst_69 = arith.constant 1.000000e+00 : f32
    %198 = vector.broadcast %cst_69 : f32 to vector<16x128xf32>
    %199 = arith.addf %198, %197 : vector<16x128xf32>
    %200 = arith.mulf %161, %199 : vector<16x128xf32>
    %c0_70 = arith.constant 0 : index
    %c0_71 = arith.constant 0 : index
    %c0_72 = arith.constant 0 : index
    %201 = vector.load %arg9[%c0_70, %c0_71, %c0_72] : memref<2x128x32xf32, #tpu.memory_space<vmem>>, vector<1x128x32xf32>
    %202 = vector.shape_cast %201 : vector<1x128x32xf32> to vector<128x32xf32>
    %cst_73 = arith.constant dense<0.000000e+00> : vector<16x32xf32>
    %203 = tpu.matmul %200, %202, %cst_73 {dimension_numbers = #tpu.dot_dimension_numbers<[1], [0], [0], [1], [0, 0, 1, 1], [], []>} : vector<16x128xf32>, vector<128x32xf32>, vector<16x32xf32> -> vector<16x32xf32>
    %204 = arith.addf %128, %203 : vector<16x32xf32>
    %c0_74 = arith.constant 0 : index
    %c0_75 = arith.constant 0 : index
    %c0_76 = arith.constant 0 : index
    %205 = vector.load %arg10[%c0_74, %c0_75, %c0_76] : memref<2x1x32xf32, #tpu.memory_space<vmem>>, vector<1x1x32xf32>
    %206 = vector.shape_cast %205 : vector<1x1x32xf32> to vector<1x32xf32>
    %207 = vector.broadcast %206 : vector<1x32xf32> to vector<16x32xf32>
    %208 = arith.addf %204, %207 : vector<16x32xf32>
    %c1 = arith.constant 1 : index
    %c0_77 = arith.constant 0 : index
    %c0_78 = arith.constant 0 : index
    %209 = vector.load %arg2[%c1, %c0_77, %c0_78] : memref<2x4x32xf32, #tpu.memory_space<vmem>>, vector<1x4x32xf32>
    %210 = vector.shape_cast %209 : vector<1x4x32xf32> to vector<4x32xf32>
    %211 = vector.extract_strided_slice %210 {offsets = [0, 0], sizes = [1, 32], strides = [1, 1]} : vector<4x32xf32> to vector<1x32xf32>
    %212 = vector.extract_strided_slice %210 {offsets = [1, 0], sizes = [1, 32], strides = [1, 1]} : vector<4x32xf32> to vector<1x32xf32>
    %cst_79 = arith.constant dense<0.000000e+00> : vector<16xf32>
    %213 = vector.multi_reduction <add>, %208, %cst_79 [1] : vector<16x32xf32> to vector<16xf32>
    %214 = vector.shape_cast %213 : vector<16xf32> to vector<16x1xf32>
    %cst_80 = arith.constant 3.200000e+01 : f32
    %215 = vector.broadcast %cst_80 : f32 to vector<16x1xf32>
    %216 = arith.divf %214, %215 : vector<16x1xf32>
    %217 = vector.broadcast %216 : vector<16x1xf32> to vector<16x32xf32>
    %218 = arith.subf %208, %217 : vector<16x32xf32>
    %219 = arith.mulf %218, %218 : vector<16x32xf32>
    %cst_81 = arith.constant dense<0.000000e+00> : vector<16xf32>
    %220 = vector.multi_reduction <add>, %219, %cst_81 [1] : vector<16x32xf32> to vector<16xf32>
    %221 = vector.shape_cast %220 : vector<16xf32> to vector<16x1xf32>
    %cst_82 = arith.constant 3.200000e+01 : f32
    %222 = vector.broadcast %cst_82 : f32 to vector<16x1xf32>
    %223 = arith.divf %221, %222 : vector<16x1xf32>
    %224 = vector.broadcast %216 : vector<16x1xf32> to vector<16x32xf32>
    %225 = arith.subf %208, %224 : vector<16x32xf32>
    %cst_83 = arith.constant 9.99999974E-6 : f32
    %226 = vector.broadcast %cst_83 : f32 to vector<16x1xf32>
    %227 = arith.addf %223, %226 : vector<16x1xf32>
    %228 = math.rsqrt %227 : vector<16x1xf32>
    %229 = vector.broadcast %228 : vector<16x1xf32> to vector<16x32xf32>
    %230 = arith.mulf %225, %229 : vector<16x32xf32>
    %231 = vector.broadcast %211 : vector<1x32xf32> to vector<16x32xf32>
    %232 = arith.mulf %230, %231 : vector<16x32xf32>
    %233 = vector.broadcast %212 : vector<1x32xf32> to vector<16x32xf32>
    %234 = arith.addf %232, %233 : vector<16x32xf32>
    %c1_84 = arith.constant 1 : index
    %c0_85 = arith.constant 0 : index
    %c0_86 = arith.constant 0 : index
    %235 = vector.load %arg3[%c1_84, %c0_85, %c0_86] : memref<2x32x96xf32, #tpu.memory_space<vmem>>, vector<1x32x96xf32>
    %236 = vector.shape_cast %235 : vector<1x32x96xf32> to vector<32x96xf32>
    %cst_87 = arith.constant dense<0.000000e+00> : vector<16x96xf32>
    %237 = tpu.matmul %234, %236, %cst_87 {dimension_numbers = #tpu.dot_dimension_numbers<[1], [0], [0], [1], [0, 0, 1, 1], [], []>} : vector<16x32xf32>, vector<32x96xf32>, vector<16x96xf32> -> vector<16x96xf32>
    %c1_88 = arith.constant 1 : index
    %c0_89 = arith.constant 0 : index
    %c0_90 = arith.constant 0 : index
    %238 = vector.load %arg4[%c1_88, %c0_89, %c0_90] : memref<2x1x96xf32, #tpu.memory_space<vmem>>, vector<1x1x96xf32>
    %239 = vector.shape_cast %238 : vector<1x1x96xf32> to vector<1x96xf32>
    %240 = vector.broadcast %239 : vector<1x96xf32> to vector<16x96xf32>
    %241 = arith.addf %237, %240 : vector<16x96xf32>
    %242 = vector.extract_strided_slice %241 {offsets = [0, 0], sizes = [16, 32], strides = [1, 1]} : vector<16x96xf32> to vector<16x32xf32>
    %243 = vector.extract_strided_slice %241 {offsets = [0, 32], sizes = [16, 32], strides = [1, 1]} : vector<16x96xf32> to vector<16x32xf32>
    %244 = vector.extract_strided_slice %241 {offsets = [0, 64], sizes = [16, 32], strides = [1, 1]} : vector<16x96xf32> to vector<16x32xf32>
    %c1_91 = arith.constant 1 : index
    %c0_92 = arith.constant 0 : index
    %c0_93 = arith.constant 0 : index
    %245 = vector.load %arg5[%c1_91, %c0_92, %c0_93] : memref<2x32x32xf32, #tpu.memory_space<vmem>>, vector<1x32x32xf32>
    %246 = vector.shape_cast %245 : vector<1x32x32xf32> to vector<32x32xf32>
    %cst_94 = arith.constant 0.000000e+00 : f32
    %247 = vector.broadcast %cst_94 : f32 to vector<16x32xf32>
    %248 = vector.extract_strided_slice %242 {offsets = [0, 0], sizes = [16, 8], strides = [1, 1]} : vector<16x32xf32> to vector<16x8xf32>
    %249 = vector.shape_cast %248 : vector<16x8xf32> to vector<2x8x8xf32>
    %250 = vector.extract_strided_slice %243 {offsets = [0, 0], sizes = [16, 8], strides = [1, 1]} : vector<16x32xf32> to vector<16x8xf32>
    %251 = vector.shape_cast %250 : vector<16x8xf32> to vector<2x8x8xf32>
    %252 = vector.extract_strided_slice %244 {offsets = [0, 0], sizes = [16, 8], strides = [1, 1]} : vector<16x32xf32> to vector<16x8xf32>
    %253 = vector.shape_cast %252 : vector<16x8xf32> to vector<2x8x8xf32>
    "tpu.trace_start"() <{level = 10 : i32, message = "bqd,bkd->bqk"}> : () -> ()
    %cst_95 = arith.constant dense<0.000000e+00> : vector<2x8x8xf32>
    %254 = tpu.matmul %249, %251, %cst_95 {dimension_numbers = #tpu.dot_dimension_numbers<[2], [2], [1], [1], [0, 0, 0, 1, 1, 1], [0], [0]>} : vector<2x8x8xf32>, vector<2x8x8xf32>, vector<2x8x8xf32> -> vector<2x8x8xf32>
    "tpu.trace_stop"() : () -> ()
    %cst_96 = arith.constant dense<0xFF800000> : vector<2x8xf32>
    %255 = vector.multi_reduction <maximumf>, %254, %cst_96 [2] : vector<2x8x8xf32> to vector<2x8xf32>
    %256 = vector.shape_cast %255 : vector<2x8xf32> to vector<2x8x1xf32>
    %257 = vector.broadcast %256 : vector<2x8x1xf32> to vector<2x8x8xf32>
    %258 = arith.subf %254, %257 : vector<2x8x8xf32>
    %259 = math.exp %258 : vector<2x8x8xf32>
    %cst_97 = arith.constant dense<0.000000e+00> : vector<2x8xf32>
    %260 = vector.multi_reduction <add>, %259, %cst_97 [2] : vector<2x8x8xf32> to vector<2x8xf32>
    %261 = vector.shape_cast %260 : vector<2x8xf32> to vector<2x8x1xf32>
    %262 = vector.broadcast %261 : vector<2x8x1xf32> to vector<2x8x8xf32>
    %263 = arith.divf %259, %262 : vector<2x8x8xf32>
    "tpu.trace_start"() <{level = 10 : i32, message = "bqk,bkd->bqd"}> : () -> ()
    %cst_98 = arith.constant dense<0.000000e+00> : vector<2x8x8xf32>
    %264 = tpu.matmul %263, %253, %cst_98 {dimension_numbers = #tpu.dot_dimension_numbers<[2], [1], [1], [2], [0, 0, 0, 1, 1, 2], [0], [0]>} : vector<2x8x8xf32>, vector<2x8x8xf32>, vector<2x8x8xf32> -> vector<2x8x8xf32>
    "tpu.trace_stop"() : () -> ()
    %265 = vector.shape_cast %264 : vector<2x8x8xf32> to vector<16x8xf32>
    %266 = vector.extract_strided_slice %246 {offsets = [0, 0], sizes = [8, 32], strides = [1, 1]} : vector<32x32xf32> to vector<8x32xf32>
    %cst_99 = arith.constant dense<0.000000e+00> : vector<16x32xf32>
    %267 = tpu.matmul %265, %266, %cst_99 {dimension_numbers = #tpu.dot_dimension_numbers<[1], [0], [0], [1], [0, 0, 1, 1], [], []>} : vector<16x8xf32>, vector<8x32xf32>, vector<16x32xf32> -> vector<16x32xf32>
    %268 = arith.addf %247, %267 : vector<16x32xf32>
    %269 = vector.extract_strided_slice %242 {offsets = [0, 8], sizes = [16, 8], strides = [1, 1]} : vector<16x32xf32> to vector<16x8xf32>
    %270 = vector.shape_cast %269 : vector<16x8xf32> to vector<2x8x8xf32>
    %271 = vector.extract_strided_slice %243 {offsets = [0, 8], sizes = [16, 8], strides = [1, 1]} : vector<16x32xf32> to vector<16x8xf32>
    %272 = vector.shape_cast %271 : vector<16x8xf32> to vector<2x8x8xf32>
    %273 = vector.extract_strided_slice %244 {offsets = [0, 8], sizes = [16, 8], strides = [1, 1]} : vector<16x32xf32> to vector<16x8xf32>
    %274 = vector.shape_cast %273 : vector<16x8xf32> to vector<2x8x8xf32>
    "tpu.trace_start"() <{level = 10 : i32, message = "bqd,bkd->bqk"}> : () -> ()
    %cst_100 = arith.constant dense<0.000000e+00> : vector<2x8x8xf32>
    %275 = tpu.matmul %270, %272, %cst_100 {dimension_numbers = #tpu.dot_dimension_numbers<[2], [2], [1], [1], [0, 0, 0, 1, 1, 1], [0], [0]>} : vector<2x8x8xf32>, vector<2x8x8xf32>, vector<2x8x8xf32> -> vector<2x8x8xf32>
    "tpu.trace_stop"() : () -> ()
    %cst_101 = arith.constant dense<0xFF800000> : vector<2x8xf32>
    %276 = vector.multi_reduction <maximumf>, %275, %cst_101 [2] : vector<2x8x8xf32> to vector<2x8xf32>
    %277 = vector.shape_cast %276 : vector<2x8xf32> to vector<2x8x1xf32>
    %278 = vector.broadcast %277 : vector<2x8x1xf32> to vector<2x8x8xf32>
    %279 = arith.subf %275, %278 : vector<2x8x8xf32>
    %280 = math.exp %279 : vector<2x8x8xf32>
    %cst_102 = arith.constant dense<0.000000e+00> : vector<2x8xf32>
    %281 = vector.multi_reduction <add>, %280, %cst_102 [2] : vector<2x8x8xf32> to vector<2x8xf32>
    %282 = vector.shape_cast %281 : vector<2x8xf32> to vector<2x8x1xf32>
    %283 = vector.broadcast %282 : vector<2x8x1xf32> to vector<2x8x8xf32>
    %284 = arith.divf %280, %283 : vector<2x8x8xf32>
    "tpu.trace_start"() <{level = 10 : i32, message = "bqk,bkd->bqd"}> : () -> ()
    %cst_103 = arith.constant dense<0.000000e+00> : vector<2x8x8xf32>
    %285 = tpu.matmul %284, %274, %cst_103 {dimension_numbers = #tpu.dot_dimension_numbers<[2], [1], [1], [2], [0, 0, 0, 1, 1, 2], [0], [0]>} : vector<2x8x8xf32>, vector<2x8x8xf32>, vector<2x8x8xf32> -> vector<2x8x8xf32>
    "tpu.trace_stop"() : () -> ()
    %286 = vector.shape_cast %285 : vector<2x8x8xf32> to vector<16x8xf32>
    %287 = vector.extract_strided_slice %246 {offsets = [8, 0], sizes = [8, 32], strides = [1, 1]} : vector<32x32xf32> to vector<8x32xf32>
    %cst_104 = arith.constant dense<0.000000e+00> : vector<16x32xf32>
    %288 = tpu.matmul %286, %287, %cst_104 {dimension_numbers = #tpu.dot_dimension_numbers<[1], [0], [0], [1], [0, 0, 1, 1], [], []>} : vector<16x8xf32>, vector<8x32xf32>, vector<16x32xf32> -> vector<16x32xf32>
    %289 = arith.addf %268, %288 : vector<16x32xf32>
    %290 = vector.extract_strided_slice %242 {offsets = [0, 16], sizes = [16, 8], strides = [1, 1]} : vector<16x32xf32> to vector<16x8xf32>
    %291 = vector.shape_cast %290 : vector<16x8xf32> to vector<2x8x8xf32>
    %292 = vector.extract_strided_slice %243 {offsets = [0, 16], sizes = [16, 8], strides = [1, 1]} : vector<16x32xf32> to vector<16x8xf32>
    %293 = vector.shape_cast %292 : vector<16x8xf32> to vector<2x8x8xf32>
    %294 = vector.extract_strided_slice %244 {offsets = [0, 16], sizes = [16, 8], strides = [1, 1]} : vector<16x32xf32> to vector<16x8xf32>
    %295 = vector.shape_cast %294 : vector<16x8xf32> to vector<2x8x8xf32>
    "tpu.trace_start"() <{level = 10 : i32, message = "bqd,bkd->bqk"}> : () -> ()
    %cst_105 = arith.constant dense<0.000000e+00> : vector<2x8x8xf32>
    %296 = tpu.matmul %291, %293, %cst_105 {dimension_numbers = #tpu.dot_dimension_numbers<[2], [2], [1], [1], [0, 0, 0, 1, 1, 1], [0], [0]>} : vector<2x8x8xf32>, vector<2x8x8xf32>, vector<2x8x8xf32> -> vector<2x8x8xf32>
    "tpu.trace_stop"() : () -> ()
    %cst_106 = arith.constant dense<0xFF800000> : vector<2x8xf32>
    %297 = vector.multi_reduction <maximumf>, %296, %cst_106 [2] : vector<2x8x8xf32> to vector<2x8xf32>
    %298 = vector.shape_cast %297 : vector<2x8xf32> to vector<2x8x1xf32>
    %299 = vector.broadcast %298 : vector<2x8x1xf32> to vector<2x8x8xf32>
    %300 = arith.subf %296, %299 : vector<2x8x8xf32>
    %301 = math.exp %300 : vector<2x8x8xf32>
    %cst_107 = arith.constant dense<0.000000e+00> : vector<2x8xf32>
    %302 = vector.multi_reduction <add>, %301, %cst_107 [2] : vector<2x8x8xf32> to vector<2x8xf32>
    %303 = vector.shape_cast %302 : vector<2x8xf32> to vector<2x8x1xf32>
    %304 = vector.broadcast %303 : vector<2x8x1xf32> to vector<2x8x8xf32>
    %305 = arith.divf %301, %304 : vector<2x8x8xf32>
    "tpu.trace_start"() <{level = 10 : i32, message = "bqk,bkd->bqd"}> : () -> ()
    %cst_108 = arith.constant dense<0.000000e+00> : vector<2x8x8xf32>
    %306 = tpu.matmul %305, %295, %cst_108 {dimension_numbers = #tpu.dot_dimension_numbers<[2], [1], [1], [2], [0, 0, 0, 1, 1, 2], [0], [0]>} : vector<2x8x8xf32>, vector<2x8x8xf32>, vector<2x8x8xf32> -> vector<2x8x8xf32>
    "tpu.trace_stop"() : () -> ()
    %307 = vector.shape_cast %306 : vector<2x8x8xf32> to vector<16x8xf32>
    %308 = vector.extract_strided_slice %246 {offsets = [16, 0], sizes = [8, 32], strides = [1, 1]} : vector<32x32xf32> to vector<8x32xf32>
    %cst_109 = arith.constant dense<0.000000e+00> : vector<16x32xf32>
    %309 = tpu.matmul %307, %308, %cst_109 {dimension_numbers = #tpu.dot_dimension_numbers<[1], [0], [0], [1], [0, 0, 1, 1], [], []>} : vector<16x8xf32>, vector<8x32xf32>, vector<16x32xf32> -> vector<16x32xf32>
    %310 = arith.addf %289, %309 : vector<16x32xf32>
    %311 = vector.extract_strided_slice %242 {offsets = [0, 24], sizes = [16, 8], strides = [1, 1]} : vector<16x32xf32> to vector<16x8xf32>
    %312 = vector.shape_cast %311 : vector<16x8xf32> to vector<2x8x8xf32>
    %313 = vector.extract_strided_slice %243 {offsets = [0, 24], sizes = [16, 8], strides = [1, 1]} : vector<16x32xf32> to vector<16x8xf32>
    %314 = vector.shape_cast %313 : vector<16x8xf32> to vector<2x8x8xf32>
    %315 = vector.extract_strided_slice %244 {offsets = [0, 24], sizes = [16, 8], strides = [1, 1]} : vector<16x32xf32> to vector<16x8xf32>
    %316 = vector.shape_cast %315 : vector<16x8xf32> to vector<2x8x8xf32>
    "tpu.trace_start"() <{level = 10 : i32, message = "bqd,bkd->bqk"}> : () -> ()
    %cst_110 = arith.constant dense<0.000000e+00> : vector<2x8x8xf32>
    %317 = tpu.matmul %312, %314, %cst_110 {dimension_numbers = #tpu.dot_dimension_numbers<[2], [2], [1], [1], [0, 0, 0, 1, 1, 1], [0], [0]>} : vector<2x8x8xf32>, vector<2x8x8xf32>, vector<2x8x8xf32> -> vector<2x8x8xf32>
    "tpu.trace_stop"() : () -> ()
    %cst_111 = arith.constant dense<0xFF800000> : vector<2x8xf32>
    %318 = vector.multi_reduction <maximumf>, %317, %cst_111 [2] : vector<2x8x8xf32> to vector<2x8xf32>
    %319 = vector.shape_cast %318 : vector<2x8xf32> to vector<2x8x1xf32>
    %320 = vector.broadcast %319 : vector<2x8x1xf32> to vector<2x8x8xf32>
    %321 = arith.subf %317, %320 : vector<2x8x8xf32>
    %322 = math.exp %321 : vector<2x8x8xf32>
    %cst_112 = arith.constant dense<0.000000e+00> : vector<2x8xf32>
    %323 = vector.multi_reduction <add>, %322, %cst_112 [2] : vector<2x8x8xf32> to vector<2x8xf32>
    %324 = vector.shape_cast %323 : vector<2x8xf32> to vector<2x8x1xf32>
    %325 = vector.broadcast %324 : vector<2x8x1xf32> to vector<2x8x8xf32>
    %326 = arith.divf %322, %325 : vector<2x8x8xf32>
    "tpu.trace_start"() <{level = 10 : i32, message = "bqk,bkd->bqd"}> : () -> ()
    %cst_113 = arith.constant dense<0.000000e+00> : vector<2x8x8xf32>
    %327 = tpu.matmul %326, %316, %cst_113 {dimension_numbers = #tpu.dot_dimension_numbers<[2], [1], [1], [2], [0, 0, 0, 1, 1, 2], [0], [0]>} : vector<2x8x8xf32>, vector<2x8x8xf32>, vector<2x8x8xf32> -> vector<2x8x8xf32>
    "tpu.trace_stop"() : () -> ()
    %328 = vector.shape_cast %327 : vector<2x8x8xf32> to vector<16x8xf32>
    %329 = vector.extract_strided_slice %246 {offsets = [24, 0], sizes = [8, 32], strides = [1, 1]} : vector<32x32xf32> to vector<8x32xf32>
    %cst_114 = arith.constant dense<0.000000e+00> : vector<16x32xf32>
    %330 = tpu.matmul %328, %329, %cst_114 {dimension_numbers = #tpu.dot_dimension_numbers<[1], [0], [0], [1], [0, 0, 1, 1], [], []>} : vector<16x8xf32>, vector<8x32xf32>, vector<16x32xf32> -> vector<16x32xf32>
    %331 = arith.addf %310, %330 : vector<16x32xf32>
    %332 = arith.addf %208, %331 : vector<16x32xf32>
    %c1_115 = arith.constant 1 : index
    %c0_116 = arith.constant 0 : index
    %c0_117 = arith.constant 0 : index
    %333 = vector.load %arg6[%c1_115, %c0_116, %c0_117] : memref<2x1x32xf32, #tpu.memory_space<vmem>>, vector<1x1x32xf32>
    %334 = vector.shape_cast %333 : vector<1x1x32xf32> to vector<1x32xf32>
    %335 = vector.broadcast %334 : vector<1x32xf32> to vector<16x32xf32>
    %336 = arith.addf %332, %335 : vector<16x32xf32>
    %337 = vector.extract_strided_slice %210 {offsets = [2, 0], sizes = [1, 32], strides = [1, 1]} : vector<4x32xf32> to vector<1x32xf32>
    %338 = vector.extract_strided_slice %210 {offsets = [3, 0], sizes = [1, 32], strides = [1, 1]} : vector<4x32xf32> to vector<1x32xf32>
    %cst_118 = arith.constant dense<0.000000e+00> : vector<16xf32>
    %339 = vector.multi_reduction <add>, %336, %cst_118 [1] : vector<16x32xf32> to vector<16xf32>
    %340 = vector.shape_cast %339 : vector<16xf32> to vector<16x1xf32>
    %cst_119 = arith.constant 3.200000e+01 : f32
    %341 = vector.broadcast %cst_119 : f32 to vector<16x1xf32>
    %342 = arith.divf %340, %341 : vector<16x1xf32>
    %343 = vector.broadcast %342 : vector<16x1xf32> to vector<16x32xf32>
    %344 = arith.subf %336, %343 : vector<16x32xf32>
    %345 = arith.mulf %344, %344 : vector<16x32xf32>
    %cst_120 = arith.constant dense<0.000000e+00> : vector<16xf32>
    %346 = vector.multi_reduction <add>, %345, %cst_120 [1] : vector<16x32xf32> to vector<16xf32>
    %347 = vector.shape_cast %346 : vector<16xf32> to vector<16x1xf32>
    %cst_121 = arith.constant 3.200000e+01 : f32
    %348 = vector.broadcast %cst_121 : f32 to vector<16x1xf32>
    %349 = arith.divf %347, %348 : vector<16x1xf32>
    %350 = vector.broadcast %342 : vector<16x1xf32> to vector<16x32xf32>
    %351 = arith.subf %336, %350 : vector<16x32xf32>
    %cst_122 = arith.constant 9.99999974E-6 : f32
    %352 = vector.broadcast %cst_122 : f32 to vector<16x1xf32>
    %353 = arith.addf %349, %352 : vector<16x1xf32>
    %354 = math.rsqrt %353 : vector<16x1xf32>
    %355 = vector.broadcast %354 : vector<16x1xf32> to vector<16x32xf32>
    %356 = arith.mulf %351, %355 : vector<16x32xf32>
    %357 = vector.broadcast %337 : vector<1x32xf32> to vector<16x32xf32>
    %358 = arith.mulf %356, %357 : vector<16x32xf32>
    %359 = vector.broadcast %338 : vector<1x32xf32> to vector<16x32xf32>
    %360 = arith.addf %358, %359 : vector<16x32xf32>
    %c1_123 = arith.constant 1 : index
    %c0_124 = arith.constant 0 : index
    %c0_125 = arith.constant 0 : index
    %361 = vector.load %arg7[%c1_123, %c0_124, %c0_125] : memref<2x32x128xf32, #tpu.memory_space<vmem>>, vector<1x32x128xf32>
    %362 = vector.shape_cast %361 : vector<1x32x128xf32> to vector<32x128xf32>
    %cst_126 = arith.constant dense<0.000000e+00> : vector<16x128xf32>
    %363 = tpu.matmul %360, %362, %cst_126 {dimension_numbers = #tpu.dot_dimension_numbers<[1], [0], [0], [1], [0, 0, 1, 1], [], []>} : vector<16x32xf32>, vector<32x128xf32>, vector<16x128xf32> -> vector<16x128xf32>
    %c1_127 = arith.constant 1 : index
    %c0_128 = arith.constant 0 : index
    %c0_129 = arith.constant 0 : index
    %364 = vector.load %arg8[%c1_127, %c0_128, %c0_129] : memref<2x1x128xf32, #tpu.memory_space<vmem>>, vector<1x1x128xf32>
    %365 = vector.shape_cast %364 : vector<1x1x128xf32> to vector<1x128xf32>
    %366 = vector.broadcast %365 : vector<1x128xf32> to vector<16x128xf32>
    %367 = arith.addf %363, %366 : vector<16x128xf32>
    %cst_130 = arith.constant 5.000000e-01 : f32
    %368 = vector.broadcast %cst_130 : f32 to vector<16x128xf32>
    %369 = arith.mulf %368, %367 : vector<16x128xf32>
    %cst_131 = arith.constant 0.707106769 : f32
    %370 = vector.broadcast %cst_131 : f32 to vector<16x128xf32>
    %371 = arith.mulf %367, %370 : vector<16x128xf32>
    %cst_132 = arith.constant 0.000000e+00 : f32
    %372 = vector.broadcast %cst_132 : f32 to vector<16x128xf32>
    %373 = arith.cmpf oge, %371, %372 : vector<16x128xf32>
    %cst_133 = arith.constant 1.000000e+00 : f32
    %cst_134 = arith.constant -1.000000e+00 : f32
    %374 = vector.broadcast %cst_133 : f32 to vector<16x128xf32>
    %375 = vector.broadcast %cst_134 : f32 to vector<16x128xf32>
    %376 = arith.select %373, %374, %375 : vector<16x128xi1>, vector<16x128xf32>
    %377 = math.absf %371 : vector<16x128xf32>
    %cst_135 = arith.constant 0.327591091 : f32
    %378 = vector.broadcast %cst_135 : f32 to vector<16x128xf32>
    %379 = arith.mulf %378, %377 : vector<16x128xf32>
    %cst_136 = arith.constant 1.000000e+00 : f32
    %380 = vector.broadcast %cst_136 : f32 to vector<16x128xf32>
    %381 = arith.addf %380, %379 : vector<16x128xf32>
    %cst_137 = arith.constant 1.000000e+00 : f32
    %382 = vector.broadcast %cst_137 : f32 to vector<16x128xf32>
    %383 = arith.divf %382, %381 : vector<16x128xf32>
    %cst_138 = arith.constant 1.06140542 : f32
    %384 = vector.broadcast %cst_138 : f32 to vector<16x128xf32>
    %385 = arith.mulf %384, %383 : vector<16x128xf32>
    %cst_139 = arith.constant -1.45315206 : f32
    %386 = vector.broadcast %cst_139 : f32 to vector<16x128xf32>
    %387 = arith.addf %385, %386 : vector<16x128xf32>
    %388 = arith.mulf %387, %383 : vector<16x128xf32>
    %cst_140 = arith.constant 1.42141378 : f32
    %389 = vector.broadcast %cst_140 : f32 to vector<16x128xf32>
    %390 = arith.addf %388, %389 : vector<16x128xf32>
    %391 = arith.mulf %390, %383 : vector<16x128xf32>
    %cst_141 = arith.constant -0.284496725 : f32
    %392 = vector.broadcast %cst_141 : f32 to vector<16x128xf32>
    %393 = arith.addf %391, %392 : vector<16x128xf32>
    %394 = arith.mulf %393, %383 : vector<16x128xf32>
    %cst_142 = arith.constant 0.254829586 : f32
    %395 = vector.broadcast %cst_142 : f32 to vector<16x128xf32>
    %396 = arith.addf %394, %395 : vector<16x128xf32>
    %397 = arith.mulf %396, %383 : vector<16x128xf32>
    %cst_143 = arith.constant 0.000000e+00 : f32
    %398 = vector.broadcast %cst_143 : f32 to vector<16x128xf32>
    %399 = arith.subf %398, %377 : vector<16x128xf32>
    %400 = arith.mulf %399, %377 : vector<16x128xf32>
    %401 = math.exp %400 : vector<16x128xf32>
    %402 = arith.mulf %397, %401 : vector<16x128xf32>
    %cst_144 = arith.constant 1.000000e+00 : f32
    %403 = vector.broadcast %cst_144 : f32 to vector<16x128xf32>
    %404 = arith.subf %403, %402 : vector<16x128xf32>
    %405 = arith.mulf %376, %404 : vector<16x128xf32>
    %cst_145 = arith.constant 1.000000e+00 : f32
    %406 = vector.broadcast %cst_145 : f32 to vector<16x128xf32>
    %407 = arith.addf %406, %405 : vector<16x128xf32>
    %408 = arith.mulf %369, %407 : vector<16x128xf32>
    %c1_146 = arith.constant 1 : index
    %c0_147 = arith.constant 0 : index
    %c0_148 = arith.constant 0 : index
    %409 = vector.load %arg9[%c1_146, %c0_147, %c0_148] : memref<2x128x32xf32, #tpu.memory_space<vmem>>, vector<1x128x32xf32>
    %410 = vector.shape_cast %409 : vector<1x128x32xf32> to vector<128x32xf32>
    %cst_149 = arith.constant dense<0.000000e+00> : vector<16x32xf32>
    %411 = tpu.matmul %408, %410, %cst_149 {dimension_numbers = #tpu.dot_dimension_numbers<[1], [0], [0], [1], [0, 0, 1, 1], [], []>} : vector<16x128xf32>, vector<128x32xf32>, vector<16x32xf32> -> vector<16x32xf32>
    %412 = arith.addf %336, %411 : vector<16x32xf32>
    %c1_150 = arith.constant 1 : index
    %c0_151 = arith.constant 0 : index
    %c0_152 = arith.constant 0 : index
    %413 = vector.load %arg10[%c1_150, %c0_151, %c0_152] : memref<2x1x32xf32, #tpu.memory_space<vmem>>, vector<1x1x32xf32>
    %414 = vector.shape_cast %413 : vector<1x1x32xf32> to vector<1x32xf32>
    %415 = vector.broadcast %414 : vector<1x32xf32> to vector<16x32xf32>
    %416 = arith.addf %412, %415 : vector<16x32xf32>
    %c0_153 = arith.constant 0 : index
    %c0_154 = arith.constant 0 : index
    %417 = vector.load %arg11[%c0_153, %c0_154] : memref<1x32xf32, #tpu.memory_space<vmem>>, vector<1x32xf32>
    %c0_155 = arith.constant 0 : index
    %c0_156 = arith.constant 0 : index
    %418 = vector.load %arg12[%c0_155, %c0_156] : memref<1x32xf32, #tpu.memory_space<vmem>>, vector<1x32xf32>
    %cst_157 = arith.constant dense<0.000000e+00> : vector<16xf32>
    %419 = vector.multi_reduction <add>, %416, %cst_157 [1] : vector<16x32xf32> to vector<16xf32>
    %420 = vector.shape_cast %419 : vector<16xf32> to vector<16x1xf32>
    %cst_158 = arith.constant 3.200000e+01 : f32
    %421 = vector.broadcast %cst_158 : f32 to vector<16x1xf32>
    %422 = arith.divf %420, %421 : vector<16x1xf32>
    %423 = vector.broadcast %422 : vector<16x1xf32> to vector<16x32xf32>
    %424 = arith.subf %416, %423 : vector<16x32xf32>
    %425 = arith.mulf %424, %424 : vector<16x32xf32>
    %cst_159 = arith.constant dense<0.000000e+00> : vector<16xf32>
    %426 = vector.multi_reduction <add>, %425, %cst_159 [1] : vector<16x32xf32> to vector<16xf32>
    %427 = vector.shape_cast %426 : vector<16xf32> to vector<16x1xf32>
    %cst_160 = arith.constant 3.200000e+01 : f32
    %428 = vector.broadcast %cst_160 : f32 to vector<16x1xf32>
    %429 = arith.divf %427, %428 : vector<16x1xf32>
    %430 = vector.broadcast %422 : vector<16x1xf32> to vector<16x32xf32>
    %431 = arith.subf %416, %430 : vector<16x32xf32>
    %cst_161 = arith.constant 9.99999974E-6 : f32
    %432 = vector.broadcast %cst_161 : f32 to vector<16x1xf32>
    %433 = arith.addf %429, %432 : vector<16x1xf32>
    %434 = math.rsqrt %433 : vector<16x1xf32>
    %435 = vector.broadcast %434 : vector<16x1xf32> to vector<16x32xf32>
    %436 = arith.mulf %431, %435 : vector<16x32xf32>
    %437 = vector.broadcast %417 : vector<1x32xf32> to vector<16x32xf32>
    %438 = arith.mulf %436, %437 : vector<16x32xf32>
    %439 = vector.broadcast %418 : vector<1x32xf32> to vector<16x32xf32>
    %440 = arith.addf %438, %439 : vector<16x32xf32>
    %c0_162 = arith.constant 0 : index
    %c0_163 = arith.constant 0 : index
    %441 = vector.load %arg13[%c0_162, %c0_163] : memref<32x16xf32, #tpu.memory_space<vmem>>, vector<32x16xf32>
    %cst_164 = arith.constant dense<0.000000e+00> : vector<16x16xf32>
    %442 = tpu.matmul %440, %441, %cst_164 {dimension_numbers = #tpu.dot_dimension_numbers<[1], [0], [0], [1], [0, 0, 1, 1], [], []>} : vector<16x32xf32>, vector<32x16xf32>, vector<16x16xf32> -> vector<16x16xf32>
    %c0_165 = arith.constant 0 : index
    %c0_166 = arith.constant 0 : index
    %443 = vector.load %arg14[%c0_165, %c0_166] : memref<16x16xf32, #tpu.memory_space<vmem>>, vector<16x16xf32>
    tpu.vector_store %arg14[%c0_165, %c0_166], %442 {strides = array<i32>} : memref<16x16xf32, #tpu.memory_space<vmem>>, vector<16x16xf32>,
    return
  }
  func.func @transform_0(%arg0: i32) -> (i32, i32) {
    %c0_i32 = arith.constant 0 : i32
    %c0_i32_0 = arith.constant 0 : i32
    %c0_i32_1 = arith.constant 0 : i32
    return %c0_i32, %c0_i32_0 : i32, i32
  }
  func.func @transform_1(%arg0: i32) -> (i32, i32, i32) {
    %c0_i32 = arith.constant 0 : i32
    %c0_i32_0 = arith.constant 0 : i32
    %c0_i32_1 = arith.constant 0 : i32
    %c0_i32_2 = arith.constant 0 : i32
    return %c0_i32, %c0_i32_0, %c0_i32_1 : i32, i32, i32
  }
  func.func @transform_2(%arg0: i32) -> (i32, i32, i32) {
    %c0_i32 = arith.constant 0 : i32
    %c0_i32_0 = arith.constant 0 : i32
    %c0_i32_1 = arith.constant 0 : i32
    %c0_i32_2 = arith.constant 0 : i32
    return %c0_i32, %c0_i32_0, %c0_i32_1 : i32, i32, i32
  }
  func.func @transform_3(%arg0: i32) -> (i32, i32, i32) {
    %c0_i32 = arith.constant 0 : i32
    %c0_i32_0 = arith.constant 0 : i32
    %c0_i32_1 = arith.constant 0 : i32
    %c0_i32_2 = arith.constant 0 : i32
    return %c0_i32, %c0_i32_0, %c0_i32_1 : i32, i32, i32
  }
  func.func @transform_4(%arg0: i32) -> (i32, i32, i32) {
    %c0_i32 = arith.constant 0 : i32
    %c0_i32_0 = arith.constant 0 : i32
    %c0_i32_1 = arith.constant 0 : i32
    %c0_i32_2 = arith.constant 0 : i32
    return %c0_i32, %c0_i32_0, %c0_i32_1 : i32, i32, i32
  }
  func.func @transform_5(%arg0: i32) -> (i32, i32, i32) {
    %c0_i32 = arith.constant 0 : i32
    %c0_i32_0 = arith.constant 0 : i32
    %c0_i32_1 = arith.constant 0 : i32
    %c0_i32_2 = arith.constant 0 : i32
    return %c0_i32, %c0_i32_0, %c0_i32_1 : i32, i32, i32
  }
  func.func @transform_6(%arg0: i32) -> (i32, i32, i32) {
    %c0_i32 = arith.constant 0 : i32
    %c0_i32_0 = arith.constant 0 : i32
    %c0_i32_1 = arith.constant 0 : i32
    %c0_i32_2 = arith.constant 0 : i32
    return %c0_i32, %c0_i32_0, %c0_i32_1 : i32, i32, i32
  }
  func.func @transform_7(%arg0: i32) -> (i32, i32, i32) {
    %c0_i32 = arith.constant 0 : i32
    %c0_i32_0 = arith.constant 0 : i32
    %c0_i32_1 = arith.constant 0 : i32
    %c0_i32_2 = arith.constant 0 : i32
    return %c0_i32, %c0_i32_0, %c0_i32_1 : i32, i32, i32
  }
  func.func @transform_8(%arg0: i32) -> (i32, i32, i32) {
    %c0_i32 = arith.constant 0 : i32
    %c0_i32_0 = arith.constant 0 : i32
    %c0_i32_1 = arith.constant 0 : i32
    %c0_i32_2 = arith.constant 0 : i32
    return %c0_i32, %c0_i32_0, %c0_i32_1 : i32, i32, i32
  }
  func.func @transform_9(%arg0: i32) -> (i32, i32, i32) {
    %c0_i32 = arith.constant 0 : i32
    %c0_i32_0 = arith.constant 0 : i32
    %c0_i32_1 = arith.constant 0 : i32
    %c0_i32_2 = arith.constant 0 : i32
    return %c0_i32, %c0_i32_0, %c0_i32_1 : i32, i32, i32
  }
  func.func @transform_10(%arg0: i32) -> (i32, i32) {
    %c0_i32 = arith.constant 0 : i32
    %c0_i32_0 = arith.constant 0 : i32
    %c0_i32_1 = arith.constant 0 : i32
    return %c0_i32, %c0_i32_0 : i32, i32
  }
  func.func @transform_11(%arg0: i32) -> (i32, i32) {
    %c0_i32 = arith.constant 0 : i32
    %c0_i32_0 = arith.constant 0 : i32
    %c0_i32_1 = arith.constant 0 : i32
    return %c0_i32, %c0_i32_0 : i32, i32
  }
  func.func @transform_12(%arg0: i32) -> (i32, i32) {
    %c0_i32 = arith.constant 0 : i32
    %c0_i32_0 = arith.constant 0 : i32
    %c0_i32_1 = arith.constant 0 : i32
    return %c0_i32, %c0_i32_0 : i32, i32
  }
  func.func @transform_13(%arg0: i32) -> (i32, i32) {
    %c0_i32 = arith.constant 0 : i32
    %c0_i32_0 = arith.constant 0 : i32
    %c0_i32_1 = arith.constant 0 : i32
    return %c0_i32, %c0_i32_0 : i32, i32
  }
}

</mosaic_0001>

<llo_original>
// kernel: tpu_custom_call.1
$region0: #{tpu_custom_call.1}
  #allocation0 [shape = 'u32[]', space=smem, size = 0x4, offset = 0x4, fixed_abs, tag = 'smem constant byte address 0x4 - core index']
  #allocation1 [shape = 'u32[144,128]{1,0:T(1,128)}', space=vmem, size = 0x12000, scoped, tag = 'internal scratch']
  %s0 = inlined_call_operand.vmem [shape: f32[16,32], index: 0, kind: input, shape index: {}]
  %s1 = inlined_call_operand.vmem [shape: f32[2,4,32], index: 1, kind: input, shape index: {}]
  %s2 = inlined_call_operand.vmem [shape: f32[2,32,96], index: 2, kind: input, shape index: {}]
  %s3 = inlined_call_operand.vmem [shape: f32[2,1,96], index: 3, kind: input, shape index: {}]
  %s4 = inlined_call_operand.vmem [shape: f32[2,32,32], index: 4, kind: input, shape index: {}]
  %s5 = inlined_call_operand.vmem [shape: f32[2,1,32], index: 5, kind: input, shape index: {}]
  %s6 = inlined_call_operand.vmem [shape: f32[2,32,128], index: 6, kind: input, shape index: {}]
  %s7 = inlined_call_operand.vmem [shape: f32[2,1,128], index: 7, kind: input, shape index: {}]
  %s8 = inlined_call_operand.vmem [shape: f32[2,128,32], index: 8, kind: input, shape index: {}]
  %s9 = inlined_call_operand.vmem [shape: f32[2,1,32], index: 9, kind: input, shape index: {}]
  %s10 = inlined_call_operand.vmem [shape: f32[1,32], index: 10, kind: input, shape index: {}]
  %s11 = inlined_call_operand.vmem [shape: f32[1,32], index: 11, kind: input, shape index: {}]
  %s12 = inlined_call_operand.vmem [shape: f32[32,16], index: 12, kind: input, shape index: {}]
  %s13 = inlined_call_operand.hbm [shape: f32[16,16], index: 13, kind: output, shape index: {}]
  %s14 = sld [smem:[#allocation0]]
  $region62: #{tpu_custom_call.1} parent=0
    _
  %s16 = ssub.s32 1, %s14
  %s17 = scalar_select 0, %s16, %s14
  $region1: #{tpu_custom_call.1} parent=0
    #allocation2 [shape = 'u8[8192]{0}', space=vmem, size = 0x2000, scoped, tag = 'output window, operand 0, single buffered']
    #allocation3 [shape = 's32[1]{0}', space=sflag, size = 0x4, scoped, tag = 'scoped memory for tpu_custom_call.1']
    %18 = vsyncpa [#allocation3], 0
    // Predicated region
    $region2: #{tpu_custom_call.1} parent=1 // pred_check
      _
    $region3: #{tpu_custom_call.1} parent=1 // pred_check_branch
      %20 = sbr.rel (0) target = $region5
    $region4: #{tpu_custom_call.1} parent=1 // pred_region
      _
    $region5: #{tpu_custom_call.1} parent=1 // pred_fallthru
      _
    // Predicated region
    $region6: #{tpu_custom_call.1} parent=1 // pred_check
      _
    $region7: #{tpu_custom_call.1} parent=1 // pred_check_branch
      %22 = sbr.rel (0) target = $region9
    $region8: #{tpu_custom_call.1} parent=1 // pred_region
      _
    $region9: #{tpu_custom_call.1} parent=1 // pred_fallthru
      _
    // Predicated region
    $region10: #{tpu_custom_call.1} parent=1 // pred_check
      _
    $region11: #{tpu_custom_call.1} parent=1 // pred_check_branch
      %24 = sbr.rel (0) target = $region13
    $region12: #{tpu_custom_call.1} parent=1 // pred_region
      _
    $region13: #{tpu_custom_call.1} parent=1 // pred_fallthru
      _
    // Predicated region
    $region14: #{tpu_custom_call.1} parent=1 // pred_check
      _
    $region15: #{tpu_custom_call.1} parent=1 // pred_check_branch
      %26 = sbr.rel (0) target = $region17
    $region16: #{tpu_custom_call.1} parent=1 // pred_region
      _
    $region17: #{tpu_custom_call.1} parent=1 // pred_fallthru
      _
    // Predicated region
    $region18: #{tpu_custom_call.1} parent=1 // pred_check
      _
    $region19: #{tpu_custom_call.1} parent=1 // pred_check_branch
      %28 = sbr.rel (0) target = $region21
    $region20: #{tpu_custom_call.1} parent=1 // pred_region
      _
    $region21: #{tpu_custom_call.1} parent=1 // pred_fallthru
      _
    // Predicated region
    $region22: #{tpu_custom_call.1} parent=1 // pred_check
      _
    $region23: #{tpu_custom_call.1} parent=1 // pred_check_branch
      %30 = sbr.rel (0) target = $region25
    $region24: #{tpu_custom_call.1} parent=1 // pred_region
      _
    $region25: #{tpu_custom_call.1} parent=1 // pred_fallthru
      _
    // Predicated region
    $region26: #{tpu_custom_call.1} parent=1 // pred_check
      _
    $region27: #{tpu_custom_call.1} parent=1 // pred_check_branch
      %32 = sbr.rel (0) target = $region29
    $region28: #{tpu_custom_call.1} parent=1 // pred_region
      _
    $region29: #{tpu_custom_call.1} parent=1 // pred_fallthru
      _
    // Predicated region
    $region30: #{tpu_custom_call.1} parent=1 // pred_check
      _
    $region31: #{tpu_custom_call.1} parent=1 // pred_check_branch
      %34 = sbr.rel (0) target = $region33
    $region32: #{tpu_custom_call.1} parent=1 // pred_region
      _
    $region33: #{tpu_custom_call.1} parent=1 // pred_fallthru
      _
    // Predicated region
    $region34: #{tpu_custom_call.1} parent=1 // pred_check
      _
    $region35: #{tpu_custom_call.1} parent=1 // pred_check_branch
      %36 = sbr.rel (0) target = $region37
    $region36: #{tpu_custom_call.1} parent=1 // pred_region
      _
    $region37: #{tpu_custom_call.1} parent=1 // pred_fallthru
      _
    // Predicated region
    $region38: #{tpu_custom_call.1} parent=1 // pred_check
      _
    $region39: #{tpu_custom_call.1} parent=1 // pred_check_branch
      %38 = sbr.rel (0) target = $region41
    $region40: #{tpu_custom_call.1} parent=1 // pred_region
      _
    $region41: #{tpu_custom_call.1} parent=1 // pred_fallthru
      _
    // Predicated region
    $region42: #{tpu_custom_call.1} parent=1 // pred_check
      _
    $region43: #{tpu_custom_call.1} parent=1 // pred_check_branch
      %40 = sbr.rel (0) target = $region45
    $region44: #{tpu_custom_call.1} parent=1 // pred_region
      _
    $region45: #{tpu_custom_call.1} parent=1 // pred_fallthru
      _
    // Predicated region
    $region46: #{tpu_custom_call.1} parent=1 // pred_check
      _
    $region47: #{tpu_custom_call.1} parent=1 // pred_check_branch
      %42 = sbr.rel (0) target = $region49
    $region48: #{tpu_custom_call.1} parent=1 // pred_region
      _
    $region49: #{tpu_custom_call.1} parent=1 // pred_fallthru
      _
    // Predicated region
    $region50: #{tpu_custom_call.1} parent=1 // pred_check
      _
    $region51: #{tpu_custom_call.1} parent=1 // pred_check_branch
      %44 = sbr.rel (0) target = $region53
    $region52: #{tpu_custom_call.1} parent=1 // pred_region
      _
    $region53: #{tpu_custom_call.1} parent=1 // pred_fallthru
      _
    %v45 = vld [vmem:[%s0] sm:$0xff]
    %v46 = vld [vmem:[%s0 + $0x8] sm:$0xff]
    %v47 = vld [vmem:[%s1] sm:$0xf]
    %vm48 = vcmask 261120
    %v49 = vsel %vm48, %v45, 0.0
    %50 = vadd.xlane.f32.xlu0 %v49
    %v51 = vpop.xlane.xlu0 %50
    %v52 = vsel %vm48, %v46, 0.0
    %53 = vadd.xlane.f32.xlu0 %v52
    %v54 = vpop.xlane.xlu0 %53
    %v55 = vrcp.pop 32.0
    %v56 = vmul.f32 %v51, %v55
    %v57 = vmul.f32 %v54, %v55
    %v58 = vsub.f32 %v45, %v56
    %v59 = vsub.f32 %v46, %v57
    %v60 = vmul.f32 %v58, %v58
    %v61 = vmul.f32 %v59, %v59
    %v62 = vsel %vm48, %v60, 0.0
    %63 = vadd.xlane.f32.xlu0 %v62
    %v64 = vpop.xlane.xlu0 %63
    %v65 = vsel %vm48, %v61, 0.0
    %66 = vadd.xlane.f32.xlu0 %v65
    %v67 = vpop.xlane.xlu0 %66
    %v68 = vmul.f32 %v64, %v55
    %v69 = vmul.f32 %v67, %v55
    %v70 = vadd.f32 %v68, 1e-05
    %v71 = vadd.f32 %v69, 1e-05
    %v72 = vrsqrt.pop %v70
    %v73 = vrsqrt.pop %v71
    %v74 = vmul.f32 %v58, %v72
    %v75 = vmul.f32 %v59, %v73
    %v76 = vlaneseq
    %v77 = vshrl.u32 %v76, 7
    %v78 = vsub.s32 0, %v77
    %v79 = vrot.slane %v47, %v78
    %v80 = vmul.f32 %v74, %v79
    %v81 = vmul.f32 %v75, %v79
    %v82 = vlaneseq
    %v83 = vshrl.u32 %v82, 7
    %v84 = vsub.s32 1, %v83
    %v85 = vrot.slane %v47, %v84
    %v86 = vadd.f32 %v80, %v85
    %v87 = vadd.f32 %v81, %v85
    %v88 = vld [vmem:[%s2] sm:$0xff]
    %v89 = vld [vmem:[%s2 + $0x8] sm:$0xff]
    %v90 = vld [vmem:[%s2 + $0x10] sm:$0xff]
    %v91 = vld [vmem:[%s2 + $0x18] sm:$0xff]
    %v92 = vld [vmem:[%s3] sm:$0x1]
    %v94 = vlaneseq
    %v95 = vshrl.u32 %v94, 7
    %v96 = vsub.s32 0, %v95
    %v97 = vrot.slane %v92, %v96
    %v100 = vsel %vm48, %v86, 0
    %v103 = vsel %vm48, %v87, 0
    %105 = vmatprep.subr.mxu0 0.0
    %106 = vmatpush1.msra.mxu0 0.0
    %107 = vmatprep.subr.mxu0 0.0
    %108 = vmatpush1.msra.mxu0 0.0
    %109 = vmatprep.subr.mxu0 0.0
    %110 = vmatpush1.msra.mxu0 0.0
    %111 = vmatprep.subr.mxu0 0.0
    %112 = vmatpush1.msra.mxu0 0.0
    %113 = vmatprep.subr.mxu0 0.0
    %114 = vmatpush1.msra.mxu0 0.0
    %115 = vmatprep.subr.mxu0 0.0
    %116 = vmatpush1.msra.mxu0 0.0
    %117 = vmatprep.subr.mxu0 0.0
    %118 = vmatpush1.msra.mxu0 0.0
    %119 = vmatprep.subr.mxu0 0.0
    %120 = vmatpush1.msra.mxu0 0.0
    %121 = vmatprep.subr.mxu0 0.0
    %122 = vmatpush1.msra.mxu0 0.0
    %123 = vmatprep.subr.mxu0 0.0
    %124 = vmatpush1.msra.mxu0 0.0
    %125 = vmatprep.subr.mxu0 0.0
    %126 = vmatpush1.msra.mxu0 0.0
    %127 = vmatprep.subr.mxu0 0.0
    %128 = vmatpush1.msra.mxu0 0.0
    %129 = vmatprep.subr.mxu0 0.0
    %130 = vmatpush1.msra.mxu0 %v91
    %131 = vmatprep.subr.mxu0 0.0
    %132 = vmatpush1.msra.mxu0 %v90
    %133 = vmatprep.subr.mxu0 0.0
    %134 = vmatpush1.msra.mxu0 %v89
    %135 = vmatprep.subr.mxu0 0.0
    %136 = vmatpush1.msra.mxu0 %v88
    %137 = vmatprep.subr.mxu0 0.0
    %138 = vmatpush2.msra.mxu0 0.0
    %139 = vmatprep.subr.mxu0 0.0
    %140 = vmatpush2.msra.mxu0 0.0
    %141 = vmatprep.subr.mxu0 0.0
    %142 = vmatpush2.msra.mxu0 0.0
    %143 = vmatprep.subr.mxu0 0.0
    %144 = vmatpush2.msra.mxu0 0.0
    %145 = vmatprep.subr.mxu0 0.0
    %146 = vmatpush2.msra.mxu0 0.0
    %147 = vmatprep.subr.mxu0 0.0
    %148 = vmatpush2.msra.mxu0 0.0
    %149 = vmatprep.subr.mxu0 0.0
    %150 = vmatpush2.msra.mxu0 0.0
    %151 = vmatprep.subr.mxu0 0.0
    %152 = vmatpush2.msra.mxu0 0.0
    %153 = vmatprep.subr.mxu0 0.0
    %154 = vmatpush2.msra.mxu0 0.0
    %155 = vmatprep.subr.mxu0 0.0
    %156 = vmatpush2.msra.mxu0 0.0
    %157 = vmatprep.subr.mxu0 0.0
    %158 = vmatpush2.msra.mxu0 0.0
    %159 = vmatprep.subr.mxu0 0.0
    %160 = vmatpush2.msra.mxu0 0.0
    %161 = vmatprep.subr.mxu0 0.0
    %162 = vmatpush2.msra.mxu0 0.0
    %163 = vmatprep.subr.mxu0 0.0
    %164 = vmatpush2.msra.mxu0 0.0
    %165 = vmatprep.subr.mxu0 0.0
    %166 = vmatpush2.msra.mxu0 0.0
    %167 = vmatprep.subr.mxu0 0.0
    %168 = vmatpush2.msra.mxu0 0.0
    %169 = vmatprep.mubr.f32.mxu0 0.0
    %170 = vmatmul.mubr.f32.gmra.mxu0 %v100
    %v171 = vpop.f32.mrf.mxu0
    %v172 = vadd.f32 %v97, %v171
    %v173 = vpop.f32.mrf.mxu0
    %174 = vmatprep.mubr.f32.mxu0 0.0
    %175 = vmatmul.mubr.f32.gmra.mxu0 %v103
    %v176 = vpop.f32.mrf.mxu0
    %v177 = vadd.f32 %v97, %v176
    %v178 = vpop.f32.mrf.mxu0
    %179 = vdwg.mxu0
    %v180 = vld [vmem:[%s4] sm:$0xff]
    %v181 = vld [vmem:[%s4 + $0x8] sm:$0xff]
    %v182 = vld [vmem:[%s4 + $0x10] sm:$0xff]
    %v183 = vld [vmem:[%s4 + $0x18] sm:$0xff]
    %185 = vrot.lane.b32.xlu0 %v172, 96
    %v186 = vpop.permute.xlu0 %185
    %vm187 = vcmask 64512
    %v188 = vsel %vm187, %v172, 0
    %v190 = vsel %vm187, %v186, 0
    %192 = vmatprep.subr.mxu0 0.0
    %193 = vmatpush1.xpose.msra.mxu0 0.0
    %194 = vmatprep.subr.mxu0 0.0
    %195 = vmatpush1.xpose.msra.mxu0 0.0
    %196 = vmatprep.subr.mxu0 0.0
    %197 = vmatpush1.xpose.msra.mxu0 0.0
    %198 = vmatprep.subr.mxu0 0.0
    %199 = vmatpush1.xpose.msra.mxu0 0.0
    %200 = vmatprep.subr.mxu0 0.0
    %201 = vmatpush1.xpose.msra.mxu0 0.0
    %202 = vmatprep.subr.mxu0 0.0
    %203 = vmatpush1.xpose.msra.mxu0 0.0
    %204 = vmatprep.subr.mxu0 0.0
    %205 = vmatpush1.xpose.msra.mxu0 0.0
    %206 = vmatprep.subr.mxu0 0.0
    %207 = vmatpush1.xpose.msra.mxu0 0.0
    %208 = vmatprep.subr.mxu0 0.0
    %209 = vmatpush1.xpose.msra.mxu0 0.0
    %210 = vmatprep.subr.mxu0 0.0
    %211 = vmatpush1.xpose.msra.mxu0 0.0
    %212 = vmatprep.subr.mxu0 0.0
    %213 = vmatpush1.xpose.msra.mxu0 0.0
    %214 = vmatprep.subr.mxu0 0.0
    %215 = vmatpush1.xpose.msra.mxu0 0.0
    %216 = vmatprep.subr.mxu0 0.0
    %217 = vmatpush1.xpose.msra.mxu0 0.0
    %218 = vmatprep.subr.mxu0 0.0
    %219 = vmatpush1.xpose.msra.mxu0 0.0
    %220 = vmatprep.subr.mxu0 0.0
    %221 = vmatpush1.xpose.msra.mxu0 0.0
    %222 = vmatprep.subr.mxu0 0.0
    %223 = vmatpush1.xpose.msra.mxu0 %v190
    %224 = vmatprep.subr.mxu0 0.0
    %225 = vmatpush2.xpose.msra.mxu0 0.0
    %226 = vmatprep.subr.mxu0 0.0
    %227 = vmatpush2.xpose.msra.mxu0 0.0
    %228 = vmatprep.subr.mxu0 0.0
    %229 = vmatpush2.xpose.msra.mxu0 0.0
    %230 = vmatprep.subr.mxu0 0.0
    %231 = vmatpush2.xpose.msra.mxu0 0.0
    %232 = vmatprep.subr.mxu0 0.0
    %233 = vmatpush2.xpose.msra.mxu0 0.0
    %234 = vmatprep.subr.mxu0 0.0
    %235 = vmatpush2.xpose.msra.mxu0 0.0
    %236 = vmatprep.subr.mxu0 0.0
    %237 = vmatpush2.xpose.msra.mxu0 0.0
    %238 = vmatprep.subr.mxu0 0.0
    %239 = vmatpush2.xpose.msra.mxu0 0.0
    %240 = vmatprep.subr.mxu0 0.0
    %241 = vmatpush2.xpose.msra.mxu0 0.0
    %242 = vmatprep.subr.mxu0 0.0
    %243 = vmatpush2.xpose.msra.mxu0 0.0
    %244 = vmatprep.subr.mxu0 0.0
    %245 = vmatpush2.xpose.msra.mxu0 0.0
    %246 = vmatprep.subr.mxu0 0.0
    %247 = vmatpush2.xpose.msra.mxu0 0.0
    %248 = vmatprep.subr.mxu0 0.0
    %249 = vmatpush2.xpose.msra.mxu0 0.0
    %250 = vmatprep.subr.mxu0 0.0
    %251 = vmatpush2.xpose.msra.mxu0 0.0
    %252 = vmatprep.subr.mxu0 0.0
    %253 = vmatpush2.xpose.msra.mxu0 0.0
    %254 = vmatprep.subr.mxu0 0.0
    %255 = vmatpush2.xpose.msra.mxu0 0.0
    %256 = vmatprep.mubr.f32.mxu0 0.0
    %257 = vmatmul.mubr.f32.gmra.mxu0 %v188
    %v258 = vpop.f32.mrf.mxu0
    %v259 = vadd.f32 0.0, %v258
    %v260 = vpop.f32.mrf.mxu0
    %261 = vdwg.mxu0
    %263 = vrot.lane.b32.xlu0 %v177, 96
    %v264 = vpop.permute.xlu0 %263
    %v265 = vsel %vm187, %v177, 0
    %v267 = vsel %vm187, %v264, 0
    %269 = vmatprep.subr.mxu0 0.0
    %270 = vmatpush1.xpose.msra.mxu0 0.0
    %271 = vmatprep.subr.mxu0 0.0
    %272 = vmatpush1.xpose.msra.mxu0 0.0
    %273 = vmatprep.subr.mxu0 0.0
    %274 = vmatpush1.xpose.msra.mxu0 0.0
    %275 = vmatprep.subr.mxu0 0.0
    %276 = vmatpush1.xpose.msra.mxu0 0.0
    %277 = vmatprep.subr.mxu0 0.0
    %278 = vmatpush1.xpose.msra.mxu0 0.0
    %279 = vmatprep.subr.mxu0 0.0
    %280 = vmatpush1.xpose.msra.mxu0 0.0
    %281 = vmatprep.subr.mxu0 0.0
    %282 = vmatpush1.xpose.msra.mxu0 0.0
    %283 = vmatprep.subr.mxu0 0.0
    %284 = vmatpush1.xpose.msra.mxu0 0.0
    %285 = vmatprep.subr.mxu0 0.0
    %286 = vmatpush1.xpose.msra.mxu0 0.0
    %287 = vmatprep.subr.mxu0 0.0
    %288 = vmatpush1.xpose.msra.mxu0 0.0
    %289 = vmatprep.subr.mxu0 0.0
    %290 = vmatpush1.xpose.msra.mxu0 0.0
    %291 = vmatprep.subr.mxu0 0.0
    %292 = vmatpush1.xpose.msra.mxu0 0.0
    %293 = vmatprep.subr.mxu0 0.0
    %294 = vmatpush1.xpose.msra.mxu0 0.0
    %295 = vmatprep.subr.mxu0 0.0
    %296 = vmatpush1.xpose.msra.mxu0 0.0
    %297 = vmatprep.subr.mxu0 0.0
    %298 = vmatpush1.xpose.msra.mxu0 0.0
    %299 = vmatprep.subr.mxu0 0.0
    %300 = vmatpush1.xpose.msra.mxu0 %v267
    %301 = vmatprep.subr.mxu0 0.0
    %302 = vmatpush2.xpose.msra.mxu0 0.0
    %303 = vmatprep.subr.mxu0 0.0
    %304 = vmatpush2.xpose.msra.mxu0 0.0
    %305 = vmatprep.subr.mxu0 0.0
    %306 = vmatpush2.xpose.msra.mxu0 0.0
    %307 = vmatprep.subr.mxu0 0.0
    %308 = vmatpush2.xpose.msra.mxu0 0.0
    %309 = vmatprep.subr.mxu0 0.0
    %310 = vmatpush2.xpose.msra.mxu0 0.0
    %311 = vmatprep.subr.mxu0 0.0
    %312 = vmatpush2.xpose.msra.mxu0 0.0
    %313 = vmatprep.subr.mxu0 0.0
    %314 = vmatpush2.xpose.msra.mxu0 0.0
    %315 = vmatprep.subr.mxu0 0.0
    %316 = vmatpush2.xpose.msra.mxu0 0.0
    %317 = vmatprep.subr.mxu0 0.0
    %318 = vmatpush2.xpose.msra.mxu0 0.0
    %319 = vmatprep.subr.mxu0 0.0
    %320 = vmatpush2.xpose.msra.mxu0 0.0
    %321 = vmatprep.subr.mxu0 0.0
    %322 = vmatpush2.xpose.msra.mxu0 0.0
    %323 = vmatprep.subr.mxu0 0.0
    %324 = vmatpush2.xpose.msra.mxu0 0.0
    %325 = vmatprep.subr.mxu0 0.0
    %326 = vmatpush2.xpose.msra.mxu0 0.0
    %327 = vmatprep.subr.mxu0 0.0
    %328 = vmatpush2.xpose.msra.mxu0 0.0
    %329 = vmatprep.subr.mxu0 0.0
    %330 = vmatpush2.xpose.msra.mxu0 0.0
    %331 = vmatprep.subr.mxu0 0.0
    %332 = vmatpush2.xpose.msra.mxu0 0.0
    %333 = vmatprep.mubr.f32.mxu0 0.0
    %334 = vmatmul.mubr.f32.gmra.mxu0 %v265
    %v335 = vpop.f32.mrf.mxu0
    %v336 = vadd.f32 0.0, %v335
    %v337 = vpop.f32.mrf.mxu0
    %338 = vdwg.mxu0
    %v339 = vsel %vm187, %v259, -inf
    %340 = vmax.xlane.f32.xlu0 %v339
    %v341 = vpop.xlane.xlu0 %340
    %v342 = vsel %vm187, %v336, -inf
    %343 = vmax.xlane.f32.xlu0 %v342
    %v344 = vpop.xlane.xlu0 %343
    %v345 = vsub.f32 %v259, %v341
    %v346 = vsub.f32 %v336, %v344
    %v347 = vmul.f32 %v345, 1.442695
    %v348 = vpow.pop %v347
    %v349 = vmul.f32 %v346, 1.442695
    %v350 = vpow.pop %v349
    %v351 = vsel %vm187, %v348, 0.0
    %352 = vadd.xlane.f32.xlu0 %v351
    %v353 = vpop.xlane.xlu0 %352
    %v354 = vsel %vm187, %v350, 0.0
    %355 = vadd.xlane.f32.xlu0 %v354
    %v356 = vpop.xlane.xlu0 %355
    %v357 = vrcp.pop %v353
    %v358 = vmul.f32 %v348, %v357
    %v359 = vrcp.pop %v356
    %v360 = vmul.f32 %v350, %v359
    %361 = vrot.lane.b32.xlu0 %v172, 64
    %v362 = vpop.permute.xlu0 %361
    %v365 = vsel %vm187, %v358, 0
    %367 = vmatprep.subr.mxu0 0.0
    %368 = vmatpush1.msra.mxu0 0.0
    %369 = vmatprep.subr.mxu0 0.0
    %370 = vmatpush1.msra.mxu0 0.0
    %371 = vmatprep.subr.mxu0 0.0
    %372 = vmatpush1.msra.mxu0 0.0
    %373 = vmatprep.subr.mxu0 0.0
    %374 = vmatpush1.msra.mxu0 0.0
    %375 = vmatprep.subr.mxu0 0.0
    %376 = vmatpush1.msra.mxu0 0.0
    %377 = vmatprep.subr.mxu0 0.0
    %378 = vmatpush1.msra.mxu0 0.0
    %379 = vmatprep.subr.mxu0 0.0
    %380 = vmatpush1.msra.mxu0 0.0
    %381 = vmatprep.subr.mxu0 0.0
    %382 = vmatpush1.msra.mxu0 0.0
    %383 = vmatprep.subr.mxu0 0.0
    %384 = vmatpush1.msra.mxu0 0.0
    %385 = vmatprep.subr.mxu0 0.0
    %386 = vmatpush1.msra.mxu0 0.0
    %387 = vmatprep.subr.mxu0 0.0
    %388 = vmatpush1.msra.mxu0 0.0
    %389 = vmatprep.subr.mxu0 0.0
    %390 = vmatpush1.msra.mxu0 0.0
    %391 = vmatprep.subr.mxu0 0.0
    %392 = vmatpush1.msra.mxu0 0.0
    %393 = vmatprep.subr.mxu0 0.0
    %394 = vmatpush1.msra.mxu0 0.0
    %395 = vmatprep.subr.mxu0 0.0
    %396 = vmatpush1.msra.mxu0 0.0
    %397 = vmatprep.subr.mxu0 0.0
    %398 = vmatpush1.msra.mxu0 %v362
    %399 = vmatprep.subr.mxu0 0.0
    %400 = vmatpush2.msra.mxu0 0.0
    %401 = vmatprep.subr.mxu0 0.0
    %402 = vmatpush2.msra.mxu0 0.0
    %403 = vmatprep.subr.mxu0 0.0
    %404 = vmatpush2.msra.mxu0 0.0
    %405 = vmatprep.subr.mxu0 0.0
    %406 = vmatpush2.msra.mxu0 0.0
    %407 = vmatprep.subr.mxu0 0.0
    %408 = vmatpush2.msra.mxu0 0.0
    %409 = vmatprep.subr.mxu0 0.0
    %410 = vmatpush2.msra.mxu0 0.0
    %411 = vmatprep.subr.mxu0 0.0
    %412 = vmatpush2.msra.mxu0 0.0
    %413 = vmatprep.subr.mxu0 0.0
    %414 = vmatpush2.msra.mxu0 0.0
    %415 = vmatprep.subr.mxu0 0.0
    %416 = vmatpush2.msra.mxu0 0.0
    %417 = vmatprep.subr.mxu0 0.0
    %418 = vmatpush2.msra.mxu0 0.0
    %419 = vmatprep.subr.mxu0 0.0
    %420 = vmatpush2.msra.mxu0 0.0
    %421 = vmatprep.subr.mxu0 0.0
    %422 = vmatpush2.msra.mxu0 0.0
    %423 = vmatprep.subr.mxu0 0.0
    %424 = vmatpush2.msra.mxu0 0.0
    %425 = vmatprep.subr.mxu0 0.0
    %426 = vmatpush2.msra.mxu0 0.0
    %427 = vmatprep.subr.mxu0 0.0
    %428 = vmatpush2.msra.mxu0 0.0
    %429 = vmatprep.subr.mxu0 0.0
    %430 = vmatpush2.msra.mxu0 0.0
    %431 = vmatprep.mubr.f32.mxu0 0.0
    %432 = vmatmul.mubr.f32.gmra.mxu0 %v365
    %v433 = vpop.f32.mrf.mxu0
    %v434 = vadd.f32 0.0, %v433
    %v435 = vpop.f32.mrf.mxu0
    %436 = vdwg.mxu0
    %437 = vrot.lane.b32.xlu0 %v177, 64
    %v438 = vpop.permute.xlu0 %437
    %v441 = vsel %vm187, %v360, 0
    %443 = vmatprep.subr.mxu0 0.0
    %444 = vmatpush1.msra.mxu0 0.0
    %445 = vmatprep.subr.mxu0 0.0
    %446 = vmatpush1.msra.mxu0 0.0
    %447 = vmatprep.subr.mxu0 0.0
    %448 = vmatpush1.msra.mxu0 0.0
    %449 = vmatprep.subr.mxu0 0.0
    %450 = vmatpush1.msra.mxu0 0.0
    %451 = vmatprep.subr.mxu0 0.0
    %452 = vmatpush1.msra.mxu0 0.0
    %453 = vmatprep.subr.mxu0 0.0
    %454 = vmatpush1.msra.mxu0 0.0
    %455 = vmatprep.subr.mxu0 0.0
    %456 = vmatpush1.msra.mxu0 0.0
    %457 = vmatprep.subr.mxu0 0.0
    %458 = vmatpush1.msra.mxu0 0.0
    %459 = vmatprep.subr.mxu0 0.0
    %460 = vmatpush1.msra.mxu0 0.0
    %461 = vmatprep.subr.mxu0 0.0
    %462 = vmatpush1.msra.mxu0 0.0
    %463 = vmatprep.subr.mxu0 0.0
    %464 = vmatpush1.msra.mxu0 0.0
    %465 = vmatprep.subr.mxu0 0.0
    %466 = vmatpush1.msra.mxu0 0.0
    %467 = vmatprep.subr.mxu0 0.0
    %468 = vmatpush1.msra.mxu0 0.0
    %469 = vmatprep.subr.mxu0 0.0
    %470 = vmatpush1.msra.mxu0 0.0
    %471 = vmatprep.subr.mxu0 0.0
    %472 = vmatpush1.msra.mxu0 0.0
    %473 = vmatprep.subr.mxu0 0.0
    %474 = vmatpush1.msra.mxu0 %v438
    %475 = vmatprep.subr.mxu0 0.0
    %476 = vmatpush2.msra.mxu0 0.0
    %477 = vmatprep.subr.mxu0 0.0
    %478 = vmatpush2.msra.mxu0 0.0
    %479 = vmatprep.subr.mxu0 0.0
    %480 = vmatpush2.msra.mxu0 0.0
    %481 = vmatprep.subr.mxu0 0.0
    %482 = vmatpush2.msra.mxu0 0.0
    %483 = vmatprep.subr.mxu0 0.0
    %484 = vmatpush2.msra.mxu0 0.0
    %485 = vmatprep.subr.mxu0 0.0
    %486 = vmatpush2.msra.mxu0 0.0
    %487 = vmatprep.subr.mxu0 0.0
    %488 = vmatpush2.msra.mxu0 0.0
    %489 = vmatprep.subr.mxu0 0.0
    %490 = vmatpush2.msra.mxu0 0.0
    %491 = vmatprep.subr.mxu0 0.0
    %492 = vmatpush2.msra.mxu0 0.0
    %493 = vmatprep.subr.mxu0 0.0
    %494 = vmatpush2.msra.mxu0 0.0
    %495 = vmatprep.subr.mxu0 0.0
    %496 = vmatpush2.msra.mxu0 0.0
    %497 = vmatprep.subr.mxu0 0.0
    %498 = vmatpush2.msra.mxu0 0.0
    %499 = vmatprep.subr.mxu0 0.0
    %500 = vmatpush2.msra.mxu0 0.0
    %501 = vmatprep.subr.mxu0 0.0
    %502 = vmatpush2.msra.mxu0 0.0
    %503 = vmatprep.subr.mxu0 0.0
    %504 = vmatpush2.msra.mxu0 0.0
    %505 = vmatprep.subr.mxu0 0.0
    %506 = vmatpush2.msra.mxu0 0.0
    %507 = vmatprep.mubr.f32.mxu0 0.0
    %508 = vmatmul.mubr.f32.gmra.mxu0 %v441
    %v509 = vpop.f32.mrf.mxu0
    %v510 = vadd.f32 0.0, %v509
    %v511 = vpop.f32.mrf.mxu0
    %512 = vdwg.mxu0
    %513 = vrot.lane.b32.xlu0 %v172, 120
    %v514 = vpop.permute.xlu0 %513
    %515 = vrot.lane.b32.xlu0 %v172, 88
    %v516 = vpop.permute.xlu0 %515
    %v517 = vsel %vm187, %v514, 0
    %v519 = vsel %vm187, %v516, 0
    %521 = vmatprep.subr.mxu0 0.0
    %522 = vmatpush1.xpose.msra.mxu0 0.0
    %523 = vmatprep.subr.mxu0 0.0
    %524 = vmatpush1.xpose.msra.mxu0 0.0
    %525 = vmatprep.subr.mxu0 0.0
    %526 = vmatpush1.xpose.msra.mxu0 0.0
    %527 = vmatprep.subr.mxu0 0.0
    %528 = vmatpush1.xpose.msra.mxu0 0.0
    %529 = vmatprep.subr.mxu0 0.0
    %530 = vmatpush1.xpose.msra.mxu0 0.0
    %531 = vmatprep.subr.mxu0 0.0
    %532 = vmatpush1.xpose.msra.mxu0 0.0
    %533 = vmatprep.subr.mxu0 0.0
    %534 = vmatpush1.xpose.msra.mxu0 0.0
    %535 = vmatprep.subr.mxu0 0.0
    %536 = vmatpush1.xpose.msra.mxu0 0.0
    %537 = vmatprep.subr.mxu0 0.0
    %538 = vmatpush1.xpose.msra.mxu0 0.0
    %539 = vmatprep.subr.mxu0 0.0
    %540 = vmatpush1.xpose.msra.mxu0 0.0
    %541 = vmatprep.subr.mxu0 0.0
    %542 = vmatpush1.xpose.msra.mxu0 0.0
    %543 = vmatprep.subr.mxu0 0.0
    %544 = vmatpush1.xpose.msra.mxu0 0.0
    %545 = vmatprep.subr.mxu0 0.0
    %546 = vmatpush1.xpose.msra.mxu0 0.0
    %547 = vmatprep.subr.mxu0 0.0
    %548 = vmatpush1.xpose.msra.mxu0 0.0
    %549 = vmatprep.subr.mxu0 0.0
    %550 = vmatpush1.xpose.msra.mxu0 0.0
    %551 = vmatprep.subr.mxu0 0.0
    %552 = vmatpush1.xpose.msra.mxu0 %v519
    %553 = vmatprep.subr.mxu0 0.0
    %554 = vmatpush2.xpose.msra.mxu0 0.0
    %555 = vmatprep.subr.mxu0 0.0
    %556 = vmatpush2.xpose.msra.mxu0 0.0
    %557 = vmatprep.subr.mxu0 0.0
    %558 = vmatpush2.xpose.msra.mxu0 0.0
    %559 = vmatprep.subr.mxu0 0.0
    %560 = vmatpush2.xpose.msra.mxu0 0.0
    %561 = vmatprep.subr.mxu0 0.0
    %562 = vmatpush2.xpose.msra.mxu0 0.0
    %563 = vmatprep.subr.mxu0 0.0
    %564 = vmatpush2.xpose.msra.mxu0 0.0
    %565 = vmatprep.subr.mxu0 0.0
    %566 = vmatpush2.xpose.msra.mxu0 0.0
    %567 = vmatprep.subr.mxu0 0.0
    %568 = vmatpush2.xpose.msra.mxu0 0.0
    %569 = vmatprep.subr.mxu0 0.0
    %570 = vmatpush2.xpose.msra.mxu0 0.0
    %571 = vmatprep.subr.mxu0 0.0
    %572 = vmatpush2.xpose.msra.mxu0 0.0
    %573 = vmatprep.subr.mxu0 0.0
    %574 = vmatpush2.xpose.msra.mxu0 0.0
    %575 = vmatprep.subr.mxu0 0.0
    %576 = vmatpush2.xpose.msra.mxu0 0.0
    %577 = vmatprep.subr.mxu0 0.0
    %578 = vmatpush2.xpose.msra.mxu0 0.0
    %579 = vmatprep.subr.mxu0 0.0
    %580 = vmatpush2.xpose.msra.mxu0 0.0
    %581 = vmatprep.subr.mxu0 0.0
    %582 = vmatpush2.xpose.msra.mxu0 0.0
    %583 = vmatprep.subr.mxu0 0.0
    %584 = vmatpush2.xpose.msra.mxu0 0.0
    %585 = vmatprep.mubr.f32.mxu0 0.0
    %586 = vmatmul.mubr.f32.gmra.mxu0 %v517
    %v587 = vpop.f32.mrf.mxu0
    %v588 = vadd.f32 0.0, %v587
    %v589 = vpop.f32.mrf.mxu0
    %590 = vdwg.mxu0
    %591 = vrot.lane.b32.xlu0 %v177, 120
    %v592 = vpop.permute.xlu0 %591
    %593 = vrot.lane.b32.xlu0 %v177, 88
    %v594 = vpop.permute.xlu0 %593
    %v595 = vsel %vm187, %v592, 0
    %v597 = vsel %vm187, %v594, 0
    %599 = vmatprep.subr.mxu0 0.0
    %600 = vmatpush1.xpose.msra.mxu0 0.0
    %601 = vmatprep.subr.mxu0 0.0
    %602 = vmatpush1.xpose.msra.mxu0 0.0
    %603 = vmatprep.subr.mxu0 0.0
    %604 = vmatpush1.xpose.msra.mxu0 0.0
    %605 = vmatprep.subr.mxu0 0.0
    %606 = vmatpush1.xpose.msra.mxu0 0.0
    %607 = vmatprep.subr.mxu0 0.0
    %608 = vmatpush1.xpose.msra.mxu0 0.0
    %609 = vmatprep.subr.mxu0 0.0
    %610 = vmatpush1.xpose.msra.mxu0 0.0
    %611 = vmatprep.subr.mxu0 0.0
    %612 = vmatpush1.xpose.msra.mxu0 0.0
    %613 = vmatprep.subr.mxu0 0.0
    %614 = vmatpush1.xpose.msra.mxu0 0.0
    %615 = vmatprep.subr.mxu0 0.0
    %616 = vmatpush1.xpose.msra.mxu0 0.0
    %617 = vmatprep.subr.mxu0 0.0
    %618 = vmatpush1.xpose.msra.mxu0 0.0
    %619 = vmatprep.subr.mxu0 0.0
    %620 = vmatpush1.xpose.msra.mxu0 0.0
    %621 = vmatprep.subr.mxu0 0.0
    %622 = vmatpush1.xpose.msra.mxu0 0.0
    %623 = vmatprep.subr.mxu0 0.0
    %624 = vmatpush1.xpose.msra.mxu0 0.0
    %625 = vmatprep.subr.mxu0 0.0
    %626 = vmatpush1.xpose.msra.mxu0 0.0
    %627 = vmatprep.subr.mxu0 0.0
    %628 = vmatpush1.xpose.msra.mxu0 0.0
    %629 = vmatprep.subr.mxu0 0.0
    %630 = vmatpush1.xpose.msra.mxu0 %v597
    %631 = vmatprep.subr.mxu0 0.0
    %632 = vmatpush2.xpose.msra.mxu0 0.0
    %633 = vmatprep.subr.mxu0 0.0
    %634 = vmatpush2.xpose.msra.mxu0 0.0
    %635 = vmatprep.subr.mxu0 0.0
    %636 = vmatpush2.xpose.msra.mxu0 0.0
    %637 = vmatprep.subr.mxu0 0.0
    %638 = vmatpush2.xpose.msra.mxu0 0.0
    %639 = vmatprep.subr.mxu0 0.0
    %640 = vmatpush2.xpose.msra.mxu0 0.0
    %641 = vmatprep.subr.mxu0 0.0
    %642 = vmatpush2.xpose.msra.mxu0 0.0
    %643 = vmatprep.subr.mxu0 0.0
    %644 = vmatpush2.xpose.msra.mxu0 0.0
    %645 = vmatprep.subr.mxu0 0.0
    %646 = vmatpush2.xpose.msra.mxu0 0.0
    %647 = vmatprep.subr.mxu0 0.0
    %648 = vmatpush2.xpose.msra.mxu0 0.0
    %649 = vmatprep.subr.mxu0 0.0
    %650 = vmatpush2.xpose.msra.mxu0 0.0
    %651 = vmatprep.subr.mxu0 0.0
    %652 = vmatpush2.xpose.msra.mxu0 0.0
    %653 = vmatprep.subr.mxu0 0.0
    %654 = vmatpush2.xpose.msra.mxu0 0.0
    %655 = vmatprep.subr.mxu0 0.0
    %656 = vmatpush2.xpose.msra.mxu0 0.0
    %657 = vmatprep.subr.mxu0 0.0
    %658 = vmatpush2.xpose.msra.mxu0 0.0
    %659 = vmatprep.subr.mxu0 0.0
    %660 = vmatpush2.xpose.msra.mxu0 0.0
    %661 = vmatprep.subr.mxu0 0.0
    %662 = vmatpush2.xpose.msra.mxu0 0.0
    %663 = vmatprep.mubr.f32.mxu0 0.0
    %664 = vmatmul.mubr.f32.gmra.mxu0 %v595
    %v665 = vpop.f32.mrf.mxu0
    %v666 = vadd.f32 0.0, %v665
    %v667 = vpop.f32.mrf.mxu0
    %668 = vdwg.mxu0
    %v669 = vsel %vm187, %v588, -inf
    %670 = vmax.xlane.f32.xlu0 %v669
    %v671 = vpop.xlane.xlu0 %670
    %v672 = vsel %vm187, %v666, -inf
    %673 = vmax.xlane.f32.xlu0 %v672
    %v674 = vpop.xlane.xlu0 %673
    %v675 = vsub.f32 %v588, %v671
    %v676 = vsub.f32 %v666, %v674
    %v677 = vmul.f32 %v675, 1.442695
    %v678 = vpow.pop %v677
    %v679 = vmul.f32 %v676, 1.442695
    %v680 = vpow.pop %v679
    %v681 = vsel %vm187, %v678, 0.0
    %682 = vadd.xlane.f32.xlu0 %v681
    %v683 = vpop.xlane.xlu0 %682
    %v684 = vsel %vm187, %v680, 0.0
    %685 = vadd.xlane.f32.xlu0 %v684
    %v686 = vpop.xlane.xlu0 %685
    %v687 = vrcp.pop %v683
    %v688 = vmul.f32 %v678, %v687
    %v689 = vrcp.pop %v686
    %v690 = vmul.f32 %v680, %v689
    %691 = vrot.lane.b32.xlu0 %v172, 56
    %v692 = vpop.permute.xlu0 %691
    %v695 = vsel %vm187, %v688, 0
    %697 = vmatprep.subr.mxu0 0.0
    %698 = vmatpush1.msra.mxu0 0.0
    %699 = vmatprep.subr.mxu0 0.0
    %700 = vmatpush1.msra.mxu0 0.0
    %701 = vmatprep.subr.mxu0 0.0
    %702 = vmatpush1.msra.mxu0 0.0
    %703 = vmatprep.subr.mxu0 0.0
    %704 = vmatpush1.msra.mxu0 0.0
    %705 = vmatprep.subr.mxu0 0.0
    %706 = vmatpush1.msra.mxu0 0.0
    %707 = vmatprep.subr.mxu0 0.0
    %708 = vmatpush1.msra.mxu0 0.0
    %709 = vmatprep.subr.mxu0 0.0
    %710 = vmatpush1.msra.mxu0 0.0
    %711 = vmatprep.subr.mxu0 0.0
    %712 = vmatpush1.msra.mxu0 0.0
    %713 = vmatprep.subr.mxu0 0.0
    %714 = vmatpush1.msra.mxu0 0.0
    %715 = vmatprep.subr.mxu0 0.0
    %716 = vmatpush1.msra.mxu0 0.0
    %717 = vmatprep.subr.mxu0 0.0
    %718 = vmatpush1.msra.mxu0 0.0
    %719 = vmatprep.subr.mxu0 0.0
    %720 = vmatpush1.msra.mxu0 0.0
    %721 = vmatprep.subr.mxu0 0.0
    %722 = vmatpush1.msra.mxu0 0.0
    %723 = vmatprep.subr.mxu0 0.0
    %724 = vmatpush1.msra.mxu0 0.0
    %725 = vmatprep.subr.mxu0 0.0
    %726 = vmatpush1.msra.mxu0 0.0
    %727 = vmatprep.subr.mxu0 0.0
    %728 = vmatpush1.msra.mxu0 %v692
    %729 = vmatprep.subr.mxu0 0.0
    %730 = vmatpush2.msra.mxu0 0.0
    %731 = vmatprep.subr.mxu0 0.0
    %732 = vmatpush2.msra.mxu0 0.0
    %733 = vmatprep.subr.mxu0 0.0
    %734 = vmatpush2.msra.mxu0 0.0
    %735 = vmatprep.subr.mxu0 0.0
    %736 = vmatpush2.msra.mxu0 0.0
    %737 = vmatprep.subr.mxu0 0.0
    %738 = vmatpush2.msra.mxu0 0.0
    %739 = vmatprep.subr.mxu0 0.0
    %740 = vmatpush2.msra.mxu0 0.0
    %741 = vmatprep.subr.mxu0 0.0
    %742 = vmatpush2.msra.mxu0 0.0
    %743 = vmatprep.subr.mxu0 0.0
    %744 = vmatpush2.msra.mxu0 0.0
    %745 = vmatprep.subr.mxu0 0.0
    %746 = vmatpush2.msra.mxu0 0.0
    %747 = vmatprep.subr.mxu0 0.0
    %748 = vmatpush2.msra.mxu0 0.0
    %749 = vmatprep.subr.mxu0 0.0
    %750 = vmatpush2.msra.mxu0 0.0
    %751 = vmatprep.subr.mxu0 0.0
    %752 = vmatpush2.msra.mxu0 0.0
    %753 = vmatprep.subr.mxu0 0.0
    %754 = vmatpush2.msra.mxu0 0.0
    %755 = vmatprep.subr.mxu0 0.0
    %756 = vmatpush2.msra.mxu0 0.0
    %757 = vmatprep.subr.mxu0 0.0
    %758 = vmatpush2.msra.mxu0 0.0
    %759 = vmatprep.subr.mxu0 0.0
    %760 = vmatpush2.msra.mxu0 0.0
    %761 = vmatprep.mubr.f32.mxu0 0.0
    %762 = vmatmul.mubr.f32.gmra.mxu0 %v695
    %v763 = vpop.f32.mrf.mxu0
    %v764 = vadd.f32 0.0, %v763
    %v765 = vpop.f32.mrf.mxu0
    %766 = vdwg.mxu0
    %767 = vrot.lane.b32.xlu0 %v177, 56
    %v768 = vpop.permute.xlu0 %767
    %v771 = vsel %vm187, %v690, 0
    %773 = vmatprep.subr.mxu0 0.0
    %774 = vmatpush1.msra.mxu0 0.0
    %775 = vmatprep.subr.mxu0 0.0
    %776 = vmatpush1.msra.mxu0 0.0
    %777 = vmatprep.subr.mxu0 0.0
    %778 = vmatpush1.msra.mxu0 0.0
    %779 = vmatprep.subr.mxu0 0.0
    %780 = vmatpush1.msra.mxu0 0.0
    %781 = vmatprep.subr.mxu0 0.0
    %782 = vmatpush1.msra.mxu0 0.0
    %783 = vmatprep.subr.mxu0 0.0
    %784 = vmatpush1.msra.mxu0 0.0
    %785 = vmatprep.subr.mxu0 0.0
    %786 = vmatpush1.msra.mxu0 0.0
    %787 = vmatprep.subr.mxu0 0.0
    %788 = vmatpush1.msra.mxu0 0.0
    %789 = vmatprep.subr.mxu0 0.0
    %790 = vmatpush1.msra.mxu0 0.0
    %791 = vmatprep.subr.mxu0 0.0
    %792 = vmatpush1.msra.mxu0 0.0
    %793 = vmatprep.subr.mxu0 0.0
    %794 = vmatpush1.msra.mxu0 0.0
    %795 = vmatprep.subr.mxu0 0.0
    %796 = vmatpush1.msra.mxu0 0.0
    %797 = vmatprep.subr.mxu0 0.0
    %798 = vmatpush1.msra.mxu0 0.0
    %799 = vmatprep.subr.mxu0 0.0
    %800 = vmatpush1.msra.mxu0 0.0
    %801 = vmatprep.subr.mxu0 0.0
    %802 = vmatpush1.msra.mxu0 0.0
    %803 = vmatprep.subr.mxu0 0.0
    %804 = vmatpush1.msra.mxu0 %v768
    %805 = vmatprep.subr.mxu0 0.0
    %806 = vmatpush2.msra.mxu0 0.0
    %807 = vmatprep.subr.mxu0 0.0
    %808 = vmatpush2.msra.mxu0 0.0
    %809 = vmatprep.subr.mxu0 0.0
    %810 = vmatpush2.msra.mxu0 0.0
    %811 = vmatprep.subr.mxu0 0.0
    %812 = vmatpush2.msra.mxu0 0.0
    %813 = vmatprep.subr.mxu0 0.0
    %814 = vmatpush2.msra.mxu0 0.0
    %815 = vmatprep.subr.mxu0 0.0
    %816 = vmatpush2.msra.mxu0 0.0
    %817 = vmatprep.subr.mxu0 0.0
    %818 = vmatpush2.msra.mxu0 0.0
    %819 = vmatprep.subr.mxu0 0.0
    %820 = vmatpush2.msra.mxu0 0.0
    %821 = vmatprep.subr.mxu0 0.0
    %822 = vmatpush2.msra.mxu0 0.0
    %823 = vmatprep.subr.mxu0 0.0
    %824 = vmatpush2.msra.mxu0 0.0
    %825 = vmatprep.subr.mxu0 0.0
    %826 = vmatpush2.msra.mxu0 0.0
    %827 = vmatprep.subr.mxu0 0.0
    %828 = vmatpush2.msra.mxu0 0.0
    %829 = vmatprep.subr.mxu0 0.0
    %830 = vmatpush2.msra.mxu0 0.0
    %831 = vmatprep.subr.mxu0 0.0
    %832 = vmatpush2.msra.mxu0 0.0
    %833 = vmatprep.subr.mxu0 0.0
    %834 = vmatpush2.msra.mxu0 0.0
    %835 = vmatprep.subr.mxu0 0.0
    %836 = vmatpush2.msra.mxu0 0.0
    %837 = vmatprep.mubr.f32.mxu0 0.0
    %838 = vmatmul.mubr.f32.gmra.mxu0 %v771
    %v839 = vpop.f32.mrf.mxu0
    %v840 = vadd.f32 0.0, %v839
    %v841 = vpop.f32.mrf.mxu0
    %842 = vdwg.mxu0
    %v844 = vsel %vm187, %v764, 0
    %v847 = vsel %vm187, %v840, 0
    %849 = vmatprep.subr.mxu0 0.0
    %850 = vmatpush1.msra.mxu0 0.0
    %851 = vmatprep.subr.mxu0 0.0
    %852 = vmatpush1.msra.mxu0 0.0
    %853 = vmatprep.subr.mxu0 0.0
    %854 = vmatpush1.msra.mxu0 0.0
    %855 = vmatprep.subr.mxu0 0.0
    %856 = vmatpush1.msra.mxu0 0.0
    %857 = vmatprep.subr.mxu0 0.0
    %858 = vmatpush1.msra.mxu0 0.0
    %859 = vmatprep.subr.mxu0 0.0
    %860 = vmatpush1.msra.mxu0 0.0
    %861 = vmatprep.subr.mxu0 0.0
    %862 = vmatpush1.msra.mxu0 0.0
    %863 = vmatprep.subr.mxu0 0.0
    %864 = vmatpush1.msra.mxu0 0.0
    %865 = vmatprep.subr.mxu0 0.0
    %866 = vmatpush1.msra.mxu0 0.0
    %867 = vmatprep.subr.mxu0 0.0
    %868 = vmatpush1.msra.mxu0 0.0
    %869 = vmatprep.subr.mxu0 0.0
    %870 = vmatpush1.msra.mxu0 0.0
    %871 = vmatprep.subr.mxu0 0.0
    %872 = vmatpush1.msra.mxu0 0.0
    %873 = vmatprep.subr.mxu0 0.0
    %874 = vmatpush1.msra.mxu0 0.0
    %875 = vmatprep.subr.mxu0 0.0
    %876 = vmatpush1.msra.mxu0 0.0
    %877 = vmatprep.subr.mxu0 0.0
    %878 = vmatpush1.msra.mxu0 0.0
    %879 = vmatprep.subr.mxu0 0.0
    %880 = vmatpush1.msra.mxu0 %v181
    %881 = vmatprep.subr.mxu0 0.0
    %882 = vmatpush2.msra.mxu0 0.0
    %883 = vmatprep.subr.mxu0 0.0
    %884 = vmatpush2.msra.mxu0 0.0
    %885 = vmatprep.subr.mxu0 0.0
    %886 = vmatpush2.msra.mxu0 0.0
    %887 = vmatprep.subr.mxu0 0.0
    %888 = vmatpush2.msra.mxu0 0.0
    %889 = vmatprep.subr.mxu0 0.0
    %890 = vmatpush2.msra.mxu0 0.0
    %891 = vmatprep.subr.mxu0 0.0
    %892 = vmatpush2.msra.mxu0 0.0
    %893 = vmatprep.subr.mxu0 0.0
    %894 = vmatpush2.msra.mxu0 0.0
    %895 = vmatprep.subr.mxu0 0.0
    %896 = vmatpush2.msra.mxu0 0.0
    %897 = vmatprep.subr.mxu0 0.0
    %898 = vmatpush2.msra.mxu0 0.0
    %899 = vmatprep.subr.mxu0 0.0
    %900 = vmatpush2.msra.mxu0 0.0
    %901 = vmatprep.subr.mxu0 0.0
    %902 = vmatpush2.msra.mxu0 0.0
    %903 = vmatprep.subr.mxu0 0.0
    %904 = vmatpush2.msra.mxu0 0.0
    %905 = vmatprep.subr.mxu0 0.0
    %906 = vmatpush2.msra.mxu0 0.0
    %907 = vmatprep.subr.mxu0 0.0
    %908 = vmatpush2.msra.mxu0 0.0
    %909 = vmatprep.subr.mxu0 0.0
    %910 = vmatpush2.msra.mxu0 0.0
    %911 = vmatprep.subr.mxu0 0.0
    %912 = vmatpush2.msra.mxu0 0.0
    %913 = vmatprep.mubr.f32.mxu0 0.0
    %914 = vmatmul.mubr.f32.gmra.mxu0 %v844
    %v915 = vpop.f32.mrf.mxu0
    %v916 = vadd.f32 0.0, %v915
    %v917 = vpop.f32.mrf.mxu0
    %918 = vmatprep.mubr.f32.mxu0 0.0
    %919 = vmatmul.mubr.f32.gmra.mxu0 %v847
    %v920 = vpop.f32.mrf.mxu0
    %v921 = vadd.f32 0.0, %v920
    %v922 = vpop.f32.mrf.mxu0
    %923 = vdwg.mxu0
    %v925 = vsel %vm187, %v434, 0
    %v928 = vsel %vm187, %v510, 0
    %930 = vmatprep.subr.mxu0 0.0
    %931 = vmatpush1.msra.mxu0 0.0
    %932 = vmatprep.subr.mxu0 0.0
    %933 = vmatpush1.msra.mxu0 0.0
    %934 = vmatprep.subr.mxu0 0.0
    %935 = vmatpush1.msra.mxu0 0.0
    %936 = vmatprep.subr.mxu0 0.0
    %937 = vmatpush1.msra.mxu0 0.0
    %938 = vmatprep.subr.mxu0 0.0
    %939 = vmatpush1.msra.mxu0 0.0
    %940 = vmatprep.subr.mxu0 0.0
    %941 = vmatpush1.msra.mxu0 0.0
    %942 = vmatprep.subr.mxu0 0.0
    %943 = vmatpush1.msra.mxu0 0.0
    %944 = vmatprep.subr.mxu0 0.0
    %945 = vmatpush1.msra.mxu0 0.0
    %946 = vmatprep.subr.mxu0 0.0
    %947 = vmatpush1.msra.mxu0 0.0
    %948 = vmatprep.subr.mxu0 0.0
    %949 = vmatpush1.msra.mxu0 0.0
    %950 = vmatprep.subr.mxu0 0.0
    %951 = vmatpush1.msra.mxu0 0.0
    %952 = vmatprep.subr.mxu0 0.0
    %953 = vmatpush1.msra.mxu0 0.0
    %954 = vmatprep.subr.mxu0 0.0
    %955 = vmatpush1.msra.mxu0 0.0
    %956 = vmatprep.subr.mxu0 0.0
    %957 = vmatpush1.msra.mxu0 0.0
    %958 = vmatprep.subr.mxu0 0.0
    %959 = vmatpush1.msra.mxu0 0.0
    %960 = vmatprep.subr.mxu0 0.0
    %961 = vmatpush1.msra.mxu0 %v180
    %962 = vmatprep.subr.mxu0 0.0
    %963 = vmatpush2.msra.mxu0 0.0
    %964 = vmatprep.subr.mxu0 0.0
    %965 = vmatpush2.msra.mxu0 0.0
    %966 = vmatprep.subr.mxu0 0.0
    %967 = vmatpush2.msra.mxu0 0.0
    %968 = vmatprep.subr.mxu0 0.0
    %969 = vmatpush2.msra.mxu0 0.0
    %970 = vmatprep.subr.mxu0 0.0
    %971 = vmatpush2.msra.mxu0 0.0
    %972 = vmatprep.subr.mxu0 0.0
    %973 = vmatpush2.msra.mxu0 0.0
    %974 = vmatprep.subr.mxu0 0.0
    %975 = vmatpush2.msra.mxu0 0.0
    %976 = vmatprep.subr.mxu0 0.0
    %977 = vmatpush2.msra.mxu0 0.0
    %978 = vmatprep.subr.mxu0 0.0
    %979 = vmatpush2.msra.mxu0 0.0
    %980 = vmatprep.subr.mxu0 0.0
    %981 = vmatpush2.msra.mxu0 0.0
    %982 = vmatprep.subr.mxu0 0.0
    %983 = vmatpush2.msra.mxu0 0.0
    %984 = vmatprep.subr.mxu0 0.0
    %985 = vmatpush2.msra.mxu0 0.0
    %986 = vmatprep.subr.mxu0 0.0
    %987 = vmatpush2.msra.mxu0 0.0
    %988 = vmatprep.subr.mxu0 0.0
    %989 = vmatpush2.msra.mxu0 0.0
    %990 = vmatprep.subr.mxu0 0.0
    %991 = vmatpush2.msra.mxu0 0.0
    %992 = vmatprep.subr.mxu0 0.0
    %993 = vmatpush2.msra.mxu0 0.0
    %994 = vmatprep.mubr.f32.mxu0 0.0
    %995 = vmatmul.mubr.f32.gmra.mxu0 %v925
    %v996 = vpop.f32.mrf.mxu0
    %v997 = vadd.f32 %v916, %v996
    %v998 = vpop.f32.mrf.mxu0
    %999 = vmatprep.mubr.f32.mxu0 0.0
    %1000 = vmatmul.mubr.f32.gmra.mxu0 %v928
    %v1001 = vpop.f32.mrf.mxu0
    %v1002 = vadd.f32 %v921, %v1001
    %v1003 = vpop.f32.mrf.mxu0
    %1004 = vdwg.mxu0
    %1005 = vrot.lane.b32.xlu0 %v172, 112
    %v1006 = vpop.permute.xlu0 %1005
    %1007 = vrot.lane.b32.xlu0 %v172, 80
    %v1008 = vpop.permute.xlu0 %1007
    %v1009 = vsel %vm187, %v1006, 0
    %v1011 = vsel %vm187, %v1008, 0
    %1013 = vmatprep.subr.mxu0 0.0
    %1014 = vmatpush1.xpose.msra.mxu0 0.0
    %1015 = vmatprep.subr.mxu0 0.0
    %1016 = vmatpush1.xpose.msra.mxu0 0.0
    %1017 = vmatprep.subr.mxu0 0.0
    %1018 = vmatpush1.xpose.msra.mxu0 0.0
    %1019 = vmatprep.subr.mxu0 0.0
    %1020 = vmatpush1.xpose.msra.mxu0 0.0
    %1021 = vmatprep.subr.mxu0 0.0
    %1022 = vmatpush1.xpose.msra.mxu0 0.0
    %1023 = vmatprep.subr.mxu0 0.0
    %1024 = vmatpush1.xpose.msra.mxu0 0.0
    %1025 = vmatprep.subr.mxu0 0.0
    %1026 = vmatpush1.xpose.msra.mxu0 0.0
    %1027 = vmatprep.subr.mxu0 0.0
    %1028 = vmatpush1.xpose.msra.mxu0 0.0
    %1029 = vmatprep.subr.mxu0 0.0
    %1030 = vmatpush1.xpose.msra.mxu0 0.0
    %1031 = vmatprep.subr.mxu0 0.0
    %1032 = vmatpush1.xpose.msra.mxu0 0.0
    %1033 = vmatprep.subr.mxu0 0.0
    %1034 = vmatpush1.xpose.msra.mxu0 0.0
    %1035 = vmatprep.subr.mxu0 0.0
    %1036 = vmatpush1.xpose.msra.mxu0 0.0
    %1037 = vmatprep.subr.mxu0 0.0
    %1038 = vmatpush1.xpose.msra.mxu0 0.0
    %1039 = vmatprep.subr.mxu0 0.0
    %1040 = vmatpush1.xpose.msra.mxu0 0.0
    %1041 = vmatprep.subr.mxu0 0.0
    %1042 = vmatpush1.xpose.msra.mxu0 0.0
    %1043 = vmatprep.subr.mxu0 0.0
    %1044 = vmatpush1.xpose.msra.mxu0 %v1011
    %1045 = vmatprep.subr.mxu0 0.0
    %1046 = vmatpush2.xpose.msra.mxu0 0.0
    %1047 = vmatprep.subr.mxu0 0.0
    %1048 = vmatpush2.xpose.msra.mxu0 0.0
    %1049 = vmatprep.subr.mxu0 0.0
    %1050 = vmatpush2.xpose.msra.mxu0 0.0
    %1051 = vmatprep.subr.mxu0 0.0
    %1052 = vmatpush2.xpose.msra.mxu0 0.0
    %1053 = vmatprep.subr.mxu0 0.0
    %1054 = vmatpush2.xpose.msra.mxu0 0.0
    %1055 = vmatprep.subr.mxu0 0.0
    %1056 = vmatpush2.xpose.msra.mxu0 0.0
    %1057 = vmatprep.subr.mxu0 0.0
    %1058 = vmatpush2.xpose.msra.mxu0 0.0
    %1059 = vmatprep.subr.mxu0 0.0
    %1060 = vmatpush2.xpose.msra.mxu0 0.0
    %1061 = vmatprep.subr.mxu0 0.0
    %1062 = vmatpush2.xpose.msra.mxu0 0.0
    %1063 = vmatprep.subr.mxu0 0.0
    %1064 = vmatpush2.xpose.msra.mxu0 0.0
    %1065 = vmatprep.subr.mxu0 0.0
    %1066 = vmatpush2.xpose.msra.mxu0 0.0
    %1067 = vmatprep.subr.mxu0 0.0
    %1068 = vmatpush2.xpose.msra.mxu0 0.0
    %1069 = vmatprep.subr.mxu0 0.0
    %1070 = vmatpush2.xpose.msra.mxu0 0.0
    %1071 = vmatprep.subr.mxu0 0.0
    %1072 = vmatpush2.xpose.msra.mxu0 0.0
    %1073 = vmatprep.subr.mxu0 0.0
    %1074 = vmatpush2.xpose.msra.mxu0 0.0
    %1075 = vmatprep.subr.mxu0 0.0
    %1076 = vmatpush2.xpose.msra.mxu0 0.0
    %1077 = vmatprep.mubr.f32.mxu0 0.0
    %1078 = vmatmul.mubr.f32.gmra.mxu0 %v1009
    %v1079 = vpop.f32.mrf.mxu0
    %v1080 = vadd.f32 0.0, %v1079
    %v1081 = vpop.f32.mrf.mxu0
    %1082 = vdwg.mxu0
    %1083 = vrot.lane.b32.xlu0 %v177, 112
    %v1084 = vpop.permute.xlu0 %1083
    %1085 = vrot.lane.b32.xlu0 %v177, 80
    %v1086 = vpop.permute.xlu0 %1085
    %v1087 = vsel %vm187, %v1084, 0
    %v1089 = vsel %vm187, %v1086, 0
    %1091 = vmatprep.subr.mxu0 0.0
    %1092 = vmatpush1.xpose.msra.mxu0 0.0
    %1093 = vmatprep.subr.mxu0 0.0
    %1094 = vmatpush1.xpose.msra.mxu0 0.0
    %1095 = vmatprep.subr.mxu0 0.0
    %1096 = vmatpush1.xpose.msra.mxu0 0.0
    %1097 = vmatprep.subr.mxu0 0.0
    %1098 = vmatpush1.xpose.msra.mxu0 0.0
    %1099 = vmatprep.subr.mxu0 0.0
    %1100 = vmatpush1.xpose.msra.mxu0 0.0
    %1101 = vmatprep.subr.mxu0 0.0
    %1102 = vmatpush1.xpose.msra.mxu0 0.0
    %1103 = vmatprep.subr.mxu0 0.0
    %1104 = vmatpush1.xpose.msra.mxu0 0.0
    %1105 = vmatprep.subr.mxu0 0.0
    %1106 = vmatpush1.xpose.msra.mxu0 0.0
    %1107 = vmatprep.subr.mxu0 0.0
    %1108 = vmatpush1.xpose.msra.mxu0 0.0
    %1109 = vmatprep.subr.mxu0 0.0
    %1110 = vmatpush1.xpose.msra.mxu0 0.0
    %1111 = vmatprep.subr.mxu0 0.0
    %1112 = vmatpush1.xpose.msra.mxu0 0.0
    %1113 = vmatprep.subr.mxu0 0.0
    %1114 = vmatpush1.xpose.msra.mxu0 0.0
    %1115 = vmatprep.subr.mxu0 0.0
    %1116 = vmatpush1.xpose.msra.mxu0 0.0
    %1117 = vmatprep.subr.mxu0 0.0
    %1118 = vmatpush1.xpose.msra.mxu0 0.0
    %1119 = vmatprep.subr.mxu0 0.0
    %1120 = vmatpush1.xpose.msra.mxu0 0.0
    %1121 = vmatprep.subr.mxu0 0.0
    %1122 = vmatpush1.xpose.msra.mxu0 %v1089
    %1123 = vmatprep.subr.mxu0 0.0
    %1124 = vmatpush2.xpose.msra.mxu0 0.0
    %1125 = vmatprep.subr.mxu0 0.0
    %1126 = vmatpush2.xpose.msra.mxu0 0.0
    %1127 = vmatprep.subr.mxu0 0.0
    %1128 = vmatpush2.xpose.msra.mxu0 0.0
    %1129 = vmatprep.subr.mxu0 0.0
    %1130 = vmatpush2.xpose.msra.mxu0 0.0
    %1131 = vmatprep.subr.mxu0 0.0
    %1132 = vmatpush2.xpose.msra.mxu0 0.0
    %1133 = vmatprep.subr.mxu0 0.0
    %1134 = vmatpush2.xpose.msra.mxu0 0.0
    %1135 = vmatprep.subr.mxu0 0.0
    %1136 = vmatpush2.xpose.msra.mxu0 0.0
    %1137 = vmatprep.subr.mxu0 0.0
    %1138 = vmatpush2.xpose.msra.mxu0 0.0
    %1139 = vmatprep.subr.mxu0 0.0
    %1140 = vmatpush2.xpose.msra.mxu0 0.0
    %1141 = vmatprep.subr.mxu0 0.0
    %1142 = vmatpush2.xpose.msra.mxu0 0.0
    %1143 = vmatprep.subr.mxu0 0.0
    %1144 = vmatpush2.xpose.msra.mxu0 0.0
    %1145 = vmatprep.subr.mxu0 0.0
    %1146 = vmatpush2.xpose.msra.mxu0 0.0
    %1147 = vmatprep.subr.mxu0 0.0
    %1148 = vmatpush2.xpose.msra.mxu0 0.0
    %1149 = vmatprep.subr.mxu0 0.0
    %1150 = vmatpush2.xpose.msra.mxu0 0.0
    %1151 = vmatprep.subr.mxu0 0.0
    %1152 = vmatpush2.xpose.msra.mxu0 0.0
    %1153 = vmatprep.subr.mxu0 0.0
    %1154 = vmatpush2.xpose.msra.mxu0 0.0
    %1155 = vmatprep.mubr.f32.mxu0 0.0
    %1156 = vmatmul.mubr.f32.gmra.mxu0 %v1087
    %v1157 = vpop.f32.mrf.mxu0
    %v1158 = vadd.f32 0.0, %v1157
    %v1159 = vpop.f32.mrf.mxu0
    %1160 = vdwg.mxu0
    %v1161 = vsel %vm187, %v1080, -inf
    %1162 = vmax.xlane.f32.xlu0 %v1161
    %v1163 = vpop.xlane.xlu0 %1162
    %v1164 = vsel %vm187, %v1158, -inf
    %1165 = vmax.xlane.f32.xlu0 %v1164
    %v1166 = vpop.xlane.xlu0 %1165
    %v1167 = vsub.f32 %v1080, %v1163
    %v1168 = vsub.f32 %v1158, %v1166
    %v1169 = vmul.f32 %v1167, 1.442695
    %v1170 = vpow.pop %v1169
    %v1171 = vmul.f32 %v1168, 1.442695
    %v1172 = vpow.pop %v1171
    %v1173 = vsel %vm187, %v1170, 0.0
    %1174 = vadd.xlane.f32.xlu0 %v1173
    %v1175 = vpop.xlane.xlu0 %1174
    %v1176 = vsel %vm187, %v1172, 0.0
    %1177 = vadd.xlane.f32.xlu0 %v1176
    %v1178 = vpop.xlane.xlu0 %1177
    %v1179 = vrcp.pop %v1175
    %v1180 = vmul.f32 %v1170, %v1179
    %v1181 = vrcp.pop %v1178
    %v1182 = vmul.f32 %v1172, %v1181
    %1183 = vrot.lane.b32.xlu0 %v172, 48
    %v1184 = vpop.permute.xlu0 %1183
    %v1187 = vsel %vm187, %v1180, 0
    %1189 = vmatprep.subr.mxu0 0.0
    %1190 = vmatpush1.msra.mxu0 0.0
    %1191 = vmatprep.subr.mxu0 0.0
    %1192 = vmatpush1.msra.mxu0 0.0
    %1193 = vmatprep.subr.mxu0 0.0
    %1194 = vmatpush1.msra.mxu0 0.0
    %1195 = vmatprep.subr.mxu0 0.0
    %1196 = vmatpush1.msra.mxu0 0.0
    %1197 = vmatprep.subr.mxu0 0.0
    %1198 = vmatpush1.msra.mxu0 0.0
    %1199 = vmatprep.subr.mxu0 0.0
    %1200 = vmatpush1.msra.mxu0 0.0
    %1201 = vmatprep.subr.mxu0 0.0
    %1202 = vmatpush1.msra.mxu0 0.0
    %1203 = vmatprep.subr.mxu0 0.0
    %1204 = vmatpush1.msra.mxu0 0.0
    %1205 = vmatprep.subr.mxu0 0.0
    %1206 = vmatpush1.msra.mxu0 0.0
    %1207 = vmatprep.subr.mxu0 0.0
    %1208 = vmatpush1.msra.mxu0 0.0
    %1209 = vmatprep.subr.mxu0 0.0
    %1210 = vmatpush1.msra.mxu0 0.0
    %1211 = vmatprep.subr.mxu0 0.0
    %1212 = vmatpush1.msra.mxu0 0.0
    %1213 = vmatprep.subr.mxu0 0.0
    %1214 = vmatpush1.msra.mxu0 0.0
    %1215 = vmatprep.subr.mxu0 0.0
    %1216 = vmatpush1.msra.mxu0 0.0
    %1217 = vmatprep.subr.mxu0 0.0
    %1218 = vmatpush1.msra.mxu0 0.0
    %1219 = vmatprep.subr.mxu0 0.0
    %1220 = vmatpush1.msra.mxu0 %v1184
    %1221 = vmatprep.subr.mxu0 0.0
    %1222 = vmatpush2.msra.mxu0 0.0
    %1223 = vmatprep.subr.mxu0 0.0
    %1224 = vmatpush2.msra.mxu0 0.0
    %1225 = vmatprep.subr.mxu0 0.0
    %1226 = vmatpush2.msra.mxu0 0.0
    %1227 = vmatprep.subr.mxu0 0.0
    %1228 = vmatpush2.msra.mxu0 0.0
    %1229 = vmatprep.subr.mxu0 0.0
    %1230 = vmatpush2.msra.mxu0 0.0
    %1231 = vmatprep.subr.mxu0 0.0
    %1232 = vmatpush2.msra.mxu0 0.0
    %1233 = vmatprep.subr.mxu0 0.0
    %1234 = vmatpush2.msra.mxu0 0.0
    %1235 = vmatprep.subr.mxu0 0.0
    %1236 = vmatpush2.msra.mxu0 0.0
    %1237 = vmatprep.subr.mxu0 0.0
    %1238 = vmatpush2.msra.mxu0 0.0
    %1239 = vmatprep.subr.mxu0 0.0
    %1240 = vmatpush2.msra.mxu0 0.0
    %1241 = vmatprep.subr.mxu0 0.0
    %1242 = vmatpush2.msra.mxu0 0.0
    %1243 = vmatprep.subr.mxu0 0.0
    %1244 = vmatpush2.msra.mxu0 0.0
    %1245 = vmatprep.subr.mxu0 0.0
    %1246 = vmatpush2.msra.mxu0 0.0
    %1247 = vmatprep.subr.mxu0 0.0
    %1248 = vmatpush2.msra.mxu0 0.0
    %1249 = vmatprep.subr.mxu0 0.0
    %1250 = vmatpush2.msra.mxu0 0.0
    %1251 = vmatprep.subr.mxu0 0.0
    %1252 = vmatpush2.msra.mxu0 0.0
    %1253 = vmatprep.mubr.f32.mxu0 0.0
    %1254 = vmatmul.mubr.f32.gmra.mxu0 %v1187
    %v1255 = vpop.f32.mrf.mxu0
    %v1256 = vadd.f32 0.0, %v1255
    %v1257 = vpop.f32.mrf.mxu0
    %1258 = vdwg.mxu0
    %1259 = vrot.lane.b32.xlu0 %v177, 48
    %v1260 = vpop.permute.xlu0 %1259
    %v1263 = vsel %vm187, %v1182, 0
    %1265 = vmatprep.subr.mxu0 0.0
    %1266 = vmatpush1.msra.mxu0 0.0
    %1267 = vmatprep.subr.mxu0 0.0
    %1268 = vmatpush1.msra.mxu0 0.0
    %1269 = vmatprep.subr.mxu0 0.0
    %1270 = vmatpush1.msra.mxu0 0.0
    %1271 = vmatprep.subr.mxu0 0.0
    %1272 = vmatpush1.msra.mxu0 0.0
    %1273 = vmatprep.subr.mxu0 0.0
    %1274 = vmatpush1.msra.mxu0 0.0
    %1275 = vmatprep.subr.mxu0 0.0
    %1276 = vmatpush1.msra.mxu0 0.0
    %1277 = vmatprep.subr.mxu0 0.0
    %1278 = vmatpush1.msra.mxu0 0.0
    %1279 = vmatprep.subr.mxu0 0.0
    %1280 = vmatpush1.msra.mxu0 0.0
    %1281 = vmatprep.subr.mxu0 0.0
    %1282 = vmatpush1.msra.mxu0 0.0
    %1283 = vmatprep.subr.mxu0 0.0
    %1284 = vmatpush1.msra.mxu0 0.0
    %1285 = vmatprep.subr.mxu0 0.0
    %1286 = vmatpush1.msra.mxu0 0.0
    %1287 = vmatprep.subr.mxu0 0.0
    %1288 = vmatpush1.msra.mxu0 0.0
    %1289 = vmatprep.subr.mxu0 0.0
    %1290 = vmatpush1.msra.mxu0 0.0
    %1291 = vmatprep.subr.mxu0 0.0
    %1292 = vmatpush1.msra.mxu0 0.0
    %1293 = vmatprep.subr.mxu0 0.0
    %1294 = vmatpush1.msra.mxu0 0.0
    %1295 = vmatprep.subr.mxu0 0.0
    %1296 = vmatpush1.msra.mxu0 %v1260
    %1297 = vmatprep.subr.mxu0 0.0
    %1298 = vmatpush2.msra.mxu0 0.0
    %1299 = vmatprep.subr.mxu0 0.0
    %1300 = vmatpush2.msra.mxu0 0.0
    %1301 = vmatprep.subr.mxu0 0.0
    %1302 = vmatpush2.msra.mxu0 0.0
    %1303 = vmatprep.subr.mxu0 0.0
    %1304 = vmatpush2.msra.mxu0 0.0
    %1305 = vmatprep.subr.mxu0 0.0
    %1306 = vmatpush2.msra.mxu0 0.0
    %1307 = vmatprep.subr.mxu0 0.0
    %1308 = vmatpush2.msra.mxu0 0.0
    %1309 = vmatprep.subr.mxu0 0.0
    %1310 = vmatpush2.msra.mxu0 0.0
    %1311 = vmatprep.subr.mxu0 0.0
    %1312 = vmatpush2.msra.mxu0 0.0
    %1313 = vmatprep.subr.mxu0 0.0
    %1314 = vmatpush2.msra.mxu0 0.0
    %1315 = vmatprep.subr.mxu0 0.0
    %1316 = vmatpush2.msra.mxu0 0.0
    %1317 = vmatprep.subr.mxu0 0.0
    %1318 = vmatpush2.msra.mxu0 0.0
    %1319 = vmatprep.subr.mxu0 0.0
    %1320 = vmatpush2.msra.mxu0 0.0
    %1321 = vmatprep.subr.mxu0 0.0
    %1322 = vmatpush2.msra.mxu0 0.0
    %1323 = vmatprep.subr.mxu0 0.0
    %1324 = vmatpush2.msra.mxu0 0.0
    %1325 = vmatprep.subr.mxu0 0.0
    %1326 = vmatpush2.msra.mxu0 0.0
    %1327 = vmatprep.subr.mxu0 0.0
    %1328 = vmatpush2.msra.mxu0 0.0
    %1329 = vmatprep.mubr.f32.mxu0 0.0
    %1330 = vmatmul.mubr.f32.gmra.mxu0 %v1263
    %v1331 = vpop.f32.mrf.mxu0
    %v1332 = vadd.f32 0.0, %v1331
    %v1333 = vpop.f32.mrf.mxu0
    %1334 = vdwg.mxu0
    %v1336 = vsel %vm187, %v1256, 0
    %v1339 = vsel %vm187, %v1332, 0
    %1341 = vmatprep.subr.mxu0 0.0
    %1342 = vmatpush1.msra.mxu0 0.0
    %1343 = vmatprep.subr.mxu0 0.0
    %1344 = vmatpush1.msra.mxu0 0.0
    %1345 = vmatprep.subr.mxu0 0.0
    %1346 = vmatpush1.msra.mxu0 0.0
    %1347 = vmatprep.subr.mxu0 0.0
    %1348 = vmatpush1.msra.mxu0 0.0
    %1349 = vmatprep.subr.mxu0 0.0
    %1350 = vmatpush1.msra.mxu0 0.0
    %1351 = vmatprep.subr.mxu0 0.0
    %1352 = vmatpush1.msra.mxu0 0.0
    %1353 = vmatprep.subr.mxu0 0.0
    %1354 = vmatpush1.msra.mxu0 0.0
    %1355 = vmatprep.subr.mxu0 0.0
    %1356 = vmatpush1.msra.mxu0 0.0
    %1357 = vmatprep.subr.mxu0 0.0
    %1358 = vmatpush1.msra.mxu0 0.0
    %1359 = vmatprep.subr.mxu0 0.0
    %1360 = vmatpush1.msra.mxu0 0.0
    %1361 = vmatprep.subr.mxu0 0.0
    %1362 = vmatpush1.msra.mxu0 0.0
    %1363 = vmatprep.subr.mxu0 0.0
    %1364 = vmatpush1.msra.mxu0 0.0
    %1365 = vmatprep.subr.mxu0 0.0
    %1366 = vmatpush1.msra.mxu0 0.0
    %1367 = vmatprep.subr.mxu0 0.0
    %1368 = vmatpush1.msra.mxu0 0.0
    %1369 = vmatprep.subr.mxu0 0.0
    %1370 = vmatpush1.msra.mxu0 0.0
    %1371 = vmatprep.subr.mxu0 0.0
    %1372 = vmatpush1.msra.mxu0 %v182
    %1373 = vmatprep.subr.mxu0 0.0
    %1374 = vmatpush2.msra.mxu0 0.0
    %1375 = vmatprep.subr.mxu0 0.0
    %1376 = vmatpush2.msra.mxu0 0.0
    %1377 = vmatprep.subr.mxu0 0.0
    %1378 = vmatpush2.msra.mxu0 0.0
    %1379 = vmatprep.subr.mxu0 0.0
    %1380 = vmatpush2.msra.mxu0 0.0
    %1381 = vmatprep.subr.mxu0 0.0
    %1382 = vmatpush2.msra.mxu0 0.0
    %1383 = vmatprep.subr.mxu0 0.0
    %1384 = vmatpush2.msra.mxu0 0.0
    %1385 = vmatprep.subr.mxu0 0.0
    %1386 = vmatpush2.msra.mxu0 0.0
    %1387 = vmatprep.subr.mxu0 0.0
    %1388 = vmatpush2.msra.mxu0 0.0
    %1389 = vmatprep.subr.mxu0 0.0
    %1390 = vmatpush2.msra.mxu0 0.0
    %1391 = vmatprep.subr.mxu0 0.0
    %1392 = vmatpush2.msra.mxu0 0.0
    %1393 = vmatprep.subr.mxu0 0.0
    %1394 = vmatpush2.msra.mxu0 0.0
    %1395 = vmatprep.subr.mxu0 0.0
    %1396 = vmatpush2.msra.mxu0 0.0
    %1397 = vmatprep.subr.mxu0 0.0
    %1398 = vmatpush2.msra.mxu0 0.0
    %1399 = vmatprep.subr.mxu0 0.0
    %1400 = vmatpush2.msra.mxu0 0.0
    %1401 = vmatprep.subr.mxu0 0.0
    %1402 = vmatpush2.msra.mxu0 0.0
    %1403 = vmatprep.subr.mxu0 0.0
    %1404 = vmatpush2.msra.mxu0 0.0
    %1405 = vmatprep.mubr.f32.mxu0 0.0
    %1406 = vmatmul.mubr.f32.gmra.mxu0 %v1336
    %v1407 = vpop.f32.mrf.mxu0
    %v1408 = vadd.f32 0.0, %v1407
    %v1409 = vpop.f32.mrf.mxu0
    %1410 = vmatprep.mubr.f32.mxu0 0.0
    %1411 = vmatmul.mubr.f32.gmra.mxu0 %v1339
    %v1412 = vpop.f32.mrf.mxu0
    %v1413 = vadd.f32 0.0, %v1412
    %v1414 = vpop.f32.mrf.mxu0
    %1415 = vdwg.mxu0
    %v1416 = vadd.f32 %v997, %v1408
    %v1417 = vadd.f32 %v1002, %v1413
    %1418 = vrot.lane.b32.xlu0 %v172, 104
    %v1419 = vpop.permute.xlu0 %1418
    %1420 = vrot.lane.b32.xlu0 %v172, 72
    %v1421 = vpop.permute.xlu0 %1420
    %v1422 = vsel %vm187, %v1419, 0
    %v1424 = vsel %vm187, %v1421, 0
    %1426 = vmatprep.subr.mxu0 0.0
    %1427 = vmatpush1.xpose.msra.mxu0 0.0
    %1428 = vmatprep.subr.mxu0 0.0
    %1429 = vmatpush1.xpose.msra.mxu0 0.0
    %1430 = vmatprep.subr.mxu0 0.0
    %1431 = vmatpush1.xpose.msra.mxu0 0.0
    %1432 = vmatprep.subr.mxu0 0.0
    %1433 = vmatpush1.xpose.msra.mxu0 0.0
    %1434 = vmatprep.subr.mxu0 0.0
    %1435 = vmatpush1.xpose.msra.mxu0 0.0
    %1436 = vmatprep.subr.mxu0 0.0
    %1437 = vmatpush1.xpose.msra.mxu0 0.0
    %1438 = vmatprep.subr.mxu0 0.0
    %1439 = vmatpush1.xpose.msra.mxu0 0.0
    %1440 = vmatprep.subr.mxu0 0.0
    %1441 = vmatpush1.xpose.msra.mxu0 0.0
    %1442 = vmatprep.subr.mxu0 0.0
    %1443 = vmatpush1.xpose.msra.mxu0 0.0
    %1444 = vmatprep.subr.mxu0 0.0
    %1445 = vmatpush1.xpose.msra.mxu0 0.0
    %1446 = vmatprep.subr.mxu0 0.0
    %1447 = vmatpush1.xpose.msra.mxu0 0.0
    %1448 = vmatprep.subr.mxu0 0.0
    %1449 = vmatpush1.xpose.msra.mxu0 0.0
    %1450 = vmatprep.subr.mxu0 0.0
    %1451 = vmatpush1.xpose.msra.mxu0 0.0
    %1452 = vmatprep.subr.mxu0 0.0
    %1453 = vmatpush1.xpose.msra.mxu0 0.0
    %1454 = vmatprep.subr.mxu0 0.0
    %1455 = vmatpush1.xpose.msra.mxu0 0.0
    %1456 = vmatprep.subr.mxu0 0.0
    %1457 = vmatpush1.xpose.msra.mxu0 %v1424
    %1458 = vmatprep.subr.mxu0 0.0
    %1459 = vmatpush2.xpose.msra.mxu0 0.0
    %1460 = vmatprep.subr.mxu0 0.0
    %1461 = vmatpush2.xpose.msra.mxu0 0.0
    %1462 = vmatprep.subr.mxu0 0.0
    %1463 = vmatpush2.xpose.msra.mxu0 0.0
    %1464 = vmatprep.subr.mxu0 0.0
    %1465 = vmatpush2.xpose.msra.mxu0 0.0
    %1466 = vmatprep.subr.mxu0 0.0
    %1467 = vmatpush2.xpose.msra.mxu0 0.0
    %1468 = vmatprep.subr.mxu0 0.0
    %1469 = vmatpush2.xpose.msra.mxu0 0.0
    %1470 = vmatprep.subr.mxu0 0.0
    %1471 = vmatpush2.xpose.msra.mxu0 0.0
    %1472 = vmatprep.subr.mxu0 0.0
    %1473 = vmatpush2.xpose.msra.mxu0 0.0
    %1474 = vmatprep.subr.mxu0 0.0
    %1475 = vmatpush2.xpose.msra.mxu0 0.0
    %1476 = vmatprep.subr.mxu0 0.0
    %1477 = vmatpush2.xpose.msra.mxu0 0.0
    %1478 = vmatprep.subr.mxu0 0.0
    %1479 = vmatpush2.xpose.msra.mxu0 0.0
    %1480 = vmatprep.subr.mxu0 0.0
    %1481 = vmatpush2.xpose.msra.mxu0 0.0
    %1482 = vmatprep.subr.mxu0 0.0
    %1483 = vmatpush2.xpose.msra.mxu0 0.0
    %1484 = vmatprep.subr.mxu0 0.0
    %1485 = vmatpush2.xpose.msra.mxu0 0.0
    %1486 = vmatprep.subr.mxu0 0.0
    %1487 = vmatpush2.xpose.msra.mxu0 0.0
    %1488 = vmatprep.subr.mxu0 0.0
    %1489 = vmatpush2.xpose.msra.mxu0 0.0
    %1490 = vmatprep.mubr.f32.mxu0 0.0
    %1491 = vmatmul.mubr.f32.gmra.mxu0 %v1422
    %v1492 = vpop.f32.mrf.mxu0
    %v1493 = vadd.f32 0.0, %v1492
    %v1494 = vpop.f32.mrf.mxu0
    %1495 = vdwg.mxu0
    %1496 = vrot.lane.b32.xlu0 %v177, 104
    %v1497 = vpop.permute.xlu0 %1496
    %1498 = vrot.lane.b32.xlu0 %v177, 72
    %v1499 = vpop.permute.xlu0 %1498
    %v1500 = vsel %vm187, %v1497, 0
    %v1502 = vsel %vm187, %v1499, 0
    %1504 = vmatprep.subr.mxu0 0.0
    %1505 = vmatpush1.xpose.msra.mxu0 0.0
    %1506 = vmatprep.subr.mxu0 0.0
    %1507 = vmatpush1.xpose.msra.mxu0 0.0
    %1508 = vmatprep.subr.mxu0 0.0
    %1509 = vmatpush1.xpose.msra.mxu0 0.0
    %1510 = vmatprep.subr.mxu0 0.0
    %1511 = vmatpush1.xpose.msra.mxu0 0.0
    %1512 = vmatprep.subr.mxu0 0.0
    %1513 = vmatpush1.xpose.msra.mxu0 0.0
    %1514 = vmatprep.subr.mxu0 0.0
    %1515 = vmatpush1.xpose.msra.mxu0 0.0
    %1516 = vmatprep.subr.mxu0 0.0
    %1517 = vmatpush1.xpose.msra.mxu0 0.0
    %1518 = vmatprep.subr.mxu0 0.0
    %1519 = vmatpush1.xpose.msra.mxu0 0.0
    %1520 = vmatprep.subr.mxu0 0.0
    %1521 = vmatpush1.xpose.msra.mxu0 0.0
    %1522 = vmatprep.subr.mxu0 0.0
    %1523 = vmatpush1.xpose.msra.mxu0 0.0
    %1524 = vmatprep.subr.mxu0 0.0
    %1525 = vmatpush1.xpose.msra.mxu0 0.0
    %1526 = vmatprep.subr.mxu0 0.0
    %1527 = vmatpush1.xpose.msra.mxu0 0.0
    %1528 = vmatprep.subr.mxu0 0.0
    %1529 = vmatpush1.xpose.msra.mxu0 0.0
    %1530 = vmatprep.subr.mxu0 0.0
    %1531 = vmatpush1.xpose.msra.mxu0 0.0
    %1532 = vmatprep.subr.mxu0 0.0
    %1533 = vmatpush1.xpose.msra.mxu0 0.0
    %1534 = vmatprep.subr.mxu0 0.0
    %1535 = vmatpush1.xpose.msra.mxu0 %v1502
    %1536 = vmatprep.subr.mxu0 0.0
    %1537 = vmatpush2.xpose.msra.mxu0 0.0
    %1538 = vmatprep.subr.mxu0 0.0
    %1539 = vmatpush2.xpose.msra.mxu0 0.0
    %1540 = vmatprep.subr.mxu0 0.0
    %1541 = vmatpush2.xpose.msra.mxu0 0.0
    %1542 = vmatprep.subr.mxu0 0.0
    %1543 = vmatpush2.xpose.msra.mxu0 0.0
    %1544 = vmatprep.subr.mxu0 0.0
    %1545 = vmatpush2.xpose.msra.mxu0 0.0
    %1546 = vmatprep.subr.mxu0 0.0
    %1547 = vmatpush2.xpose.msra.mxu0 0.0
    %1548 = vmatprep.subr.mxu0 0.0
    %1549 = vmatpush2.xpose.msra.mxu0 0.0
    %1550 = vmatprep.subr.mxu0 0.0
    %1551 = vmatpush2.xpose.msra.mxu0 0.0
    %1552 = vmatprep.subr.mxu0 0.0
    %1553 = vmatpush2.xpose.msra.mxu0 0.0
    %1554 = vmatprep.subr.mxu0 0.0
    %1555 = vmatpush2.xpose.msra.mxu0 0.0
    %1556 = vmatprep.subr.mxu0 0.0
    %1557 = vmatpush2.xpose.msra.mxu0 0.0
    %1558 = vmatprep.subr.mxu0 0.0
    %1559 = vmatpush2.xpose.msra.mxu0 0.0
    %1560 = vmatprep.subr.mxu0 0.0
    %1561 = vmatpush2.xpose.msra.mxu0 0.0
    %1562 = vmatprep.subr.mxu0 0.0
    %1563 = vmatpush2.xpose.msra.mxu0 0.0
    %1564 = vmatprep.subr.mxu0 0.0
    %1565 = vmatpush2.xpose.msra.mxu0 0.0
    %1566 = vmatprep.subr.mxu0 0.0
    %1567 = vmatpush2.xpose.msra.mxu0 0.0
    %1568 = vmatprep.mubr.f32.mxu0 0.0
    %1569 = vmatmul.mubr.f32.gmra.mxu0 %v1500
    %v1570 = vpop.f32.mrf.mxu0
    %v1571 = vadd.f32 0.0, %v1570
    %v1572 = vpop.f32.mrf.mxu0
    %1573 = vdwg.mxu0
    %v1574 = vsel %vm187, %v1493, -inf
    %1575 = vmax.xlane.f32.xlu0 %v1574
    %v1576 = vpop.xlane.xlu0 %1575
    %v1577 = vsel %vm187, %v1571, -inf
    %1578 = vmax.xlane.f32.xlu0 %v1577
    %v1579 = vpop.xlane.xlu0 %1578
    %v1580 = vsub.f32 %v1493, %v1576
    %v1581 = vsub.f32 %v1571, %v1579
    %v1582 = vmul.f32 %v1580, 1.442695
    %v1583 = vpow.pop %v1582
    %v1584 = vmul.f32 %v1581, 1.442695
    %v1585 = vpow.pop %v1584
    %v1586 = vsel %vm187, %v1583, 0.0
    %1587 = vadd.xlane.f32.xlu0 %v1586
    %v1588 = vpop.xlane.xlu0 %1587
    %v1589 = vsel %vm187, %v1585, 0.0
    %1590 = vadd.xlane.f32.xlu0 %v1589
    %v1591 = vpop.xlane.xlu0 %1590
    %v1592 = vrcp.pop %v1588
    %v1593 = vmul.f32 %v1583, %v1592
    %v1594 = vrcp.pop %v1591
    %v1595 = vmul.f32 %v1585, %v1594
    %1596 = vrot.lane.b32.xlu0 %v172, 40
    %v1597 = vpop.permute.xlu0 %1596
    %v1600 = vsel %vm187, %v1593, 0
    %1602 = vmatprep.subr.mxu0 0.0
    %1603 = vmatpush1.msra.mxu0 0.0
    %1604 = vmatprep.subr.mxu0 0.0
    %1605 = vmatpush1.msra.mxu0 0.0
    %1606 = vmatprep.subr.mxu0 0.0
    %1607 = vmatpush1.msra.mxu0 0.0
    %1608 = vmatprep.subr.mxu0 0.0
    %1609 = vmatpush1.msra.mxu0 0.0
    %1610 = vmatprep.subr.mxu0 0.0
    %1611 = vmatpush1.msra.mxu0 0.0
    %1612 = vmatprep.subr.mxu0 0.0
    %1613 = vmatpush1.msra.mxu0 0.0
    %1614 = vmatprep.subr.mxu0 0.0
    %1615 = vmatpush1.msra.mxu0 0.0
    %1616 = vmatprep.subr.mxu0 0.0
    %1617 = vmatpush1.msra.mxu0 0.0
    %1618 = vmatprep.subr.mxu0 0.0
    %1619 = vmatpush1.msra.mxu0 0.0
    %1620 = vmatprep.subr.mxu0 0.0
    %1621 = vmatpush1.msra.mxu0 0.0
    %1622 = vmatprep.subr.mxu0 0.0
    %1623 = vmatpush1.msra.mxu0 0.0
    %1624 = vmatprep.subr.mxu0 0.0
    %1625 = vmatpush1.msra.mxu0 0.0
    %1626 = vmatprep.subr.mxu0 0.0
    %1627 = vmatpush1.msra.mxu0 0.0
    %1628 = vmatprep.subr.mxu0 0.0
    %1629 = vmatpush1.msra.mxu0 0.0
    %1630 = vmatprep.subr.mxu0 0.0
    %1631 = vmatpush1.msra.mxu0 0.0
    %1632 = vmatprep.subr.mxu0 0.0
    %1633 = vmatpush1.msra.mxu0 %v1597
    %1634 = vmatprep.subr.mxu0 0.0
    %1635 = vmatpush2.msra.mxu0 0.0
    %1636 = vmatprep.subr.mxu0 0.0
    %1637 = vmatpush2.msra.mxu0 0.0
    %1638 = vmatprep.subr.mxu0 0.0
    %1639 = vmatpush2.msra.mxu0 0.0
    %1640 = vmatprep.subr.mxu0 0.0
    %1641 = vmatpush2.msra.mxu0 0.0
    %1642 = vmatprep.subr.mxu0 0.0
    %1643 = vmatpush2.msra.mxu0 0.0
    %1644 = vmatprep.subr.mxu0 0.0
    %1645 = vmatpush2.msra.mxu0 0.0
    %1646 = vmatprep.subr.mxu0 0.0
    %1647 = vmatpush2.msra.mxu0 0.0
    %1648 = vmatprep.subr.mxu0 0.0
    %1649 = vmatpush2.msra.mxu0 0.0
    %1650 = vmatprep.subr.mxu0 0.0
    %1651 = vmatpush2.msra.mxu0 0.0
    %1652 = vmatprep.subr.mxu0 0.0
    %1653 = vmatpush2.msra.mxu0 0.0
    %1654 = vmatprep.subr.mxu0 0.0
    %1655 = vmatpush2.msra.mxu0 0.0
    %1656 = vmatprep.subr.mxu0 0.0
    %1657 = vmatpush2.msra.mxu0 0.0
    %1658 = vmatprep.subr.mxu0 0.0
    %1659 = vmatpush2.msra.mxu0 0.0
    %1660 = vmatprep.subr.mxu0 0.0
    %1661 = vmatpush2.msra.mxu0 0.0
    %1662 = vmatprep.subr.mxu0 0.0
    %1663 = vmatpush2.msra.mxu0 0.0
    %1664 = vmatprep.subr.mxu0 0.0
    %1665 = vmatpush2.msra.mxu0 0.0
    %1666 = vmatprep.mubr.f32.mxu0 0.0
    %1667 = vmatmul.mubr.f32.gmra.mxu0 %v1600
    %v1668 = vpop.f32.mrf.mxu0
    %v1669 = vadd.f32 0.0, %v1668
    %v1670 = vpop.f32.mrf.mxu0
    %1671 = vdwg.mxu0
    %1672 = vrot.lane.b32.xlu0 %v177, 40
    %v1673 = vpop.permute.xlu0 %1672
    %v1676 = vsel %vm187, %v1595, 0
    %1678 = vmatprep.subr.mxu0 0.0
    %1679 = vmatpush1.msra.mxu0 0.0
    %1680 = vmatprep.subr.mxu0 0.0
    %1681 = vmatpush1.msra.mxu0 0.0
    %1682 = vmatprep.subr.mxu0 0.0
    %1683 = vmatpush1.msra.mxu0 0.0
    %1684 = vmatprep.subr.mxu0 0.0
    %1685 = vmatpush1.msra.mxu0 0.0
    %1686 = vmatprep.subr.mxu0 0.0
    %1687 = vmatpush1.msra.mxu0 0.0
    %1688 = vmatprep.subr.mxu0 0.0
    %1689 = vmatpush1.msra.mxu0 0.0
    %1690 = vmatprep.subr.mxu0 0.0
    %1691 = vmatpush1.msra.mxu0 0.0
    %1692 = vmatprep.subr.mxu0 0.0
    %1693 = vmatpush1.msra.mxu0 0.0
    %1694 = vmatprep.subr.mxu0 0.0
    %1695 = vmatpush1.msra.mxu0 0.0
    %1696 = vmatprep.subr.mxu0 0.0
    %1697 = vmatpush1.msra.mxu0 0.0
    %1698 = vmatprep.subr.mxu0 0.0
    %1699 = vmatpush1.msra.mxu0 0.0
    %1700 = vmatprep.subr.mxu0 0.0
    %1701 = vmatpush1.msra.mxu0 0.0
    %1702 = vmatprep.subr.mxu0 0.0
    %1703 = vmatpush1.msra.mxu0 0.0
    %1704 = vmatprep.subr.mxu0 0.0
    %1705 = vmatpush1.msra.mxu0 0.0
    %1706 = vmatprep.subr.mxu0 0.0
    %1707 = vmatpush1.msra.mxu0 0.0
    %1708 = vmatprep.subr.mxu0 0.0
    %1709 = vmatpush1.msra.mxu0 %v1673
    %1710 = vmatprep.subr.mxu0 0.0
    %1711 = vmatpush2.msra.mxu0 0.0
    %1712 = vmatprep.subr.mxu0 0.0
    %1713 = vmatpush2.msra.mxu0 0.0
    %1714 = vmatprep.subr.mxu0 0.0
    %1715 = vmatpush2.msra.mxu0 0.0
    %1716 = vmatprep.subr.mxu0 0.0
    %1717 = vmatpush2.msra.mxu0 0.0
    %1718 = vmatprep.subr.mxu0 0.0
    %1719 = vmatpush2.msra.mxu0 0.0
    %1720 = vmatprep.subr.mxu0 0.0
    %1721 = vmatpush2.msra.mxu0 0.0
    %1722 = vmatprep.subr.mxu0 0.0
    %1723 = vmatpush2.msra.mxu0 0.0
    %1724 = vmatprep.subr.mxu0 0.0
    %1725 = vmatpush2.msra.mxu0 0.0
    %1726 = vmatprep.subr.mxu0 0.0
    %1727 = vmatpush2.msra.mxu0 0.0
    %1728 = vmatprep.subr.mxu0 0.0
    %1729 = vmatpush2.msra.mxu0 0.0
    %1730 = vmatprep.subr.mxu0 0.0
    %1731 = vmatpush2.msra.mxu0 0.0
    %1732 = vmatprep.subr.mxu0 0.0
    %1733 = vmatpush2.msra.mxu0 0.0
    %1734 = vmatprep.subr.mxu0 0.0
    %1735 = vmatpush2.msra.mxu0 0.0
    %1736 = vmatprep.subr.mxu0 0.0
    %1737 = vmatpush2.msra.mxu0 0.0
    %1738 = vmatprep.subr.mxu0 0.0
    %1739 = vmatpush2.msra.mxu0 0.0
    %1740 = vmatprep.subr.mxu0 0.0
    %1741 = vmatpush2.msra.mxu0 0.0
    %1742 = vmatprep.mubr.f32.mxu0 0.0
    %1743 = vmatmul.mubr.f32.gmra.mxu0 %v1676
    %v1744 = vpop.f32.mrf.mxu0
    %v1745 = vadd.f32 0.0, %v1744
    %v1746 = vpop.f32.mrf.mxu0
    %1747 = vdwg.mxu0
    %v1749 = vsel %vm187, %v1669, 0
    %v1752 = vsel %vm187, %v1745, 0
    %1754 = vmatprep.subr.mxu0 0.0
    %1755 = vmatpush1.msra.mxu0 0.0
    %1756 = vmatprep.subr.mxu0 0.0
    %1757 = vmatpush1.msra.mxu0 0.0
    %1758 = vmatprep.subr.mxu0 0.0
    %1759 = vmatpush1.msra.mxu0 0.0
    %1760 = vmatprep.subr.mxu0 0.0
    %1761 = vmatpush1.msra.mxu0 0.0
    %1762 = vmatprep.subr.mxu0 0.0
    %1763 = vmatpush1.msra.mxu0 0.0
    %1764 = vmatprep.subr.mxu0 0.0
    %1765 = vmatpush1.msra.mxu0 0.0
    %1766 = vmatprep.subr.mxu0 0.0
    %1767 = vmatpush1.msra.mxu0 0.0
    %1768 = vmatprep.subr.mxu0 0.0
    %1769 = vmatpush1.msra.mxu0 0.0
    %1770 = vmatprep.subr.mxu0 0.0
    %1771 = vmatpush1.msra.mxu0 0.0
    %1772 = vmatprep.subr.mxu0 0.0
    %1773 = vmatpush1.msra.mxu0 0.0
    %1774 = vmatprep.subr.mxu0 0.0
    %1775 = vmatpush1.msra.mxu0 0.0
    %1776 = vmatprep.subr.mxu0 0.0
    %1777 = vmatpush1.msra.mxu0 0.0
    %1778 = vmatprep.subr.mxu0 0.0
    %1779 = vmatpush1.msra.mxu0 0.0
    %1780 = vmatprep.subr.mxu0 0.0
    %1781 = vmatpush1.msra.mxu0 0.0
    %1782 = vmatprep.subr.mxu0 0.0
    %1783 = vmatpush1.msra.mxu0 0.0
    %1784 = vmatprep.subr.mxu0 0.0
    %1785 = vmatpush1.msra.mxu0 %v183
    %1786 = vmatprep.subr.mxu0 0.0
    %1787 = vmatpush2.msra.mxu0 0.0
    %1788 = vmatprep.subr.mxu0 0.0
    %1789 = vmatpush2.msra.mxu0 0.0
    %1790 = vmatprep.subr.mxu0 0.0
    %1791 = vmatpush2.msra.mxu0 0.0
    %1792 = vmatprep.subr.mxu0 0.0
    %1793 = vmatpush2.msra.mxu0 0.0
    %1794 = vmatprep.subr.mxu0 0.0
    %1795 = vmatpush2.msra.mxu0 0.0
    %1796 = vmatprep.subr.mxu0 0.0
    %1797 = vmatpush2.msra.mxu0 0.0
    %1798 = vmatprep.subr.mxu0 0.0
    %1799 = vmatpush2.msra.mxu0 0.0
    %1800 = vmatprep.subr.mxu0 0.0
    %1801 = vmatpush2.msra.mxu0 0.0
    %1802 = vmatprep.subr.mxu0 0.0
    %1803 = vmatpush2.msra.mxu0 0.0
    %1804 = vmatprep.subr.mxu0 0.0
    %1805 = vmatpush2.msra.mxu0 0.0
    %1806 = vmatprep.subr.mxu0 0.0
    %1807 = vmatpush2.msra.mxu0 0.0
    %1808 = vmatprep.subr.mxu0 0.0
    %1809 = vmatpush2.msra.mxu0 0.0
    %1810 = vmatprep.subr.mxu0 0.0
    %1811 = vmatpush2.msra.mxu0 0.0
    %1812 = vmatprep.subr.mxu0 0.0
    %1813 = vmatpush2.msra.mxu0 0.0
    %1814 = vmatprep.subr.mxu0 0.0
    %1815 = vmatpush2.msra.mxu0 0.0
    %1816 = vmatprep.subr.mxu0 0.0
    %1817 = vmatpush2.msra.mxu0 0.0
    %1818 = vmatprep.mubr.f32.mxu0 0.0
    %1819 = vmatmul.mubr.f32.gmra.mxu0 %v1749
    %v1820 = vpop.f32.mrf.mxu0
    %v1821 = vadd.f32 0.0, %v1820
    %v1822 = vpop.f32.mrf.mxu0
    %1823 = vmatprep.mubr.f32.mxu0 0.0
    %1824 = vmatmul.mubr.f32.gmra.mxu0 %v1752
    %v1825 = vpop.f32.mrf.mxu0
    %v1826 = vadd.f32 0.0, %v1825
    %v1827 = vpop.f32.mrf.mxu0
    %1828 = vdwg.mxu0
    %v1829 = vadd.f32 %v1416, %v1821
    %v1830 = vadd.f32 %v1417, %v1826
    %v1831 = vadd.f32 %v45, %v1829
    %v1832 = vadd.f32 %v46, %v1830
    %v1833 = vld [vmem:[%s5] sm:$0x1]
    %v1835 = vlaneseq
    %v1836 = vshrl.u32 %v1835, 7
    %v1837 = vsub.s32 0, %v1836
    %v1838 = vrot.slane %v1833, %v1837
    %v1840 = vadd.f32 %v1831, %v1838
    %v1841 = vadd.f32 %v1832, %v1838
    %v1842 = vsel %vm48, %v1840, 0.0
    %1843 = vadd.xlane.f32.xlu0 %v1842
    %v1844 = vpop.xlane.xlu0 %1843
    %v1845 = vsel %vm48, %v1841, 0.0
    %1846 = vadd.xlane.f32.xlu0 %v1845
    %v1847 = vpop.xlane.xlu0 %1846
    %v1848 = vmul.f32 %v1844, %v55
    %v1849 = vmul.f32 %v1847, %v55
    %v1850 = vsub.f32 %v1840, %v1848
    %v1851 = vsub.f32 %v1841, %v1849
    %v1852 = vmul.f32 %v1850, %v1850
    %v1853 = vmul.f32 %v1851, %v1851
    %v1854 = vsel %vm48, %v1852, 0.0
    %1855 = vadd.xlane.f32.xlu0 %v1854
    %v1856 = vpop.xlane.xlu0 %1855
    %v1857 = vsel %vm48, %v1853, 0.0
    %1858 = vadd.xlane.f32.xlu0 %v1857
    %v1859 = vpop.xlane.xlu0 %1858
    %v1860 = vmul.f32 %v1856, %v55
    %v1861 = vmul.f32 %v1859, %v55
    %v1862 = vadd.f32 %v1860, 1e-05
    %v1863 = vadd.f32 %v1861, 1e-05
    %v1864 = vrsqrt.pop %v1862
    %v1865 = vrsqrt.pop %v1863
    %v1866 = vmul.f32 %v1850, %v1864
    %v1867 = vmul.f32 %v1851, %v1865
    %v1868 = vlaneseq
    %v1869 = vshrl.u32 %v1868, 7
    %v1870 = vsub.s32 2, %v1869
    %v1871 = vrot.slane %v47, %v1870
    %v1872 = vmul.f32 %v1866, %v1871
    %v1873 = vmul.f32 %v1867, %v1871
    %v1874 = vlaneseq
    %v1875 = vshrl.u32 %v1874, 7
    %v1876 = vsub.s32 3, %v1875
    %v1877 = vrot.slane %v47, %v1876
    %v1878 = vadd.f32 %v1872, %v1877
    %v1879 = vadd.f32 %v1873, %v1877
    %v1880 = vld [vmem:[%s6] sm:$0xff]
    %v1881 = vld [vmem:[%s6 + $0x8] sm:$0xff]
    %v1882 = vld [vmem:[%s6 + $0x10] sm:$0xff]
    %v1883 = vld [vmem:[%s6 + $0x18] sm:$0xff]
    %v1884 = vld [vmem:[%s7] sm:$0x1]
    %v1886 = vlaneseq
    %v1887 = vshrl.u32 %v1886, 7
    %v1888 = vsub.s32 0, %v1887
    %v1889 = vrot.slane %v1884, %v1888
    %v1892 = vsel %vm48, %v1878, 0
    %v1895 = vsel %vm48, %v1879, 0
    %1897 = vmatprep.subr.mxu0 0.0
    %1898 = vmatpush1.msra.mxu0 0.0
    %1899 = vmatprep.subr.mxu0 0.0
    %1900 = vmatpush1.msra.mxu0 0.0
    %1901 = vmatprep.subr.mxu0 0.0
    %1902 = vmatpush1.msra.mxu0 0.0
    %1903 = vmatprep.subr.mxu0 0.0
    %1904 = vmatpush1.msra.mxu0 0.0
    %1905 = vmatprep.subr.mxu0 0.0
    %1906 = vmatpush1.msra.mxu0 0.0
    %1907 = vmatprep.subr.mxu0 0.0
    %1908 = vmatpush1.msra.mxu0 0.0
    %1909 = vmatprep.subr.mxu0 0.0
    %1910 = vmatpush1.msra.mxu0 0.0
    %1911 = vmatprep.subr.mxu0 0.0
    %1912 = vmatpush1.msra.mxu0 0.0
    %1913 = vmatprep.subr.mxu0 0.0
    %1914 = vmatpush1.msra.mxu0 0.0
    %1915 = vmatprep.subr.mxu0 0.0
    %1916 = vmatpush1.msra.mxu0 0.0
    %1917 = vmatprep.subr.mxu0 0.0
    %1918 = vmatpush1.msra.mxu0 0.0
    %1919 = vmatprep.subr.mxu0 0.0
    %1920 = vmatpush1.msra.mxu0 0.0
    %1921 = vmatprep.subr.mxu0 0.0
    %1922 = vmatpush1.msra.mxu0 %v1883
    %1923 = vmatprep.subr.mxu0 0.0
    %1924 = vmatpush1.msra.mxu0 %v1882
    %1925 = vmatprep.subr.mxu0 0.0
    %1926 = vmatpush1.msra.mxu0 %v1881
    %1927 = vmatprep.subr.mxu0 0.0
    %1928 = vmatpush1.msra.mxu0 %v1880
    %1929 = vmatprep.subr.mxu0 0.0
    %1930 = vmatpush2.msra.mxu0 0.0
    %1931 = vmatprep.subr.mxu0 0.0
    %1932 = vmatpush2.msra.mxu0 0.0
    %1933 = vmatprep.subr.mxu0 0.0
    %1934 = vmatpush2.msra.mxu0 0.0
    %1935 = vmatprep.subr.mxu0 0.0
    %1936 = vmatpush2.msra.mxu0 0.0
    %1937 = vmatprep.subr.mxu0 0.0
    %1938 = vmatpush2.msra.mxu0 0.0
    %1939 = vmatprep.subr.mxu0 0.0
    %1940 = vmatpush2.msra.mxu0 0.0
    %1941 = vmatprep.subr.mxu0 0.0
    %1942 = vmatpush2.msra.mxu0 0.0
    %1943 = vmatprep.subr.mxu0 0.0
    %1944 = vmatpush2.msra.mxu0 0.0
    %1945 = vmatprep.subr.mxu0 0.0
    %1946 = vmatpush2.msra.mxu0 0.0
    %1947 = vmatprep.subr.mxu0 0.0
    %1948 = vmatpush2.msra.mxu0 0.0
    %1949 = vmatprep.subr.mxu0 0.0
    %1950 = vmatpush2.msra.mxu0 0.0
    %1951 = vmatprep.subr.mxu0 0.0
    %1952 = vmatpush2.msra.mxu0 0.0
    %1953 = vmatprep.subr.mxu0 0.0
    %1954 = vmatpush2.msra.mxu0 0.0
    %1955 = vmatprep.subr.mxu0 0.0
    %1956 = vmatpush2.msra.mxu0 0.0
    %1957 = vmatprep.subr.mxu0 0.0
    %1958 = vmatpush2.msra.mxu0 0.0
    %1959 = vmatprep.subr.mxu0 0.0
    %1960 = vmatpush2.msra.mxu0 0.0
    %1961 = vmatprep.mubr.f32.mxu0 0.0
    %1962 = vmatmul.mubr.f32.gmra.mxu0 %v1892
    %v1963 = vpop.f32.mrf.mxu0
    %v1964 = vadd.f32 %v1889, %v1963
    %v1965 = vpop.f32.mrf.mxu0
    %1966 = vmatprep.mubr.f32.mxu0 0.0
    %1967 = vmatmul.mubr.f32.gmra.mxu0 %v1895
    %v1968 = vpop.f32.mrf.mxu0
    %v1969 = vadd.f32 %v1889, %v1968
    %v1970 = vpop.f32.mrf.mxu0
    %1971 = vdwg.mxu0
    %v1972 = vmul.f32 %v1964, 0.5
    %v1973 = vmul.f32 %v1969, 0.5
    %v1974 = vmul.f32 %v1964, 0.70710677
    %v1975 = vmul.f32 %v1969, 0.70710677
    %vm1976 = vcmp.ge.f32.partialorder %v1974, 0.0
    %vm1977 = vcmp.ge.f32.partialorder %v1975, 0.0
    %v1978 = vsel %vm1976, 1.0, -1.0
    %v1979 = vsel %vm1977, 1.0, -1.0
    %v1980 = vand.u32 2147483647, %v1974
    %v1981 = vand.u32 2147483647, %v1975
    %v1982 = vmul.f32 %v1980, 0.3275911
    %v1983 = vmul.f32 %v1981, 0.3275911
    %v1984 = vadd.f32 %v1982, 1.0
    %v1985 = vadd.f32 %v1983, 1.0
    %v1986 = vrcp.pop %v1984
    %v1987 = vmul.f32 1.0, %v1986
    %v1988 = vrcp.pop %v1985
    %v1989 = vmul.f32 1.0, %v1988
    %v1990 = vmul.f32 %v1987, 1.0614054
    %v1991 = vmul.f32 %v1989, 1.0614054
    %v1992 = vadd.f32 %v1990, -1.4531521
    %v1993 = vadd.f32 %v1991, -1.4531521
    %v1994 = vmul.f32 %v1992, %v1987
    %v1995 = vmul.f32 %v1993, %v1989
    %v1996 = vadd.f32 %v1994, 1.4214138
    %v1997 = vadd.f32 %v1995, 1.4214138
    %v1998 = vmul.f32 %v1996, %v1987
    %v1999 = vmul.f32 %v1997, %v1989
    %v2000 = vadd.f32 %v1998, -0.28449672
    %v2001 = vadd.f32 %v1999, -0.28449672
    %v2002 = vmul.f32 %v2000, %v1987
    %v2003 = vmul.f32 %v2001, %v1989
    %v2004 = vadd.f32 %v2002, 0.2548296
    %v2005 = vadd.f32 %v2003, 0.2548296
    %v2006 = vmul.f32 %v2004, %v1987
    %v2007 = vmul.f32 %v2005, %v1989
    %v2008 = vsub.f32 0.0, %v1980
    %v2009 = vsub.f32 0.0, %v1981
    %v2010 = vmul.f32 %v2008, %v1980
    %v2011 = vmul.f32 %v2009, %v1981
    %v2012 = vmul.f32 %v2010, 1.442695
    %v2013 = vpow.pop %v2012
    %v2014 = vmul.f32 %v2011, 1.442695
    %v2015 = vpow.pop %v2014
    %v2016 = vmul.f32 %v2006, %v2013
    %v2017 = vmul.f32 %v2007, %v2015
    %v2018 = vsub.f32 1.0, %v2016
    %v2019 = vsub.f32 1.0, %v2017
    %v2020 = vmul.f32 %v1978, %v2018
    %v2021 = vmul.f32 %v1979, %v2019
    %v2022 = vadd.f32 %v2020, 1.0
    %v2023 = vadd.f32 %v2021, 1.0
    %v2024 = vmul.f32 %v1972, %v2022
    %v2025 = vmul.f32 %v1973, %v2023
    %v2026 = vld [vmem:[%s8] sm:$0xff]
    %v2027 = vld [vmem:[%s8 + $0x8] sm:$0xff]
    %v2028 = vld [vmem:[%s8 + $0x10] sm:$0xff]
    %v2029 = vld [vmem:[%s8 + $0x18] sm:$0xff]
    %v2030 = vld [vmem:[%s8 + $0x20] sm:$0xff]
    %v2031 = vld [vmem:[%s8 + $0x28] sm:$0xff]
    %v2032 = vld [vmem:[%s8 + $0x30] sm:$0xff]
    %v2033 = vld [vmem:[%s8 + $0x38] sm:$0xff]
    %v2034 = vld [vmem:[%s8 + $0x40] sm:$0xff]
    %v2035 = vld [vmem:[%s8 + $0x48] sm:$0xff]
    %v2036 = vld [vmem:[%s8 + $0x50] sm:$0xff]
    %v2037 = vld [vmem:[%s8 + $0x58] sm:$0xff]
    %v2038 = vld [vmem:[%s8 + $0x60] sm:$0xff]
    %v2039 = vld [vmem:[%s8 + $0x68] sm:$0xff]
    %v2040 = vld [vmem:[%s8 + $0x70] sm:$0xff]
    %v2041 = vld [vmem:[%s8 + $0x78] sm:$0xff]
    %2042 = vmatprep.subr.mxu0 0.0
    %2043 = vmatpush1.msra.mxu0 %v2041
    %2044 = vmatprep.subr.mxu0 0.0
    %2045 = vmatpush1.msra.mxu0 %v2040
    %2046 = vmatprep.subr.mxu0 0.0
    %2047 = vmatpush1.msra.mxu0 %v2039
    %2048 = vmatprep.subr.mxu0 0.0
    %2049 = vmatpush1.msra.mxu0 %v2038
    %2050 = vmatprep.subr.mxu0 0.0
    %2051 = vmatpush1.msra.mxu0 %v2037
    %2052 = vmatprep.subr.mxu0 0.0
    %2053 = vmatpush1.msra.mxu0 %v2036
    %2054 = vmatprep.subr.mxu0 0.0
    %2055 = vmatpush1.msra.mxu0 %v2035
    %2056 = vmatprep.subr.mxu0 0.0
    %2057 = vmatpush1.msra.mxu0 %v2034
    %2058 = vmatprep.subr.mxu0 0.0
    %2059 = vmatpush1.msra.mxu0 %v2033
    %2060 = vmatprep.subr.mxu0 0.0
    %2061 = vmatpush1.msra.mxu0 %v2032
    %2062 = vmatprep.subr.mxu0 0.0
    %2063 = vmatpush1.msra.mxu0 %v2031
    %2064 = vmatprep.subr.mxu0 0.0
    %2065 = vmatpush1.msra.mxu0 %v2030
    %2066 = vmatprep.subr.mxu0 0.0
    %2067 = vmatpush1.msra.mxu0 %v2029
    %2068 = vmatprep.subr.mxu0 0.0
    %2069 = vmatpush1.msra.mxu0 %v2028
    %2070 = vmatprep.subr.mxu0 0.0
    %2071 = vmatpush1.msra.mxu0 %v2027
    %2072 = vmatprep.subr.mxu0 0.0
    %2073 = vmatpush1.msra.mxu0 %v2026
    %2074 = vmatprep.subr.mxu0 0.0
    %2075 = vmatpush2.msra.mxu0 0.0
    %2076 = vmatprep.subr.mxu0 0.0
    %2077 = vmatpush2.msra.mxu0 0.0
    %2078 = vmatprep.subr.mxu0 0.0
    %2079 = vmatpush2.msra.mxu0 0.0
    %2080 = vmatprep.subr.mxu0 0.0
    %2081 = vmatpush2.msra.mxu0 0.0
    %2082 = vmatprep.subr.mxu0 0.0
    %2083 = vmatpush2.msra.mxu0 0.0
    %2084 = vmatprep.subr.mxu0 0.0
    %2085 = vmatpush2.msra.mxu0 0.0
    %2086 = vmatprep.subr.mxu0 0.0
    %2087 = vmatpush2.msra.mxu0 0.0
    %2088 = vmatprep.subr.mxu0 0.0
    %2089 = vmatpush2.msra.mxu0 0.0
    %2090 = vmatprep.subr.mxu0 0.0
    %2091 = vmatpush2.msra.mxu0 0.0
    %2092 = vmatprep.subr.mxu0 0.0
    %2093 = vmatpush2.msra.mxu0 0.0
    %2094 = vmatprep.subr.mxu0 0.0
    %2095 = vmatpush2.msra.mxu0 0.0
    %2096 = vmatprep.subr.mxu0 0.0
    %2097 = vmatpush2.msra.mxu0 0.0
    %2098 = vmatprep.subr.mxu0 0.0
    %2099 = vmatpush2.msra.mxu0 0.0
    %2100 = vmatprep.subr.mxu0 0.0
    %2101 = vmatpush2.msra.mxu0 0.0
    %2102 = vmatprep.subr.mxu0 0.0
    %2103 = vmatpush2.msra.mxu0 0.0
    %2104 = vmatprep.subr.mxu0 0.0
    %2105 = vmatpush2.msra.mxu0 0.0
    %2106 = vmatprep.mubr.f32.mxu0 0.0
    %2107 = vmatmul.mubr.f32.gmra.mxu0 %v2024
    %v2108 = vpop.f32.mrf.mxu0
    %v2109 = vadd.f32 0.0, %v2108
    %v2110 = vpop.f32.mrf.mxu0
    %2111 = vmatprep.mubr.f32.mxu0 0.0
    %2112 = vmatmul.mubr.f32.gmra.mxu0 %v2025
    %v2113 = vpop.f32.mrf.mxu0
    %v2114 = vadd.f32 0.0, %v2113
    %v2115 = vpop.f32.mrf.mxu0
    %2116 = vdwg.mxu0
    %v2117 = vadd.f32 %v1840, %v2109
    %v2118 = vadd.f32 %v1841, %v2114
    %v2119 = vld [vmem:[%s9] sm:$0x1]
    %v2121 = vlaneseq
    %v2122 = vshrl.u32 %v2121, 7
    %v2123 = vsub.s32 0, %v2122
    %v2124 = vrot.slane %v2119, %v2123
    %v2126 = vadd.f32 %v2117, %v2124
    %v2127 = vadd.f32 %v2118, %v2124
    %s2128 = scalar_lea.vmem %s1, 4
    %v2129 = vld [vmem:[%s2128] sm:$0xf]
    %v2130 = vsel %vm48, %v2126, 0.0
    %2131 = vadd.xlane.f32.xlu0 %v2130
    %v2132 = vpop.xlane.xlu0 %2131
    %v2133 = vsel %vm48, %v2127, 0.0
    %2134 = vadd.xlane.f32.xlu0 %v2133
    %v2135 = vpop.xlane.xlu0 %2134
    %v2136 = vmul.f32 %v2132, %v55
    %v2137 = vmul.f32 %v2135, %v55
    %v2138 = vsub.f32 %v2126, %v2136
    %v2139 = vsub.f32 %v2127, %v2137
    %v2140 = vmul.f32 %v2138, %v2138
    %v2141 = vmul.f32 %v2139, %v2139
    %v2142 = vsel %vm48, %v2140, 0.0
    %2143 = vadd.xlane.f32.xlu0 %v2142
    %v2144 = vpop.xlane.xlu0 %2143
    %v2145 = vsel %vm48, %v2141, 0.0
    %2146 = vadd.xlane.f32.xlu0 %v2145
    %v2147 = vpop.xlane.xlu0 %2146
    %v2148 = vmul.f32 %v2144, %v55
    %v2149 = vmul.f32 %v2147, %v55
    %v2150 = vadd.f32 %v2148, 1e-05
    %v2151 = vadd.f32 %v2149, 1e-05
    %v2152 = vrsqrt.pop %v2150
    %v2153 = vrsqrt.pop %v2151
    %v2154 = vmul.f32 %v2138, %v2152
    %v2155 = vmul.f32 %v2139, %v2153
    %v2156 = vlaneseq
    %v2157 = vshrl.u32 %v2156, 7
    %v2158 = vsub.s32 0, %v2157
    %v2159 = vrot.slane %v2129, %v2158
    %v2160 = vmul.f32 %v2154, %v2159
    %v2161 = vmul.f32 %v2155, %v2159
    %v2162 = vlaneseq
    %v2163 = vshrl.u32 %v2162, 7
    %v2164 = vsub.s32 1, %v2163
    %v2165 = vrot.slane %v2129, %v2164
    %v2166 = vadd.f32 %v2160, %v2165
    %v2167 = vadd.f32 %v2161, %v2165
    %s2168 = scalar_lea.vmem %s2, 32
    %v2169 = vld [vmem:[%s2168] sm:$0xff]
    %v2170 = vld [vmem:[%s2168 + $0x8] sm:$0xff]
    %v2171 = vld [vmem:[%s2168 + $0x10] sm:$0xff]
    %v2172 = vld [vmem:[%s2168 + $0x18] sm:$0xff]
    %s2173 = scalar_lea.vmem %s3, 1
    %v2174 = vld [vmem:[%s2173] sm:$0x1]
    %v2176 = vlaneseq
    %v2177 = vshrl.u32 %v2176, 7
    %v2178 = vsub.s32 0, %v2177
    %v2179 = vrot.slane %v2174, %v2178
    %v2182 = vsel %vm48, %v2166, 0
    %v2185 = vsel %vm48, %v2167, 0
    %2187 = vmatprep.subr.mxu0 0.0
    %2188 = vmatpush1.msra.mxu0 0.0
    %2189 = vmatprep.subr.mxu0 0.0
    %2190 = vmatpush1.msra.mxu0 0.0
    %2191 = vmatprep.subr.mxu0 0.0
    %2192 = vmatpush1.msra.mxu0 0.0
    %2193 = vmatprep.subr.mxu0 0.0
    %2194 = vmatpush1.msra.mxu0 0.0
    %2195 = vmatprep.subr.mxu0 0.0
    %2196 = vmatpush1.msra.mxu0 0.0
    %2197 = vmatprep.subr.mxu0 0.0
    %2198 = vmatpush1.msra.mxu0 0.0
    %2199 = vmatprep.subr.mxu0 0.0
    %2200 = vmatpush1.msra.mxu0 0.0
    %2201 = vmatprep.subr.mxu0 0.0
    %2202 = vmatpush1.msra.mxu0 0.0
    %2203 = vmatprep.subr.mxu0 0.0
    %2204 = vmatpush1.msra.mxu0 0.0
    %2205 = vmatprep.subr.mxu0 0.0
    %2206 = vmatpush1.msra.mxu0 0.0
    %2207 = vmatprep.subr.mxu0 0.0
    %2208 = vmatpush1.msra.mxu0 0.0
    %2209 = vmatprep.subr.mxu0 0.0
    %2210 = vmatpush1.msra.mxu0 0.0
    %2211 = vmatprep.subr.mxu0 0.0
    %2212 = vmatpush1.msra.mxu0 %v2172
    %2213 = vmatprep.subr.mxu0 0.0
    %2214 = vmatpush1.msra.mxu0 %v2171
    %2215 = vmatprep.subr.mxu0 0.0
    %2216 = vmatpush1.msra.mxu0 %v2170
    %2217 = vmatprep.subr.mxu0 0.0
    %2218 = vmatpush1.msra.mxu0 %v2169
    %2219 = vmatprep.subr.mxu0 0.0
    %2220 = vmatpush2.msra.mxu0 0.0
    %2221 = vmatprep.subr.mxu0 0.0
    %2222 = vmatpush2.msra.mxu0 0.0
    %2223 = vmatprep.subr.mxu0 0.0
    %2224 = vmatpush2.msra.mxu0 0.0
    %2225 = vmatprep.subr.mxu0 0.0
    %2226 = vmatpush2.msra.mxu0 0.0
    %2227 = vmatprep.subr.mxu0 0.0
    %2228 = vmatpush2.msra.mxu0 0.0
    %2229 = vmatprep.subr.mxu0 0.0
    %2230 = vmatpush2.msra.mxu0 0.0
    %2231 = vmatprep.subr.mxu0 0.0
    %2232 = vmatpush2.msra.mxu0 0.0
    %2233 = vmatprep.subr.mxu0 0.0
    %2234 = vmatpush2.msra.mxu0 0.0
    %2235 = vmatprep.subr.mxu0 0.0
    %2236 = vmatpush2.msra.mxu0 0.0
    %2237 = vmatprep.subr.mxu0 0.0
    %2238 = vmatpush2.msra.mxu0 0.0
    %2239 = vmatprep.subr.mxu0 0.0
    %2240 = vmatpush2.msra.mxu0 0.0
    %2241 = vmatprep.subr.mxu0 0.0
    %2242 = vmatpush2.msra.mxu0 0.0
    %2243 = vmatprep.subr.mxu0 0.0
    %2244 = vmatpush2.msra.mxu0 0.0
    %2245 = vmatprep.subr.mxu0 0.0
    %2246 = vmatpush2.msra.mxu0 0.0
    %2247 = vmatprep.subr.mxu0 0.0
    %2248 = vmatpush2.msra.mxu0 0.0
    %2249 = vmatprep.subr.mxu0 0.0
    %2250 = vmatpush2.msra.mxu0 0.0
    %2251 = vmatprep.mubr.f32.mxu0 0.0
    %2252 = vmatmul.mubr.f32.gmra.mxu0 %v2182
    %v2253 = vpop.f32.mrf.mxu0
    %v2254 = vadd.f32 %v2179, %v2253
    %v2255 = vpop.f32.mrf.mxu0
    %2256 = vmatprep.mubr.f32.mxu0 0.0
    %2257 = vmatmul.mubr.f32.gmra.mxu0 %v2185
    %v2258 = vpop.f32.mrf.mxu0
    %v2259 = vadd.f32 %v2179, %v2258
    %v2260 = vpop.f32.mrf.mxu0
    %2261 = vdwg.mxu0
    %s2262 = scalar_lea.vmem %s4, 32
    %v2263 = vld [vmem:[%s2262] sm:$0xff]
    %v2264 = vld [vmem:[%s2262 + $0x8] sm:$0xff]
    %v2265 = vld [vmem:[%s2262 + $0x10] sm:$0xff]
    %v2266 = vld [vmem:[%s2262 + $0x18] sm:$0xff]
    %2268 = vrot.lane.b32.xlu0 %v2254, 96
    %v2269 = vpop.permute.xlu0 %2268
    %v2270 = vsel %vm187, %v2254, 0
    %v2272 = vsel %vm187, %v2269, 0
    %2274 = vmatprep.subr.mxu0 0.0
    %2275 = vmatpush1.xpose.msra.mxu0 0.0
    %2276 = vmatprep.subr.mxu0 0.0
    %2277 = vmatpush1.xpose.msra.mxu0 0.0
    %2278 = vmatprep.subr.mxu0 0.0
    %2279 = vmatpush1.xpose.msra.mxu0 0.0
    %2280 = vmatprep.subr.mxu0 0.0
    %2281 = vmatpush1.xpose.msra.mxu0 0.0
    %2282 = vmatprep.subr.mxu0 0.0
    %2283 = vmatpush1.xpose.msra.mxu0 0.0
    %2284 = vmatprep.subr.mxu0 0.0
    %2285 = vmatpush1.xpose.msra.mxu0 0.0
    %2286 = vmatprep.subr.mxu0 0.0
    %2287 = vmatpush1.xpose.msra.mxu0 0.0
    %2288 = vmatprep.subr.mxu0 0.0
    %2289 = vmatpush1.xpose.msra.mxu0 0.0
    %2290 = vmatprep.subr.mxu0 0.0
    %2291 = vmatpush1.xpose.msra.mxu0 0.0
    %2292 = vmatprep.subr.mxu0 0.0
    %2293 = vmatpush1.xpose.msra.mxu0 0.0
    %2294 = vmatprep.subr.mxu0 0.0
    %2295 = vmatpush1.xpose.msra.mxu0 0.0
    %2296 = vmatprep.subr.mxu0 0.0
    %2297 = vmatpush1.xpose.msra.mxu0 0.0
    %2298 = vmatprep.subr.mxu0 0.0
    %2299 = vmatpush1.xpose.msra.mxu0 0.0
    %2300 = vmatprep.subr.mxu0 0.0
    %2301 = vmatpush1.xpose.msra.mxu0 0.0
    %2302 = vmatprep.subr.mxu0 0.0
    %2303 = vmatpush1.xpose.msra.mxu0 0.0
    %2304 = vmatprep.subr.mxu0 0.0
    %2305 = vmatpush1.xpose.msra.mxu0 %v2272
    %2306 = vmatprep.subr.mxu0 0.0
    %2307 = vmatpush2.xpose.msra.mxu0 0.0
    %2308 = vmatprep.subr.mxu0 0.0
    %2309 = vmatpush2.xpose.msra.mxu0 0.0
    %2310 = vmatprep.subr.mxu0 0.0
    %2311 = vmatpush2.xpose.msra.mxu0 0.0
    %2312 = vmatprep.subr.mxu0 0.0
    %2313 = vmatpush2.xpose.msra.mxu0 0.0
    %2314 = vmatprep.subr.mxu0 0.0
    %2315 = vmatpush2.xpose.msra.mxu0 0.0
    %2316 = vmatprep.subr.mxu0 0.0
    %2317 = vmatpush2.xpose.msra.mxu0 0.0
    %2318 = vmatprep.subr.mxu0 0.0
    %2319 = vmatpush2.xpose.msra.mxu0 0.0
    %2320 = vmatprep.subr.mxu0 0.0
    %2321 = vmatpush2.xpose.msra.mxu0 0.0
    %2322 = vmatprep.subr.mxu0 0.0
    %2323 = vmatpush2.xpose.msra.mxu0 0.0
    %2324 = vmatprep.subr.mxu0 0.0
    %2325 = vmatpush2.xpose.msra.mxu0 0.0
    %2326 = vmatprep.subr.mxu0 0.0
    %2327 = vmatpush2.xpose.msra.mxu0 0.0
    %2328 = vmatprep.subr.mxu0 0.0
    %2329 = vmatpush2.xpose.msra.mxu0 0.0
    %2330 = vmatprep.subr.mxu0 0.0
    %2331 = vmatpush2.xpose.msra.mxu0 0.0
    %2332 = vmatprep.subr.mxu0 0.0
    %2333 = vmatpush2.xpose.msra.mxu0 0.0
    %2334 = vmatprep.subr.mxu0 0.0
    %2335 = vmatpush2.xpose.msra.mxu0 0.0
    %2336 = vmatprep.subr.mxu0 0.0
    %2337 = vmatpush2.xpose.msra.mxu0 0.0
    %2338 = vmatprep.mubr.f32.mxu0 0.0
    %2339 = vmatmul.mubr.f32.gmra.mxu0 %v2270
    %v2340 = vpop.f32.mrf.mxu0
    %v2341 = vadd.f32 0.0, %v2340
    %v2342 = vpop.f32.mrf.mxu0
    %2343 = vdwg.mxu0
    %2345 = vrot.lane.b32.xlu0 %v2259, 96
    %v2346 = vpop.permute.xlu0 %2345
    %v2347 = vsel %vm187, %v2259, 0
    %v2349 = vsel %vm187, %v2346, 0
    %2351 = vmatprep.subr.mxu0 0.0
    %2352 = vmatpush1.xpose.msra.mxu0 0.0
    %2353 = vmatprep.subr.mxu0 0.0
    %2354 = vmatpush1.xpose.msra.mxu0 0.0
    %2355 = vmatprep.subr.mxu0 0.0
    %2356 = vmatpush1.xpose.msra.mxu0 0.0
    %2357 = vmatprep.subr.mxu0 0.0
    %2358 = vmatpush1.xpose.msra.mxu0 0.0
    %2359 = vmatprep.subr.mxu0 0.0
    %2360 = vmatpush1.xpose.msra.mxu0 0.0
    %2361 = vmatprep.subr.mxu0 0.0
    %2362 = vmatpush1.xpose.msra.mxu0 0.0
    %2363 = vmatprep.subr.mxu0 0.0
    %2364 = vmatpush1.xpose.msra.mxu0 0.0
    %2365 = vmatprep.subr.mxu0 0.0
    %2366 = vmatpush1.xpose.msra.mxu0 0.0
    %2367 = vmatprep.subr.mxu0 0.0
    %2368 = vmatpush1.xpose.msra.mxu0 0.0
    %2369 = vmatprep.subr.mxu0 0.0
    %2370 = vmatpush1.xpose.msra.mxu0 0.0
    %2371 = vmatprep.subr.mxu0 0.0
    %2372 = vmatpush1.xpose.msra.mxu0 0.0
    %2373 = vmatprep.subr.mxu0 0.0
    %2374 = vmatpush1.xpose.msra.mxu0 0.0
    %2375 = vmatprep.subr.mxu0 0.0
    %2376 = vmatpush1.xpose.msra.mxu0 0.0
    %2377 = vmatprep.subr.mxu0 0.0
    %2378 = vmatpush1.xpose.msra.mxu0 0.0
    %2379 = vmatprep.subr.mxu0 0.0
    %2380 = vmatpush1.xpose.msra.mxu0 0.0
    %2381 = vmatprep.subr.mxu0 0.0
    %2382 = vmatpush1.xpose.msra.mxu0 %v2349
    %2383 = vmatprep.subr.mxu0 0.0
    %2384 = vmatpush2.xpose.msra.mxu0 0.0
    %2385 = vmatprep.subr.mxu0 0.0
    %2386 = vmatpush2.xpose.msra.mxu0 0.0
    %2387 = vmatprep.subr.mxu0 0.0
    %2388 = vmatpush2.xpose.msra.mxu0 0.0
    %2389 = vmatprep.subr.mxu0 0.0
    %2390 = vmatpush2.xpose.msra.mxu0 0.0
    %2391 = vmatprep.subr.mxu0 0.0
    %2392 = vmatpush2.xpose.msra.mxu0 0.0
    %2393 = vmatprep.subr.mxu0 0.0
    %2394 = vmatpush2.xpose.msra.mxu0 0.0
    %2395 = vmatprep.subr.mxu0 0.0
    %2396 = vmatpush2.xpose.msra.mxu0 0.0
    %2397 = vmatprep.subr.mxu0 0.0
    %2398 = vmatpush2.xpose.msra.mxu0 0.0
    %2399 = vmatprep.subr.mxu0 0.0
    %2400 = vmatpush2.xpose.msra.mxu0 0.0
    %2401 = vmatprep.subr.mxu0 0.0
    %2402 = vmatpush2.xpose.msra.mxu0 0.0
    %2403 = vmatprep.subr.mxu0 0.0
    %2404 = vmatpush2.xpose.msra.mxu0 0.0
    %2405 = vmatprep.subr.mxu0 0.0
    %2406 = vmatpush2.xpose.msra.mxu0 0.0
    %2407 = vmatprep.subr.mxu0 0.0
    %2408 = vmatpush2.xpose.msra.mxu0 0.0
    %2409 = vmatprep.subr.mxu0 0.0
    %2410 = vmatpush2.xpose.msra.mxu0 0.0
    %2411 = vmatprep.subr.mxu0 0.0
    %2412 = vmatpush2.xpose.msra.mxu0 0.0
    %2413 = vmatprep.subr.mxu0 0.0
    %2414 = vmatpush2.xpose.msra.mxu0 0.0
    %2415 = vmatprep.mubr.f32.mxu0 0.0
    %2416 = vmatmul.mubr.f32.gmra.mxu0 %v2347
    %v2417 = vpop.f32.mrf.mxu0
    %v2418 = vadd.f32 0.0, %v2417
    %v2419 = vpop.f32.mrf.mxu0
    %2420 = vdwg.mxu0
    %v2421 = vsel %vm187, %v2341, -inf
    %2422 = vmax.xlane.f32.xlu0 %v2421
    %v2423 = vpop.xlane.xlu0 %2422
    %v2424 = vsel %vm187, %v2418, -inf
    %2425 = vmax.xlane.f32.xlu0 %v2424
    %v2426 = vpop.xlane.xlu0 %2425
    %v2427 = vsub.f32 %v2341, %v2423
    %v2428 = vsub.f32 %v2418, %v2426
    %v2429 = vmul.f32 %v2427, 1.442695
    %v2430 = vpow.pop %v2429
    %v2431 = vmul.f32 %v2428, 1.442695
    %v2432 = vpow.pop %v2431
    %v2433 = vsel %vm187, %v2430, 0.0
    %2434 = vadd.xlane.f32.xlu0 %v2433
    %v2435 = vpop.xlane.xlu0 %2434
    %v2436 = vsel %vm187, %v2432, 0.0
    %2437 = vadd.xlane.f32.xlu0 %v2436
    %v2438 = vpop.xlane.xlu0 %2437
    %v2439 = vrcp.pop %v2435
    %v2440 = vmul.f32 %v2430, %v2439
    %v2441 = vrcp.pop %v2438
    %v2442 = vmul.f32 %v2432, %v2441
    %2443 = vrot.lane.b32.xlu0 %v2254, 64
    %v2444 = vpop.permute.xlu0 %2443
    %v2447 = vsel %vm187, %v2440, 0
    %2449 = vmatprep.subr.mxu0 0.0
    %2450 = vmatpush1.msra.mxu0 0.0
    %2451 = vmatprep.subr.mxu0 0.0
    %2452 = vmatpush1.msra.mxu0 0.0
    %2453 = vmatprep.subr.mxu0 0.0
    %2454 = vmatpush1.msra.mxu0 0.0
    %2455 = vmatprep.subr.mxu0 0.0
    %2456 = vmatpush1.msra.mxu0 0.0
    %2457 = vmatprep.subr.mxu0 0.0
    %2458 = vmatpush1.msra.mxu0 0.0
    %2459 = vmatprep.subr.mxu0 0.0
    %2460 = vmatpush1.msra.mxu0 0.0
    %2461 = vmatprep.subr.mxu0 0.0
    %2462 = vmatpush1.msra.mxu0 0.0
    %2463 = vmatprep.subr.mxu0 0.0
    %2464 = vmatpush1.msra.mxu0 0.0
    %2465 = vmatprep.subr.mxu0 0.0
    %2466 = vmatpush1.msra.mxu0 0.0
    %2467 = vmatprep.subr.mxu0 0.0
    %2468 = vmatpush1.msra.mxu0 0.0
    %2469 = vmatprep.subr.mxu0 0.0
    %2470 = vmatpush1.msra.mxu0 0.0
    %2471 = vmatprep.subr.mxu0 0.0
    %2472 = vmatpush1.msra.mxu0 0.0
    %2473 = vmatprep.subr.mxu0 0.0
    %2474 = vmatpush1.msra.mxu0 0.0
    %2475 = vmatprep.subr.mxu0 0.0
    %2476 = vmatpush1.msra.mxu0 0.0
    %2477 = vmatprep.subr.mxu0 0.0
    %2478 = vmatpush1.msra.mxu0 0.0
    %2479 = vmatprep.subr.mxu0 0.0
    %2480 = vmatpush1.msra.mxu0 %v2444
    %2481 = vmatprep.subr.mxu0 0.0
    %2482 = vmatpush2.msra.mxu0 0.0
    %2483 = vmatprep.subr.mxu0 0.0
    %2484 = vmatpush2.msra.mxu0 0.0
    %2485 = vmatprep.subr.mxu0 0.0
    %2486 = vmatpush2.msra.mxu0 0.0
    %2487 = vmatprep.subr.mxu0 0.0
    %2488 = vmatpush2.msra.mxu0 0.0
    %2489 = vmatprep.subr.mxu0 0.0
    %2490 = vmatpush2.msra.mxu0 0.0
    %2491 = vmatprep.subr.mxu0 0.0
    %2492 = vmatpush2.msra.mxu0 0.0
    %2493 = vmatprep.subr.mxu0 0.0
    %2494 = vmatpush2.msra.mxu0 0.0
    %2495 = vmatprep.subr.mxu0 0.0
    %2496 = vmatpush2.msra.mxu0 0.0
    %2497 = vmatprep.subr.mxu0 0.0
    %2498 = vmatpush2.msra.mxu0 0.0
    %2499 = vmatprep.subr.mxu0 0.0
    %2500 = vmatpush2.msra.mxu0 0.0
    %2501 = vmatprep.subr.mxu0 0.0
    %2502 = vmatpush2.msra.mxu0 0.0
    %2503 = vmatprep.subr.mxu0 0.0
    %2504 = vmatpush2.msra.mxu0 0.0
    %2505 = vmatprep.subr.mxu0 0.0
    %2506 = vmatpush2.msra.mxu0 0.0
    %2507 = vmatprep.subr.mxu0 0.0
    %2508 = vmatpush2.msra.mxu0 0.0
    %2509 = vmatprep.subr.mxu0 0.0
    %2510 = vmatpush2.msra.mxu0 0.0
    %2511 = vmatprep.subr.mxu0 0.0
    %2512 = vmatpush2.msra.mxu0 0.0
    %2513 = vmatprep.mubr.f32.mxu0 0.0
    %2514 = vmatmul.mubr.f32.gmra.mxu0 %v2447
    %v2515 = vpop.f32.mrf.mxu0
    %v2516 = vadd.f32 0.0, %v2515
    %v2517 = vpop.f32.mrf.mxu0
    %2518 = vdwg.mxu0
    %2519 = vrot.lane.b32.xlu0 %v2259, 64
    %v2520 = vpop.permute.xlu0 %2519
    %v2523 = vsel %vm187, %v2442, 0
    %2525 = vmatprep.subr.mxu0 0.0
    %2526 = vmatpush1.msra.mxu0 0.0
    %2527 = vmatprep.subr.mxu0 0.0
    %2528 = vmatpush1.msra.mxu0 0.0
    %2529 = vmatprep.subr.mxu0 0.0
    %2530 = vmatpush1.msra.mxu0 0.0
    %2531 = vmatprep.subr.mxu0 0.0
    %2532 = vmatpush1.msra.mxu0 0.0
    %2533 = vmatprep.subr.mxu0 0.0
    %2534 = vmatpush1.msra.mxu0 0.0
    %2535 = vmatprep.subr.mxu0 0.0
    %2536 = vmatpush1.msra.mxu0 0.0
    %2537 = vmatprep.subr.mxu0 0.0
    %2538 = vmatpush1.msra.mxu0 0.0
    %2539 = vmatprep.subr.mxu0 0.0
    %2540 = vmatpush1.msra.mxu0 0.0
    %2541 = vmatprep.subr.mxu0 0.0
    %2542 = vmatpush1.msra.mxu0 0.0
    %2543 = vmatprep.subr.mxu0 0.0
    %2544 = vmatpush1.msra.mxu0 0.0
    %2545 = vmatprep.subr.mxu0 0.0
    %2546 = vmatpush1.msra.mxu0 0.0
    %2547 = vmatprep.subr.mxu0 0.0
    %2548 = vmatpush1.msra.mxu0 0.0
    %2549 = vmatprep.subr.mxu0 0.0
    %2550 = vmatpush1.msra.mxu0 0.0
    %2551 = vmatprep.subr.mxu0 0.0
    %2552 = vmatpush1.msra.mxu0 0.0
    %2553 = vmatprep.subr.mxu0 0.0
    %2554 = vmatpush1.msra.mxu0 0.0
    %2555 = vmatprep.subr.mxu0 0.0
    %2556 = vmatpush1.msra.mxu0 %v2520
    %2557 = vmatprep.subr.mxu0 0.0
    %2558 = vmatpush2.msra.mxu0 0.0
    %2559 = vmatprep.subr.mxu0 0.0
    %2560 = vmatpush2.msra.mxu0 0.0
    %2561 = vmatprep.subr.mxu0 0.0
    %2562 = vmatpush2.msra.mxu0 0.0
    %2563 = vmatprep.subr.mxu0 0.0
    %2564 = vmatpush2.msra.mxu0 0.0
    %2565 = vmatprep.subr.mxu0 0.0
    %2566 = vmatpush2.msra.mxu0 0.0
    %2567 = vmatprep.subr.mxu0 0.0
    %2568 = vmatpush2.msra.mxu0 0.0
    %2569 = vmatprep.subr.mxu0 0.0
    %2570 = vmatpush2.msra.mxu0 0.0
    %2571 = vmatprep.subr.mxu0 0.0
    %2572 = vmatpush2.msra.mxu0 0.0
    %2573 = vmatprep.subr.mxu0 0.0
    %2574 = vmatpush2.msra.mxu0 0.0
    %2575 = vmatprep.subr.mxu0 0.0
    %2576 = vmatpush2.msra.mxu0 0.0
    %2577 = vmatprep.subr.mxu0 0.0
    %2578 = vmatpush2.msra.mxu0 0.0
    %2579 = vmatprep.subr.mxu0 0.0
    %2580 = vmatpush2.msra.mxu0 0.0
    %2581 = vmatprep.subr.mxu0 0.0
    %2582 = vmatpush2.msra.mxu0 0.0
    %2583 = vmatprep.subr.mxu0 0.0
    %2584 = vmatpush2.msra.mxu0 0.0
    %2585 = vmatprep.subr.mxu0 0.0
    %2586 = vmatpush2.msra.mxu0 0.0
    %2587 = vmatprep.subr.mxu0 0.0
    %2588 = vmatpush2.msra.mxu0 0.0
    %2589 = vmatprep.mubr.f32.mxu0 0.0
    %2590 = vmatmul.mubr.f32.gmra.mxu0 %v2523
    %v2591 = vpop.f32.mrf.mxu0
    %v2592 = vadd.f32 0.0, %v2591
    %v2593 = vpop.f32.mrf.mxu0
    %2594 = vdwg.mxu0
    %2595 = vrot.lane.b32.xlu0 %v2254, 120
    %v2596 = vpop.permute.xlu0 %2595
    %2597 = vrot.lane.b32.xlu0 %v2254, 88
    %v2598 = vpop.permute.xlu0 %2597
    %v2599 = vsel %vm187, %v2596, 0
    %v2601 = vsel %vm187, %v2598, 0
    %2603 = vmatprep.subr.mxu0 0.0
    %2604 = vmatpush1.xpose.msra.mxu0 0.0
    %2605 = vmatprep.subr.mxu0 0.0
    %2606 = vmatpush1.xpose.msra.mxu0 0.0
    %2607 = vmatprep.subr.mxu0 0.0
    %2608 = vmatpush1.xpose.msra.mxu0 0.0
    %2609 = vmatprep.subr.mxu0 0.0
    %2610 = vmatpush1.xpose.msra.mxu0 0.0
    %2611 = vmatprep.subr.mxu0 0.0
    %2612 = vmatpush1.xpose.msra.mxu0 0.0
    %2613 = vmatprep.subr.mxu0 0.0
    %2614 = vmatpush1.xpose.msra.mxu0 0.0
    %2615 = vmatprep.subr.mxu0 0.0
    %2616 = vmatpush1.xpose.msra.mxu0 0.0
    %2617 = vmatprep.subr.mxu0 0.0
    %2618 = vmatpush1.xpose.msra.mxu0 0.0
    %2619 = vmatprep.subr.mxu0 0.0
    %2620 = vmatpush1.xpose.msra.mxu0 0.0
    %2621 = vmatprep.subr.mxu0 0.0
    %2622 = vmatpush1.xpose.msra.mxu0 0.0
    %2623 = vmatprep.subr.mxu0 0.0
    %2624 = vmatpush1.xpose.msra.mxu0 0.0
    %2625 = vmatprep.subr.mxu0 0.0
    %2626 = vmatpush1.xpose.msra.mxu0 0.0
    %2627 = vmatprep.subr.mxu0 0.0
    %2628 = vmatpush1.xpose.msra.mxu0 0.0
    %2629 = vmatprep.subr.mxu0 0.0
    %2630 = vmatpush1.xpose.msra.mxu0 0.0
    %2631 = vmatprep.subr.mxu0 0.0
    %2632 = vmatpush1.xpose.msra.mxu0 0.0
    %2633 = vmatprep.subr.mxu0 0.0
    %2634 = vmatpush1.xpose.msra.mxu0 %v2601
    %2635 = vmatprep.subr.mxu0 0.0
    %2636 = vmatpush2.xpose.msra.mxu0 0.0
    %2637 = vmatprep.subr.mxu0 0.0
    %2638 = vmatpush2.xpose.msra.mxu0 0.0
    %2639 = vmatprep.subr.mxu0 0.0
    %2640 = vmatpush2.xpose.msra.mxu0 0.0
    %2641 = vmatprep.subr.mxu0 0.0
    %2642 = vmatpush2.xpose.msra.mxu0 0.0
    %2643 = vmatprep.subr.mxu0 0.0
    %2644 = vmatpush2.xpose.msra.mxu0 0.0
    %2645 = vmatprep.subr.mxu0 0.0
    %2646 = vmatpush2.xpose.msra.mxu0 0.0
    %2647 = vmatprep.subr.mxu0 0.0
    %2648 = vmatpush2.xpose.msra.mxu0 0.0
    %2649 = vmatprep.subr.mxu0 0.0
    %2650 = vmatpush2.xpose.msra.mxu0 0.0
    %2651 = vmatprep.subr.mxu0 0.0
    %2652 = vmatpush2.xpose.msra.mxu0 0.0
    %2653 = vmatprep.subr.mxu0 0.0
    %2654 = vmatpush2.xpose.msra.mxu0 0.0
    %2655 = vmatprep.subr.mxu0 0.0
    %2656 = vmatpush2.xpose.msra.mxu0 0.0
    %2657 = vmatprep.subr.mxu0 0.0
    %2658 = vmatpush2.xpose.msra.mxu0 0.0
    %2659 = vmatprep.subr.mxu0 0.0
    %2660 = vmatpush2.xpose.msra.mxu0 0.0
    %2661 = vmatprep.subr.mxu0 0.0
    %2662 = vmatpush2.xpose.msra.mxu0 0.0
    %2663 = vmatprep.subr.mxu0 0.0
    %2664 = vmatpush2.xpose.msra.mxu0 0.0
    %2665 = vmatprep.subr.mxu0 0.0
    %2666 = vmatpush2.xpose.msra.mxu0 0.0
    %2667 = vmatprep.mubr.f32.mxu0 0.0
    %2668 = vmatmul.mubr.f32.gmra.mxu0 %v2599
    %v2669 = vpop.f32.mrf.mxu0
    %v2670 = vadd.f32 0.0, %v2669
    %v2671 = vpop.f32.mrf.mxu0
    %2672 = vdwg.mxu0
    %2673 = vrot.lane.b32.xlu0 %v2259, 120
    %v2674 = vpop.permute.xlu0 %2673
    %2675 = vrot.lane.b32.xlu0 %v2259, 88
    %v2676 = vpop.permute.xlu0 %2675
    %v2677 = vsel %vm187, %v2674, 0
    %v2679 = vsel %vm187, %v2676, 0
    %2681 = vmatprep.subr.mxu0 0.0
    %2682 = vmatpush1.xpose.msra.mxu0 0.0
    %2683 = vmatprep.subr.mxu0 0.0
    %2684 = vmatpush1.xpose.msra.mxu0 0.0
    %2685 = vmatprep.subr.mxu0 0.0
    %2686 = vmatpush1.xpose.msra.mxu0 0.0
    %2687 = vmatprep.subr.mxu0 0.0
    %2688 = vmatpush1.xpose.msra.mxu0 0.0
    %2689 = vmatprep.subr.mxu0 0.0
    %2690 = vmatpush1.xpose.msra.mxu0 0.0
    %2691 = vmatprep.subr.mxu0 0.0
    %2692 = vmatpush1.xpose.msra.mxu0 0.0
    %2693 = vmatprep.subr.mxu0 0.0
    %2694 = vmatpush1.xpose.msra.mxu0 0.0
    %2695 = vmatprep.subr.mxu0 0.0
    %2696 = vmatpush1.xpose.msra.mxu0 0.0
    %2697 = vmatprep.subr.mxu0 0.0
    %2698 = vmatpush1.xpose.msra.mxu0 0.0
    %2699 = vmatprep.subr.mxu0 0.0
    %2700 = vmatpush1.xpose.msra.mxu0 0.0
    %2701 = vmatprep.subr.mxu0 0.0
    %2702 = vmatpush1.xpose.msra.mxu0 0.0
    %2703 = vmatprep.subr.mxu0 0.0
    %2704 = vmatpush1.xpose.msra.mxu0 0.0
    %2705 = vmatprep.subr.mxu0 0.0
    %2706 = vmatpush1.xpose.msra.mxu0 0.0
    %2707 = vmatprep.subr.mxu0 0.0
    %2708 = vmatpush1.xpose.msra.mxu0 0.0
    %2709 = vmatprep.subr.mxu0 0.0
    %2710 = vmatpush1.xpose.msra.mxu0 0.0
    %2711 = vmatprep.subr.mxu0 0.0
    %2712 = vmatpush1.xpose.msra.mxu0 %v2679
    %2713 = vmatprep.subr.mxu0 0.0
    %2714 = vmatpush2.xpose.msra.mxu0 0.0
    %2715 = vmatprep.subr.mxu0 0.0
    %2716 = vmatpush2.xpose.msra.mxu0 0.0
    %2717 = vmatprep.subr.mxu0 0.0
    %2718 = vmatpush2.xpose.msra.mxu0 0.0
    %2719 = vmatprep.subr.mxu0 0.0
    %2720 = vmatpush2.xpose.msra.mxu0 0.0
    %2721 = vmatprep.subr.mxu0 0.0
    %2722 = vmatpush2.xpose.msra.mxu0 0.0
    %2723 = vmatprep.subr.mxu0 0.0
    %2724 = vmatpush2.xpose.msra.mxu0 0.0
    %2725 = vmatprep.subr.mxu0 0.0
    %2726 = vmatpush2.xpose.msra.mxu0 0.0
    %2727 = vmatprep.subr.mxu0 0.0
    %2728 = vmatpush2.xpose.msra.mxu0 0.0
    %2729 = vmatprep.subr.mxu0 0.0
    %2730 = vmatpush2.xpose.msra.mxu0 0.0
    %2731 = vmatprep.subr.mxu0 0.0
    %2732 = vmatpush2.xpose.msra.mxu0 0.0
    %2733 = vmatprep.subr.mxu0 0.0
    %2734 = vmatpush2.xpose.msra.mxu0 0.0
    %2735 = vmatprep.subr.mxu0 0.0
    %2736 = vmatpush2.xpose.msra.mxu0 0.0
    %2737 = vmatprep.subr.mxu0 0.0
    %2738 = vmatpush2.xpose.msra.mxu0 0.0
    %2739 = vmatprep.subr.mxu0 0.0
    %2740 = vmatpush2.xpose.msra.mxu0 0.0
    %2741 = vmatprep.subr.mxu0 0.0
    %2742 = vmatpush2.xpose.msra.mxu0 0.0
    %2743 = vmatprep.subr.mxu0 0.0
    %2744 = vmatpush2.xpose.msra.mxu0 0.0
    %2745 = vmatprep.mubr.f32.mxu0 0.0
    %2746 = vmatmul.mubr.f32.gmra.mxu0 %v2677
    %v2747 = vpop.f32.mrf.mxu0
    %v2748 = vadd.f32 0.0, %v2747
    %v2749 = vpop.f32.mrf.mxu0
    %2750 = vdwg.mxu0
    %v2751 = vsel %vm187, %v2670, -inf
    %2752 = vmax.xlane.f32.xlu0 %v2751
    %v2753 = vpop.xlane.xlu0 %2752
    %v2754 = vsel %vm187, %v2748, -inf
    %2755 = vmax.xlane.f32.xlu0 %v2754
    %v2756 = vpop.xlane.xlu0 %2755
    %v2757 = vsub.f32 %v2670, %v2753
    %v2758 = vsub.f32 %v2748, %v2756
    %v2759 = vmul.f32 %v2757, 1.442695
    %v2760 = vpow.pop %v2759
    %v2761 = vmul.f32 %v2758, 1.442695
    %v2762 = vpow.pop %v2761
    %v2763 = vsel %vm187, %v2760, 0.0
    %2764 = vadd.xlane.f32.xlu0 %v2763
    %v2765 = vpop.xlane.xlu0 %2764
    %v2766 = vsel %vm187, %v2762, 0.0
    %2767 = vadd.xlane.f32.xlu0 %v2766
    %v2768 = vpop.xlane.xlu0 %2767
    %v2769 = vrcp.pop %v2765
    %v2770 = vmul.f32 %v2760, %v2769
    %v2771 = vrcp.pop %v2768
    %v2772 = vmul.f32 %v2762, %v2771
    %2773 = vrot.lane.b32.xlu0 %v2254, 56
    %v2774 = vpop.permute.xlu0 %2773
    %v2777 = vsel %vm187, %v2770, 0
    %2779 = vmatprep.subr.mxu0 0.0
    %2780 = vmatpush1.msra.mxu0 0.0
    %2781 = vmatprep.subr.mxu0 0.0
    %2782 = vmatpush1.msra.mxu0 0.0
    %2783 = vmatprep.subr.mxu0 0.0
    %2784 = vmatpush1.msra.mxu0 0.0
    %2785 = vmatprep.subr.mxu0 0.0
    %2786 = vmatpush1.msra.mxu0 0.0
    %2787 = vmatprep.subr.mxu0 0.0
    %2788 = vmatpush1.msra.mxu0 0.0
    %2789 = vmatprep.subr.mxu0 0.0
    %2790 = vmatpush1.msra.mxu0 0.0
    %2791 = vmatprep.subr.mxu0 0.0
    %2792 = vmatpush1.msra.mxu0 0.0
    %2793 = vmatprep.subr.mxu0 0.0
    %2794 = vmatpush1.msra.mxu0 0.0
    %2795 = vmatprep.subr.mxu0 0.0
    %2796 = vmatpush1.msra.mxu0 0.0
    %2797 = vmatprep.subr.mxu0 0.0
    %2798 = vmatpush1.msra.mxu0 0.0
    %2799 = vmatprep.subr.mxu0 0.0
    %2800 = vmatpush1.msra.mxu0 0.0
    %2801 = vmatprep.subr.mxu0 0.0
    %2802 = vmatpush1.msra.mxu0 0.0
    %2803 = vmatprep.subr.mxu0 0.0
    %2804 = vmatpush1.msra.mxu0 0.0
    %2805 = vmatprep.subr.mxu0 0.0
    %2806 = vmatpush1.msra.mxu0 0.0
    %2807 = vmatprep.subr.mxu0 0.0
    %2808 = vmatpush1.msra.mxu0 0.0
    %2809 = vmatprep.subr.mxu0 0.0
    %2810 = vmatpush1.msra.mxu0 %v2774
    %2811 = vmatprep.subr.mxu0 0.0
    %2812 = vmatpush2.msra.mxu0 0.0
    %2813 = vmatprep.subr.mxu0 0.0
    %2814 = vmatpush2.msra.mxu0 0.0
    %2815 = vmatprep.subr.mxu0 0.0
    %2816 = vmatpush2.msra.mxu0 0.0
    %2817 = vmatprep.subr.mxu0 0.0
    %2818 = vmatpush2.msra.mxu0 0.0
    %2819 = vmatprep.subr.mxu0 0.0
    %2820 = vmatpush2.msra.mxu0 0.0
    %2821 = vmatprep.subr.mxu0 0.0
    %2822 = vmatpush2.msra.mxu0 0.0
    %2823 = vmatprep.subr.mxu0 0.0
    %2824 = vmatpush2.msra.mxu0 0.0
    %2825 = vmatprep.subr.mxu0 0.0
    %2826 = vmatpush2.msra.mxu0 0.0
    %2827 = vmatprep.subr.mxu0 0.0
    %2828 = vmatpush2.msra.mxu0 0.0
    %2829 = vmatprep.subr.mxu0 0.0
    %2830 = vmatpush2.msra.mxu0 0.0
    %2831 = vmatprep.subr.mxu0 0.0
    %2832 = vmatpush2.msra.mxu0 0.0
    %2833 = vmatprep.subr.mxu0 0.0
    %2834 = vmatpush2.msra.mxu0 0.0
    %2835 = vmatprep.subr.mxu0 0.0
    %2836 = vmatpush2.msra.mxu0 0.0
    %2837 = vmatprep.subr.mxu0 0.0
    %2838 = vmatpush2.msra.mxu0 0.0
    %2839 = vmatprep.subr.mxu0 0.0
    %2840 = vmatpush2.msra.mxu0 0.0
    %2841 = vmatprep.subr.mxu0 0.0
    %2842 = vmatpush2.msra.mxu0 0.0
    %2843 = vmatprep.mubr.f32.mxu0 0.0
    %2844 = vmatmul.mubr.f32.gmra.mxu0 %v2777
    %v2845 = vpop.f32.mrf.mxu0
    %v2846 = vadd.f32 0.0, %v2845
    %v2847 = vpop.f32.mrf.mxu0
    %2848 = vdwg.mxu0
    %2849 = vrot.lane.b32.xlu0 %v2259, 56
    %v2850 = vpop.permute.xlu0 %2849
    %v2853 = vsel %vm187, %v2772, 0
    %2855 = vmatprep.subr.mxu0 0.0
    %2856 = vmatpush1.msra.mxu0 0.0
    %2857 = vmatprep.subr.mxu0 0.0
    %2858 = vmatpush1.msra.mxu0 0.0
    %2859 = vmatprep.subr.mxu0 0.0
    %2860 = vmatpush1.msra.mxu0 0.0
    %2861 = vmatprep.subr.mxu0 0.0
    %2862 = vmatpush1.msra.mxu0 0.0
    %2863 = vmatprep.subr.mxu0 0.0
    %2864 = vmatpush1.msra.mxu0 0.0
    %2865 = vmatprep.subr.mxu0 0.0
    %2866 = vmatpush1.msra.mxu0 0.0
    %2867 = vmatprep.subr.mxu0 0.0
    %2868 = vmatpush1.msra.mxu0 0.0
    %2869 = vmatprep.subr.mxu0 0.0
    %2870 = vmatpush1.msra.mxu0 0.0
    %2871 = vmatprep.subr.mxu0 0.0
    %2872 = vmatpush1.msra.mxu0 0.0
    %2873 = vmatprep.subr.mxu0 0.0
    %2874 = vmatpush1.msra.mxu0 0.0
    %2875 = vmatprep.subr.mxu0 0.0
    %2876 = vmatpush1.msra.mxu0 0.0
    %2877 = vmatprep.subr.mxu0 0.0
    %2878 = vmatpush1.msra.mxu0 0.0
    %2879 = vmatprep.subr.mxu0 0.0
    %2880 = vmatpush1.msra.mxu0 0.0
    %2881 = vmatprep.subr.mxu0 0.0
    %2882 = vmatpush1.msra.mxu0 0.0
    %2883 = vmatprep.subr.mxu0 0.0
    %2884 = vmatpush1.msra.mxu0 0.0
    %2885 = vmatprep.subr.mxu0 0.0
    %2886 = vmatpush1.msra.mxu0 %v2850
    %2887 = vmatprep.subr.mxu0 0.0
    %2888 = vmatpush2.msra.mxu0 0.0
    %2889 = vmatprep.subr.mxu0 0.0
    %2890 = vmatpush2.msra.mxu0 0.0
    %2891 = vmatprep.subr.mxu0 0.0
    %2892 = vmatpush2.msra.mxu0 0.0
    %2893 = vmatprep.subr.mxu0 0.0
    %2894 = vmatpush2.msra.mxu0 0.0
    %2895 = vmatprep.subr.mxu0 0.0
    %2896 = vmatpush2.msra.mxu0 0.0
    %2897 = vmatprep.subr.mxu0 0.0
    %2898 = vmatpush2.msra.mxu0 0.0
    %2899 = vmatprep.subr.mxu0 0.0
    %2900 = vmatpush2.msra.mxu0 0.0
    %2901 = vmatprep.subr.mxu0 0.0
    %2902 = vmatpush2.msra.mxu0 0.0
    %2903 = vmatprep.subr.mxu0 0.0
    %2904 = vmatpush2.msra.mxu0 0.0
    %2905 = vmatprep.subr.mxu0 0.0
    %2906 = vmatpush2.msra.mxu0 0.0
    %2907 = vmatprep.subr.mxu0 0.0
    %2908 = vmatpush2.msra.mxu0 0.0
    %2909 = vmatprep.subr.mxu0 0.0
    %2910 = vmatpush2.msra.mxu0 0.0
    %2911 = vmatprep.subr.mxu0 0.0
    %2912 = vmatpush2.msra.mxu0 0.0
    %2913 = vmatprep.subr.mxu0 0.0
    %2914 = vmatpush2.msra.mxu0 0.0
    %2915 = vmatprep.subr.mxu0 0.0
    %2916 = vmatpush2.msra.mxu0 0.0
    %2917 = vmatprep.subr.mxu0 0.0
    %2918 = vmatpush2.msra.mxu0 0.0
    %2919 = vmatprep.mubr.f32.mxu0 0.0
    %2920 = vmatmul.mubr.f32.gmra.mxu0 %v2853
    %v2921 = vpop.f32.mrf.mxu0
    %v2922 = vadd.f32 0.0, %v2921
    %v2923 = vpop.f32.mrf.mxu0
    %2924 = vdwg.mxu0
    %v2926 = vsel %vm187, %v2846, 0
    %v2929 = vsel %vm187, %v2922, 0
    %2931 = vmatprep.subr.mxu0 0.0
    %2932 = vmatpush1.msra.mxu0 0.0
    %2933 = vmatprep.subr.mxu0 0.0
    %2934 = vmatpush1.msra.mxu0 0.0
    %2935 = vmatprep.subr.mxu0 0.0
    %2936 = vmatpush1.msra.mxu0 0.0
    %2937 = vmatprep.subr.mxu0 0.0
    %2938 = vmatpush1.msra.mxu0 0.0
    %2939 = vmatprep.subr.mxu0 0.0
    %2940 = vmatpush1.msra.mxu0 0.0
    %2941 = vmatprep.subr.mxu0 0.0
    %2942 = vmatpush1.msra.mxu0 0.0
    %2943 = vmatprep.subr.mxu0 0.0
    %2944 = vmatpush1.msra.mxu0 0.0
    %2945 = vmatprep.subr.mxu0 0.0
    %2946 = vmatpush1.msra.mxu0 0.0
    %2947 = vmatprep.subr.mxu0 0.0
    %2948 = vmatpush1.msra.mxu0 0.0
    %2949 = vmatprep.subr.mxu0 0.0
    %2950 = vmatpush1.msra.mxu0 0.0
    %2951 = vmatprep.subr.mxu0 0.0
    %2952 = vmatpush1.msra.mxu0 0.0
    %2953 = vmatprep.subr.mxu0 0.0
    %2954 = vmatpush1.msra.mxu0 0.0
    %2955 = vmatprep.subr.mxu0 0.0
    %2956 = vmatpush1.msra.mxu0 0.0
    %2957 = vmatprep.subr.mxu0 0.0
    %2958 = vmatpush1.msra.mxu0 0.0
    %2959 = vmatprep.subr.mxu0 0.0
    %2960 = vmatpush1.msra.mxu0 0.0
    %2961 = vmatprep.subr.mxu0 0.0
    %2962 = vmatpush1.msra.mxu0 %v2264
    %2963 = vmatprep.subr.mxu0 0.0
    %2964 = vmatpush2.msra.mxu0 0.0
    %2965 = vmatprep.subr.mxu0 0.0
    %2966 = vmatpush2.msra.mxu0 0.0
    %2967 = vmatprep.subr.mxu0 0.0
    %2968 = vmatpush2.msra.mxu0 0.0
    %2969 = vmatprep.subr.mxu0 0.0
    %2970 = vmatpush2.msra.mxu0 0.0
    %2971 = vmatprep.subr.mxu0 0.0
    %2972 = vmatpush2.msra.mxu0 0.0
    %2973 = vmatprep.subr.mxu0 0.0
    %2974 = vmatpush2.msra.mxu0 0.0
    %2975 = vmatprep.subr.mxu0 0.0
    %2976 = vmatpush2.msra.mxu0 0.0
    %2977 = vmatprep.subr.mxu0 0.0
    %2978 = vmatpush2.msra.mxu0 0.0
    %2979 = vmatprep.subr.mxu0 0.0
    %2980 = vmatpush2.msra.mxu0 0.0
    %2981 = vmatprep.subr.mxu0 0.0
    %2982 = vmatpush2.msra.mxu0 0.0
    %2983 = vmatprep.subr.mxu0 0.0
    %2984 = vmatpush2.msra.mxu0 0.0
    %2985 = vmatprep.subr.mxu0 0.0
    %2986 = vmatpush2.msra.mxu0 0.0
    %2987 = vmatprep.subr.mxu0 0.0
    %2988 = vmatpush2.msra.mxu0 0.0
    %2989 = vmatprep.subr.mxu0 0.0
    %2990 = vmatpush2.msra.mxu0 0.0
    %2991 = vmatprep.subr.mxu0 0.0
    %2992 = vmatpush2.msra.mxu0 0.0
    %2993 = vmatprep.subr.mxu0 0.0
    %2994 = vmatpush2.msra.mxu0 0.0
    %2995 = vmatprep.mubr.f32.mxu0 0.0
    %2996 = vmatmul.mubr.f32.gmra.mxu0 %v2926
    %v2997 = vpop.f32.mrf.mxu0
    %v2998 = vadd.f32 0.0, %v2997
    %v2999 = vpop.f32.mrf.mxu0
    %3000 = vmatprep.mubr.f32.mxu0 0.0
    %3001 = vmatmul.mubr.f32.gmra.mxu0 %v2929
    %v3002 = vpop.f32.mrf.mxu0
    %v3003 = vadd.f32 0.0, %v3002
    %v3004 = vpop.f32.mrf.mxu0
    %3005 = vdwg.mxu0
    %v3007 = vsel %vm187, %v2516, 0
    %v3010 = vsel %vm187, %v2592, 0
    %3012 = vmatprep.subr.mxu0 0.0
    %3013 = vmatpush1.msra.mxu0 0.0
    %3014 = vmatprep.subr.mxu0 0.0
    %3015 = vmatpush1.msra.mxu0 0.0
    %3016 = vmatprep.subr.mxu0 0.0
    %3017 = vmatpush1.msra.mxu0 0.0
    %3018 = vmatprep.subr.mxu0 0.0
    %3019 = vmatpush1.msra.mxu0 0.0
    %3020 = vmatprep.subr.mxu0 0.0
    %3021 = vmatpush1.msra.mxu0 0.0
    %3022 = vmatprep.subr.mxu0 0.0
    %3023 = vmatpush1.msra.mxu0 0.0
    %3024 = vmatprep.subr.mxu0 0.0
    %3025 = vmatpush1.msra.mxu0 0.0
    %3026 = vmatprep.subr.mxu0 0.0
    %3027 = vmatpush1.msra.mxu0 0.0
    %3028 = vmatprep.subr.mxu0 0.0
    %3029 = vmatpush1.msra.mxu0 0.0
    %3030 = vmatprep.subr.mxu0 0.0
    %3031 = vmatpush1.msra.mxu0 0.0
    %3032 = vmatprep.subr.mxu0 0.0
    %3033 = vmatpush1.msra.mxu0 0.0
    %3034 = vmatprep.subr.mxu0 0.0
    %3035 = vmatpush1.msra.mxu0 0.0
    %3036 = vmatprep.subr.mxu0 0.0
    %3037 = vmatpush1.msra.mxu0 0.0
    %3038 = vmatprep.subr.mxu0 0.0
    %3039 = vmatpush1.msra.mxu0 0.0
    %3040 = vmatprep.subr.mxu0 0.0
    %3041 = vmatpush1.msra.mxu0 0.0
    %3042 = vmatprep.subr.mxu0 0.0
    %3043 = vmatpush1.msra.mxu0 %v2263
    %3044 = vmatprep.subr.mxu0 0.0
    %3045 = vmatpush2.msra.mxu0 0.0
    %3046 = vmatprep.subr.mxu0 0.0
    %3047 = vmatpush2.msra.mxu0 0.0
    %3048 = vmatprep.subr.mxu0 0.0
    %3049 = vmatpush2.msra.mxu0 0.0
    %3050 = vmatprep.subr.mxu0 0.0
    %3051 = vmatpush2.msra.mxu0 0.0
    %3052 = vmatprep.subr.mxu0 0.0
    %3053 = vmatpush2.msra.mxu0 0.0
    %3054 = vmatprep.subr.mxu0 0.0
    %3055 = vmatpush2.msra.mxu0 0.0
    %3056 = vmatprep.subr.mxu0 0.0
    %3057 = vmatpush2.msra.mxu0 0.0
    %3058 = vmatprep.subr.mxu0 0.0
    %3059 = vmatpush2.msra.mxu0 0.0
    %3060 = vmatprep.subr.mxu0 0.0
    %3061 = vmatpush2.msra.mxu0 0.0
    %3062 = vmatprep.subr.mxu0 0.0
    %3063 = vmatpush2.msra.mxu0 0.0
    %3064 = vmatprep.subr.mxu0 0.0
    %3065 = vmatpush2.msra.mxu0 0.0
    %3066 = vmatprep.subr.mxu0 0.0
    %3067 = vmatpush2.msra.mxu0 0.0
    %3068 = vmatprep.subr.mxu0 0.0
    %3069 = vmatpush2.msra.mxu0 0.0
    %3070 = vmatprep.subr.mxu0 0.0
    %3071 = vmatpush2.msra.mxu0 0.0
    %3072 = vmatprep.subr.mxu0 0.0
    %3073 = vmatpush2.msra.mxu0 0.0
    %3074 = vmatprep.subr.mxu0 0.0
    %3075 = vmatpush2.msra.mxu0 0.0
    %3076 = vmatprep.mubr.f32.mxu0 0.0
    %3077 = vmatmul.mubr.f32.gmra.mxu0 %v3007
    %v3078 = vpop.f32.mrf.mxu0
    %v3079 = vadd.f32 %v2998, %v3078
    %v3080 = vpop.f32.mrf.mxu0
    %3081 = vmatprep.mubr.f32.mxu0 0.0
    %3082 = vmatmul.mubr.f32.gmra.mxu0 %v3010
    %v3083 = vpop.f32.mrf.mxu0
    %v3084 = vadd.f32 %v3003, %v3083
    %v3085 = vpop.f32.mrf.mxu0
    %3086 = vdwg.mxu0
    %3087 = vrot.lane.b32.xlu0 %v2254, 112
    %v3088 = vpop.permute.xlu0 %3087
    %3089 = vrot.lane.b32.xlu0 %v2254, 80
    %v3090 = vpop.permute.xlu0 %3089
    %v3091 = vsel %vm187, %v3088, 0
    %v3093 = vsel %vm187, %v3090, 0
    %3095 = vmatprep.subr.mxu0 0.0
    %3096 = vmatpush1.xpose.msra.mxu0 0.0
    %3097 = vmatprep.subr.mxu0 0.0
    %3098 = vmatpush1.xpose.msra.mxu0 0.0
    %3099 = vmatprep.subr.mxu0 0.0
    %3100 = vmatpush1.xpose.msra.mxu0 0.0
    %3101 = vmatprep.subr.mxu0 0.0
    %3102 = vmatpush1.xpose.msra.mxu0 0.0
    %3103 = vmatprep.subr.mxu0 0.0
    %3104 = vmatpush1.xpose.msra.mxu0 0.0
    %3105 = vmatprep.subr.mxu0 0.0
    %3106 = vmatpush1.xpose.msra.mxu0 0.0
    %3107 = vmatprep.subr.mxu0 0.0
    %3108 = vmatpush1.xpose.msra.mxu0 0.0
    %3109 = vmatprep.subr.mxu0 0.0
    %3110 = vmatpush1.xpose.msra.mxu0 0.0
    %3111 = vmatprep.subr.mxu0 0.0
    %3112 = vmatpush1.xpose.msra.mxu0 0.0
    %3113 = vmatprep.subr.mxu0 0.0
    %3114 = vmatpush1.xpose.msra.mxu0 0.0
    %3115 = vmatprep.subr.mxu0 0.0
    %3116 = vmatpush1.xpose.msra.mxu0 0.0
    %3117 = vmatprep.subr.mxu0 0.0
    %3118 = vmatpush1.xpose.msra.mxu0 0.0
    %3119 = vmatprep.subr.mxu0 0.0
    %3120 = vmatpush1.xpose.msra.mxu0 0.0
    %3121 = vmatprep.subr.mxu0 0.0
    %3122 = vmatpush1.xpose.msra.mxu0 0.0
    %3123 = vmatprep.subr.mxu0 0.0
    %3124 = vmatpush1.xpose.msra.mxu0 0.0
    %3125 = vmatprep.subr.mxu0 0.0
    %3126 = vmatpush1.xpose.msra.mxu0 %v3093
    %3127 = vmatprep.subr.mxu0 0.0
    %3128 = vmatpush2.xpose.msra.mxu0 0.0
    %3129 = vmatprep.subr.mxu0 0.0
    %3130 = vmatpush2.xpose.msra.mxu0 0.0
    %3131 = vmatprep.subr.mxu0 0.0
    %3132 = vmatpush2.xpose.msra.mxu0 0.0
    %3133 = vmatprep.subr.mxu0 0.0
    %3134 = vmatpush2.xpose.msra.mxu0 0.0
    %3135 = vmatprep.subr.mxu0 0.0
    %3136 = vmatpush2.xpose.msra.mxu0 0.0
    %3137 = vmatprep.subr.mxu0 0.0
    %3138 = vmatpush2.xpose.msra.mxu0 0.0
    %3139 = vmatprep.subr.mxu0 0.0
    %3140 = vmatpush2.xpose.msra.mxu0 0.0
    %3141 = vmatprep.subr.mxu0 0.0
    %3142 = vmatpush2.xpose.msra.mxu0 0.0
    %3143 = vmatprep.subr.mxu0 0.0
    %3144 = vmatpush2.xpose.msra.mxu0 0.0
    %3145 = vmatprep.subr.mxu0 0.0
    %3146 = vmatpush2.xpose.msra.mxu0 0.0
    %3147 = vmatprep.subr.mxu0 0.0
    %3148 = vmatpush2.xpose.msra.mxu0 0.0
    %3149 = vmatprep.subr.mxu0 0.0
    %3150 = vmatpush2.xpose.msra.mxu0 0.0
    %3151 = vmatprep.subr.mxu0 0.0
    %3152 = vmatpush2.xpose.msra.mxu0 0.0
    %3153 = vmatprep.subr.mxu0 0.0
    %3154 = vmatpush2.xpose.msra.mxu0 0.0
    %3155 = vmatprep.subr.mxu0 0.0
    %3156 = vmatpush2.xpose.msra.mxu0 0.0
    %3157 = vmatprep.subr.mxu0 0.0
    %3158 = vmatpush2.xpose.msra.mxu0 0.0
    %3159 = vmatprep.mubr.f32.mxu0 0.0
    %3160 = vmatmul.mubr.f32.gmra.mxu0 %v3091
    %v3161 = vpop.f32.mrf.mxu0
    %v3162 = vadd.f32 0.0, %v3161
    %v3163 = vpop.f32.mrf.mxu0
    %3164 = vdwg.mxu0
    %3165 = vrot.lane.b32.xlu0 %v2259, 112
    %v3166 = vpop.permute.xlu0 %3165
    %3167 = vrot.lane.b32.xlu0 %v2259, 80
    %v3168 = vpop.permute.xlu0 %3167
    %v3169 = vsel %vm187, %v3166, 0
    %v3171 = vsel %vm187, %v3168, 0
    %3173 = vmatprep.subr.mxu0 0.0
    %3174 = vmatpush1.xpose.msra.mxu0 0.0
    %3175 = vmatprep.subr.mxu0 0.0
    %3176 = vmatpush1.xpose.msra.mxu0 0.0
    %3177 = vmatprep.subr.mxu0 0.0
    %3178 = vmatpush1.xpose.msra.mxu0 0.0
    %3179 = vmatprep.subr.mxu0 0.0
    %3180 = vmatpush1.xpose.msra.mxu0 0.0
    %3181 = vmatprep.subr.mxu0 0.0
    %3182 = vmatpush1.xpose.msra.mxu0 0.0
    %3183 = vmatprep.subr.mxu0 0.0
    %3184 = vmatpush1.xpose.msra.mxu0 0.0
    %3185 = vmatprep.subr.mxu0 0.0
    %3186 = vmatpush1.xpose.msra.mxu0 0.0
    %3187 = vmatprep.subr.mxu0 0.0
    %3188 = vmatpush1.xpose.msra.mxu0 0.0
    %3189 = vmatprep.subr.mxu0 0.0
    %3190 = vmatpush1.xpose.msra.mxu0 0.0
    %3191 = vmatprep.subr.mxu0 0.0
    %3192 = vmatpush1.xpose.msra.mxu0 0.0
    %3193 = vmatprep.subr.mxu0 0.0
    %3194 = vmatpush1.xpose.msra.mxu0 0.0
    %3195 = vmatprep.subr.mxu0 0.0
    %3196 = vmatpush1.xpose.msra.mxu0 0.0
    %3197 = vmatprep.subr.mxu0 0.0
    %3198 = vmatpush1.xpose.msra.mxu0 0.0
    %3199 = vmatprep.subr.mxu0 0.0
    %3200 = vmatpush1.xpose.msra.mxu0 0.0
    %3201 = vmatprep.subr.mxu0 0.0
    %3202 = vmatpush1.xpose.msra.mxu0 0.0
    %3203 = vmatprep.subr.mxu0 0.0
    %3204 = vmatpush1.xpose.msra.mxu0 %v3171
    %3205 = vmatprep.subr.mxu0 0.0
    %3206 = vmatpush2.xpose.msra.mxu0 0.0
    %3207 = vmatprep.subr.mxu0 0.0
    %3208 = vmatpush2.xpose.msra.mxu0 0.0
    %3209 = vmatprep.subr.mxu0 0.0
    %3210 = vmatpush2.xpose.msra.mxu0 0.0
    %3211 = vmatprep.subr.mxu0 0.0
    %3212 = vmatpush2.xpose.msra.mxu0 0.0
    %3213 = vmatprep.subr.mxu0 0.0
    %3214 = vmatpush2.xpose.msra.mxu0 0.0
    %3215 = vmatprep.subr.mxu0 0.0
    %3216 = vmatpush2.xpose.msra.mxu0 0.0
    %3217 = vmatprep.subr.mxu0 0.0
    %3218 = vmatpush2.xpose.msra.mxu0 0.0
    %3219 = vmatprep.subr.mxu0 0.0
    %3220 = vmatpush2.xpose.msra.mxu0 0.0
    %3221 = vmatprep.subr.mxu0 0.0
    %3222 = vmatpush2.xpose.msra.mxu0 0.0
    %3223 = vmatprep.subr.mxu0 0.0
    %3224 = vmatpush2.xpose.msra.mxu0 0.0
    %3225 = vmatprep.subr.mxu0 0.0
    %3226 = vmatpush2.xpose.msra.mxu0 0.0
    %3227 = vmatprep.subr.mxu0 0.0
    %3228 = vmatpush2.xpose.msra.mxu0 0.0
    %3229 = vmatprep.subr.mxu0 0.0
    %3230 = vmatpush2.xpose.msra.mxu0 0.0
    %3231 = vmatprep.subr.mxu0 0.0
    %3232 = vmatpush2.xpose.msra.mxu0 0.0
    %3233 = vmatprep.subr.mxu0 0.0
    %3234 = vmatpush2.xpose.msra.mxu0 0.0
    %3235 = vmatprep.subr.mxu0 0.0
    %3236 = vmatpush2.xpose.msra.mxu0 0.0
    %3237 = vmatprep.mubr.f32.mxu0 0.0
    %3238 = vmatmul.mubr.f32.gmra.mxu0 %v3169
    %v3239 = vpop.f32.mrf.mxu0
    %v3240 = vadd.f32 0.0, %v3239
    %v3241 = vpop.f32.mrf.mxu0
    %3242 = vdwg.mxu0
    %v3243 = vsel %vm187, %v3162, -inf
    %3244 = vmax.xlane.f32.xlu0 %v3243
    %v3245 = vpop.xlane.xlu0 %3244
    %v3246 = vsel %vm187, %v3240, -inf
    %3247 = vmax.xlane.f32.xlu0 %v3246
    %v3248 = vpop.xlane.xlu0 %3247
    %v3249 = vsub.f32 %v3162, %v3245
    %v3250 = vsub.f32 %v3240, %v3248
    %v3251 = vmul.f32 %v3249, 1.442695
    %v3252 = vpow.pop %v3251
    %v3253 = vmul.f32 %v3250, 1.442695
    %v3254 = vpow.pop %v3253
    %v3255 = vsel %vm187, %v3252, 0.0
    %3256 = vadd.xlane.f32.xlu0 %v3255
    %v3257 = vpop.xlane.xlu0 %3256
    %v3258 = vsel %vm187, %v3254, 0.0
    %3259 = vadd.xlane.f32.xlu0 %v3258
    %v3260 = vpop.xlane.xlu0 %3259
    %v3261 = vrcp.pop %v3257
    %v3262 = vmul.f32 %v3252, %v3261
    %v3263 = vrcp.pop %v3260
    %v3264 = vmul.f32 %v3254, %v3263
    %3265 = vrot.lane.b32.xlu0 %v2254, 48
    %v3266 = vpop.permute.xlu0 %3265
    %v3269 = vsel %vm187, %v3262, 0
    %3271 = vmatprep.subr.mxu0 0.0
    %3272 = vmatpush1.msra.mxu0 0.0
    %3273 = vmatprep.subr.mxu0 0.0
    %3274 = vmatpush1.msra.mxu0 0.0
    %3275 = vmatprep.subr.mxu0 0.0
    %3276 = vmatpush1.msra.mxu0 0.0
    %3277 = vmatprep.subr.mxu0 0.0
    %3278 = vmatpush1.msra.mxu0 0.0
    %3279 = vmatprep.subr.mxu0 0.0
    %3280 = vmatpush1.msra.mxu0 0.0
    %3281 = vmatprep.subr.mxu0 0.0
    %3282 = vmatpush1.msra.mxu0 0.0
    %3283 = vmatprep.subr.mxu0 0.0
    %3284 = vmatpush1.msra.mxu0 0.0
    %3285 = vmatprep.subr.mxu0 0.0
    %3286 = vmatpush1.msra.mxu0 0.0
    %3287 = vmatprep.subr.mxu0 0.0
    %3288 = vmatpush1.msra.mxu0 0.0
    %3289 = vmatprep.subr.mxu0 0.0
    %3290 = vmatpush1.msra.mxu0 0.0
    %3291 = vmatprep.subr.mxu0 0.0
    %3292 = vmatpush1.msra.mxu0 0.0
    %3293 = vmatprep.subr.mxu0 0.0
    %3294 = vmatpush1.msra.mxu0 0.0
    %3295 = vmatprep.subr.mxu0 0.0
    %3296 = vmatpush1.msra.mxu0 0.0
    %3297 = vmatprep.subr.mxu0 0.0
    %3298 = vmatpush1.msra.mxu0 0.0
    %3299 = vmatprep.subr.mxu0 0.0
    %3300 = vmatpush1.msra.mxu0 0.0
    %3301 = vmatprep.subr.mxu0 0.0
    %3302 = vmatpush1.msra.mxu0 %v3266
    %3303 = vmatprep.subr.mxu0 0.0
    %3304 = vmatpush2.msra.mxu0 0.0
    %3305 = vmatprep.subr.mxu0 0.0
    %3306 = vmatpush2.msra.mxu0 0.0
    %3307 = vmatprep.subr.mxu0 0.0
    %3308 = vmatpush2.msra.mxu0 0.0
    %3309 = vmatprep.subr.mxu0 0.0
    %3310 = vmatpush2.msra.mxu0 0.0
    %3311 = vmatprep.subr.mxu0 0.0
    %3312 = vmatpush2.msra.mxu0 0.0
    %3313 = vmatprep.subr.mxu0 0.0
    %3314 = vmatpush2.msra.mxu0 0.0
    %3315 = vmatprep.subr.mxu0 0.0
    %3316 = vmatpush2.msra.mxu0 0.0
    %3317 = vmatprep.subr.mxu0 0.0
    %3318 = vmatpush2.msra.mxu0 0.0
    %3319 = vmatprep.subr.mxu0 0.0
    %3320 = vmatpush2.msra.mxu0 0.0
    %3321 = vmatprep.subr.mxu0 0.0
    %3322 = vmatpush2.msra.mxu0 0.0
    %3323 = vmatprep.subr.mxu0 0.0
    %3324 = vmatpush2.msra.mxu0 0.0
    %3325 = vmatprep.subr.mxu0 0.0
    %3326 = vmatpush2.msra.mxu0 0.0
    %3327 = vmatprep.subr.mxu0 0.0
    %3328 = vmatpush2.msra.mxu0 0.0
    %3329 = vmatprep.subr.mxu0 0.0
    %3330 = vmatpush2.msra.mxu0 0.0
    %3331 = vmatprep.subr.mxu0 0.0
    %3332 = vmatpush2.msra.mxu0 0.0
    %3333 = vmatprep.subr.mxu0 0.0
    %3334 = vmatpush2.msra.mxu0 0.0
    %3335 = vmatprep.mubr.f32.mxu0 0.0
    %3336 = vmatmul.mubr.f32.gmra.mxu0 %v3269
    %v3337 = vpop.f32.mrf.mxu0
    %v3338 = vadd.f32 0.0, %v3337
    %v3339 = vpop.f32.mrf.mxu0
    %3340 = vdwg.mxu0
    %3341 = vrot.lane.b32.xlu0 %v2259, 48
    %v3342 = vpop.permute.xlu0 %3341
    %v3345 = vsel %vm187, %v3264, 0
    %3347 = vmatprep.subr.mxu0 0.0
    %3348 = vmatpush1.msra.mxu0 0.0
    %3349 = vmatprep.subr.mxu0 0.0
    %3350 = vmatpush1.msra.mxu0 0.0
    %3351 = vmatprep.subr.mxu0 0.0
    %3352 = vmatpush1.msra.mxu0 0.0
    %3353 = vmatprep.subr.mxu0 0.0
    %3354 = vmatpush1.msra.mxu0 0.0
    %3355 = vmatprep.subr.mxu0 0.0
    %3356 = vmatpush1.msra.mxu0 0.0
    %3357 = vmatprep.subr.mxu0 0.0
    %3358 = vmatpush1.msra.mxu0 0.0
    %3359 = vmatprep.subr.mxu0 0.0
    %3360 = vmatpush1.msra.mxu0 0.0
    %3361 = vmatprep.subr.mxu0 0.0
    %3362 = vmatpush1.msra.mxu0 0.0
    %3363 = vmatprep.subr.mxu0 0.0
    %3364 = vmatpush1.msra.mxu0 0.0
    %3365 = vmatprep.subr.mxu0 0.0
    %3366 = vmatpush1.msra.mxu0 0.0
    %3367 = vmatprep.subr.mxu0 0.0
    %3368 = vmatpush1.msra.mxu0 0.0
    %3369 = vmatprep.subr.mxu0 0.0
    %3370 = vmatpush1.msra.mxu0 0.0
    %3371 = vmatprep.subr.mxu0 0.0
    %3372 = vmatpush1.msra.mxu0 0.0
    %3373 = vmatprep.subr.mxu0 0.0
    %3374 = vmatpush1.msra.mxu0 0.0
    %3375 = vmatprep.subr.mxu0 0.0
    %3376 = vmatpush1.msra.mxu0 0.0
    %3377 = vmatprep.subr.mxu0 0.0
    %3378 = vmatpush1.msra.mxu0 %v3342
    %3379 = vmatprep.subr.mxu0 0.0
    %3380 = vmatpush2.msra.mxu0 0.0
    %3381 = vmatprep.subr.mxu0 0.0
    %3382 = vmatpush2.msra.mxu0 0.0
    %3383 = vmatprep.subr.mxu0 0.0
    %3384 = vmatpush2.msra.mxu0 0.0
    %3385 = vmatprep.subr.mxu0 0.0
    %3386 = vmatpush2.msra.mxu0 0.0
    %3387 = vmatprep.subr.mxu0 0.0
    %3388 = vmatpush2.msra.mxu0 0.0
    %3389 = vmatprep.subr.mxu0 0.0
    %3390 = vmatpush2.msra.mxu0 0.0
    %3391 = vmatprep.subr.mxu0 0.0
    %3392 = vmatpush2.msra.mxu0 0.0
    %3393 = vmatprep.subr.mxu0 0.0
    %3394 = vmatpush2.msra.mxu0 0.0
    %3395 = vmatprep.subr.mxu0 0.0
    %3396 = vmatpush2.msra.mxu0 0.0
    %3397 = vmatprep.subr.mxu0 0.0
    %3398 = vmatpush2.msra.mxu0 0.0
    %3399 = vmatprep.subr.mxu0 0.0
    %3400 = vmatpush2.msra.mxu0 0.0
    %3401 = vmatprep.subr.mxu0 0.0
    %3402 = vmatpush2.msra.mxu0 0.0
    %3403 = vmatprep.subr.mxu0 0.0
    %3404 = vmatpush2.msra.mxu0 0.0
    %3405 = vmatprep.subr.mxu0 0.0
    %3406 = vmatpush2.msra.mxu0 0.0
    %3407 = vmatprep.subr.mxu0 0.0
    %3408 = vmatpush2.msra.mxu0 0.0
    %3409 = vmatprep.subr.mxu0 0.0
    %3410 = vmatpush2.msra.mxu0 0.0
    %3411 = vmatprep.mubr.f32.mxu0 0.0
    %3412 = vmatmul.mubr.f32.gmra.mxu0 %v3345
    %v3413 = vpop.f32.mrf.mxu0
    %v3414 = vadd.f32 0.0, %v3413
    %v3415 = vpop.f32.mrf.mxu0
    %3416 = vdwg.mxu0
    %v3418 = vsel %vm187, %v3338, 0
    %v3421 = vsel %vm187, %v3414, 0
    %3423 = vmatprep.subr.mxu0 0.0
    %3424 = vmatpush1.msra.mxu0 0.0
    %3425 = vmatprep.subr.mxu0 0.0
    %3426 = vmatpush1.msra.mxu0 0.0
    %3427 = vmatprep.subr.mxu0 0.0
    %3428 = vmatpush1.msra.mxu0 0.0
    %3429 = vmatprep.subr.mxu0 0.0
    %3430 = vmatpush1.msra.mxu0 0.0
    %3431 = vmatprep.subr.mxu0 0.0
    %3432 = vmatpush1.msra.mxu0 0.0
    %3433 = vmatprep.subr.mxu0 0.0
    %3434 = vmatpush1.msra.mxu0 0.0
    %3435 = vmatprep.subr.mxu0 0.0
    %3436 = vmatpush1.msra.mxu0 0.0
    %3437 = vmatprep.subr.mxu0 0.0
    %3438 = vmatpush1.msra.mxu0 0.0
    %3439 = vmatprep.subr.mxu0 0.0
    %3440 = vmatpush1.msra.mxu0 0.0
    %3441 = vmatprep.subr.mxu0 0.0
    %3442 = vmatpush1.msra.mxu0 0.0
    %3443 = vmatprep.subr.mxu0 0.0
    %3444 = vmatpush1.msra.mxu0 0.0
    %3445 = vmatprep.subr.mxu0 0.0
    %3446 = vmatpush1.msra.mxu0 0.0
    %3447 = vmatprep.subr.mxu0 0.0
    %3448 = vmatpush1.msra.mxu0 0.0
    %3449 = vmatprep.subr.mxu0 0.0
    %3450 = vmatpush1.msra.mxu0 0.0
    %3451 = vmatprep.subr.mxu0 0.0
    %3452 = vmatpush1.msra.mxu0 0.0
    %3453 = vmatprep.subr.mxu0 0.0
    %3454 = vmatpush1.msra.mxu0 %v2265
    %3455 = vmatprep.subr.mxu0 0.0
    %3456 = vmatpush2.msra.mxu0 0.0
    %3457 = vmatprep.subr.mxu0 0.0
    %3458 = vmatpush2.msra.mxu0 0.0
    %3459 = vmatprep.subr.mxu0 0.0
    %3460 = vmatpush2.msra.mxu0 0.0
    %3461 = vmatprep.subr.mxu0 0.0
    %3462 = vmatpush2.msra.mxu0 0.0
    %3463 = vmatprep.subr.mxu0 0.0
    %3464 = vmatpush2.msra.mxu0 0.0
    %3465 = vmatprep.subr.mxu0 0.0
    %3466 = vmatpush2.msra.mxu0 0.0
    %3467 = vmatprep.subr.mxu0 0.0
    %3468 = vmatpush2.msra.mxu0 0.0
    %3469 = vmatprep.subr.mxu0 0.0
    %3470 = vmatpush2.msra.mxu0 0.0
    %3471 = vmatprep.subr.mxu0 0.0
    %3472 = vmatpush2.msra.mxu0 0.0
    %3473 = vmatprep.subr.mxu0 0.0
    %3474 = vmatpush2.msra.mxu0 0.0
    %3475 = vmatprep.subr.mxu0 0.0
    %3476 = vmatpush2.msra.mxu0 0.0
    %3477 = vmatprep.subr.mxu0 0.0
    %3478 = vmatpush2.msra.mxu0 0.0
    %3479 = vmatprep.subr.mxu0 0.0
    %3480 = vmatpush2.msra.mxu0 0.0
    %3481 = vmatprep.subr.mxu0 0.0
    %3482 = vmatpush2.msra.mxu0 0.0
    %3483 = vmatprep.subr.mxu0 0.0
    %3484 = vmatpush2.msra.mxu0 0.0
    %3485 = vmatprep.subr.mxu0 0.0
    %3486 = vmatpush2.msra.mxu0 0.0
    %3487 = vmatprep.mubr.f32.mxu0 0.0
    %3488 = vmatmul.mubr.f32.gmra.mxu0 %v3418
    %v3489 = vpop.f32.mrf.mxu0
    %v3490 = vadd.f32 0.0, %v3489
    %v3491 = vpop.f32.mrf.mxu0
    %3492 = vmatprep.mubr.f32.mxu0 0.0
    %3493 = vmatmul.mubr.f32.gmra.mxu0 %v3421
    %v3494 = vpop.f32.mrf.mxu0
    %v3495 = vadd.f32 0.0, %v3494
    %v3496 = vpop.f32.mrf.mxu0
    %3497 = vdwg.mxu0
    %v3498 = vadd.f32 %v3079, %v3490
    %v3499 = vadd.f32 %v3084, %v3495
    %3500 = vrot.lane.b32.xlu0 %v2254, 104
    %v3501 = vpop.permute.xlu0 %3500
    %3502 = vrot.lane.b32.xlu0 %v2254, 72
    %v3503 = vpop.permute.xlu0 %3502
    %v3504 = vsel %vm187, %v3501, 0
    %v3506 = vsel %vm187, %v3503, 0
    %3508 = vmatprep.subr.mxu0 0.0
    %3509 = vmatpush1.xpose.msra.mxu0 0.0
    %3510 = vmatprep.subr.mxu0 0.0
    %3511 = vmatpush1.xpose.msra.mxu0 0.0
    %3512 = vmatprep.subr.mxu0 0.0
    %3513 = vmatpush1.xpose.msra.mxu0 0.0
    %3514 = vmatprep.subr.mxu0 0.0
    %3515 = vmatpush1.xpose.msra.mxu0 0.0
    %3516 = vmatprep.subr.mxu0 0.0
    %3517 = vmatpush1.xpose.msra.mxu0 0.0
    %3518 = vmatprep.subr.mxu0 0.0
    %3519 = vmatpush1.xpose.msra.mxu0 0.0
    %3520 = vmatprep.subr.mxu0 0.0
    %3521 = vmatpush1.xpose.msra.mxu0 0.0
    %3522 = vmatprep.subr.mxu0 0.0
    %3523 = vmatpush1.xpose.msra.mxu0 0.0
    %3524 = vmatprep.subr.mxu0 0.0
    %3525 = vmatpush1.xpose.msra.mxu0 0.0
    %3526 = vmatprep.subr.mxu0 0.0
    %3527 = vmatpush1.xpose.msra.mxu0 0.0
    %3528 = vmatprep.subr.mxu0 0.0
    %3529 = vmatpush1.xpose.msra.mxu0 0.0
    %3530 = vmatprep.subr.mxu0 0.0
    %3531 = vmatpush1.xpose.msra.mxu0 0.0
    %3532 = vmatprep.subr.mxu0 0.0
    %3533 = vmatpush1.xpose.msra.mxu0 0.0
    %3534 = vmatprep.subr.mxu0 0.0
    %3535 = vmatpush1.xpose.msra.mxu0 0.0
    %3536 = vmatprep.subr.mxu0 0.0
    %3537 = vmatpush1.xpose.msra.mxu0 0.0
    %3538 = vmatprep.subr.mxu0 0.0
    %3539 = vmatpush1.xpose.msra.mxu0 %v3506
    %3540 = vmatprep.subr.mxu0 0.0
    %3541 = vmatpush2.xpose.msra.mxu0 0.0
    %3542 = vmatprep.subr.mxu0 0.0
    %3543 = vmatpush2.xpose.msra.mxu0 0.0
    %3544 = vmatprep.subr.mxu0 0.0
    %3545 = vmatpush2.xpose.msra.mxu0 0.0
    %3546 = vmatprep.subr.mxu0 0.0
    %3547 = vmatpush2.xpose.msra.mxu0 0.0
    %3548 = vmatprep.subr.mxu0 0.0
    %3549 = vmatpush2.xpose.msra.mxu0 0.0
    %3550 = vmatprep.subr.mxu0 0.0
    %3551 = vmatpush2.xpose.msra.mxu0 0.0
    %3552 = vmatprep.subr.mxu0 0.0
    %3553 = vmatpush2.xpose.msra.mxu0 0.0
    %3554 = vmatprep.subr.mxu0 0.0
    %3555 = vmatpush2.xpose.msra.mxu0 0.0
    %3556 = vmatprep.subr.mxu0 0.0
    %3557 = vmatpush2.xpose.msra.mxu0 0.0
    %3558 = vmatprep.subr.mxu0 0.0
    %3559 = vmatpush2.xpose.msra.mxu0 0.0
    %3560 = vmatprep.subr.mxu0 0.0
    %3561 = vmatpush2.xpose.msra.mxu0 0.0
    %3562 = vmatprep.subr.mxu0 0.0
    %3563 = vmatpush2.xpose.msra.mxu0 0.0
    %3564 = vmatprep.subr.mxu0 0.0
    %3565 = vmatpush2.xpose.msra.mxu0 0.0
    %3566 = vmatprep.subr.mxu0 0.0
    %3567 = vmatpush2.xpose.msra.mxu0 0.0
    %3568 = vmatprep.subr.mxu0 0.0
    %3569 = vmatpush2.xpose.msra.mxu0 0.0
    %3570 = vmatprep.subr.mxu0 0.0
    %3571 = vmatpush2.xpose.msra.mxu0 0.0
    %3572 = vmatprep.mubr.f32.mxu0 0.0
    %3573 = vmatmul.mubr.f32.gmra.mxu0 %v3504
    %v3574 = vpop.f32.mrf.mxu0
    %v3575 = vadd.f32 0.0, %v3574
    %v3576 = vpop.f32.mrf.mxu0
    %3577 = vdwg.mxu0
    %3578 = vrot.lane.b32.xlu0 %v2259, 104
    %v3579 = vpop.permute.xlu0 %3578
    %3580 = vrot.lane.b32.xlu0 %v2259, 72
    %v3581 = vpop.permute.xlu0 %3580
    %v3582 = vsel %vm187, %v3579, 0
    %v3584 = vsel %vm187, %v3581, 0
    %3586 = vmatprep.subr.mxu0 0.0
    %3587 = vmatpush1.xpose.msra.mxu0 0.0
    %3588 = vmatprep.subr.mxu0 0.0
    %3589 = vmatpush1.xpose.msra.mxu0 0.0
    %3590 = vmatprep.subr.mxu0 0.0
    %3591 = vmatpush1.xpose.msra.mxu0 0.0
    %3592 = vmatprep.subr.mxu0 0.0
    %3593 = vmatpush1.xpose.msra.mxu0 0.0
    %3594 = vmatprep.subr.mxu0 0.0
    %3595 = vmatpush1.xpose.msra.mxu0 0.0
    %3596 = vmatprep.subr.mxu0 0.0
    %3597 = vmatpush1.xpose.msra.mxu0 0.0
    %3598 = vmatprep.subr.mxu0 0.0
    %3599 = vmatpush1.xpose.msra.mxu0 0.0
    %3600 = vmatprep.subr.mxu0 0.0
    %3601 = vmatpush1.xpose.msra.mxu0 0.0
    %3602 = vmatprep.subr.mxu0 0.0
    %3603 = vmatpush1.xpose.msra.mxu0 0.0
    %3604 = vmatprep.subr.mxu0 0.0
    %3605 = vmatpush1.xpose.msra.mxu0 0.0
    %3606 = vmatprep.subr.mxu0 0.0
    %3607 = vmatpush1.xpose.msra.mxu0 0.0
    %3608 = vmatprep.subr.mxu0 0.0
    %3609 = vmatpush1.xpose.msra.mxu0 0.0
    %3610 = vmatprep.subr.mxu0 0.0
    %3611 = vmatpush1.xpose.msra.mxu0 0.0
    %3612 = vmatprep.subr.mxu0 0.0
    %3613 = vmatpush1.xpose.msra.mxu0 0.0
    %3614 = vmatprep.subr.mxu0 0.0
    %3615 = vmatpush1.xpose.msra.mxu0 0.0
    %3616 = vmatprep.subr.mxu0 0.0
    %3617 = vmatpush1.xpose.msra.mxu0 %v3584
    %3618 = vmatprep.subr.mxu0 0.0
    %3619 = vmatpush2.xpose.msra.mxu0 0.0
    %3620 = vmatprep.subr.mxu0 0.0
    %3621 = vmatpush2.xpose.msra.mxu0 0.0
    %3622 = vmatprep.subr.mxu0 0.0
    %3623 = vmatpush2.xpose.msra.mxu0 0.0
    %3624 = vmatprep.subr.mxu0 0.0
    %3625 = vmatpush2.xpose.msra.mxu0 0.0
    %3626 = vmatprep.subr.mxu0 0.0
    %3627 = vmatpush2.xpose.msra.mxu0 0.0
    %3628 = vmatprep.subr.mxu0 0.0
    %3629 = vmatpush2.xpose.msra.mxu0 0.0
    %3630 = vmatprep.subr.mxu0 0.0
    %3631 = vmatpush2.xpose.msra.mxu0 0.0
    %3632 = vmatprep.subr.mxu0 0.0
    %3633 = vmatpush2.xpose.msra.mxu0 0.0
    %3634 = vmatprep.subr.mxu0 0.0
    %3635 = vmatpush2.xpose.msra.mxu0 0.0
    %3636 = vmatprep.subr.mxu0 0.0
    %3637 = vmatpush2.xpose.msra.mxu0 0.0
    %3638 = vmatprep.subr.mxu0 0.0
    %3639 = vmatpush2.xpose.msra.mxu0 0.0
    %3640 = vmatprep.subr.mxu0 0.0
    %3641 = vmatpush2.xpose.msra.mxu0 0.0
    %3642 = vmatprep.subr.mxu0 0.0
    %3643 = vmatpush2.xpose.msra.mxu0 0.0
    %3644 = vmatprep.subr.mxu0 0.0
    %3645 = vmatpush2.xpose.msra.mxu0 0.0
    %3646 = vmatprep.subr.mxu0 0.0
    %3647 = vmatpush2.xpose.msra.mxu0 0.0
    %3648 = vmatprep.subr.mxu0 0.0
    %3649 = vmatpush2.xpose.msra.mxu0 0.0
    %3650 = vmatprep.mubr.f32.mxu0 0.0
    %3651 = vmatmul.mubr.f32.gmra.mxu0 %v3582
    %v3652 = vpop.f32.mrf.mxu0
    %v3653 = vadd.f32 0.0, %v3652
    %v3654 = vpop.f32.mrf.mxu0
    %3655 = vdwg.mxu0
    %v3656 = vsel %vm187, %v3575, -inf
    %3657 = vmax.xlane.f32.xlu0 %v3656
    %v3658 = vpop.xlane.xlu0 %3657
    %v3659 = vsel %vm187, %v3653, -inf
    %3660 = vmax.xlane.f32.xlu0 %v3659
    %v3661 = vpop.xlane.xlu0 %3660
    %v3662 = vsub.f32 %v3575, %v3658
    %v3663 = vsub.f32 %v3653, %v3661
    %v3664 = vmul.f32 %v3662, 1.442695
    %v3665 = vpow.pop %v3664
    %v3666 = vmul.f32 %v3663, 1.442695
    %v3667 = vpow.pop %v3666
    %v3668 = vsel %vm187, %v3665, 0.0
    %3669 = vadd.xlane.f32.xlu0 %v3668
    %v3670 = vpop.xlane.xlu0 %3669
    %v3671 = vsel %vm187, %v3667, 0.0
    %3672 = vadd.xlane.f32.xlu0 %v3671
    %v3673 = vpop.xlane.xlu0 %3672
    %v3674 = vrcp.pop %v3670
    %v3675 = vmul.f32 %v3665, %v3674
    %v3676 = vrcp.pop %v3673
    %v3677 = vmul.f32 %v3667, %v3676
    %3678 = vrot.lane.b32.xlu0 %v2254, 40
    %v3679 = vpop.permute.xlu0 %3678
    %v3682 = vsel %vm187, %v3675, 0
    %3684 = vmatprep.subr.mxu0 0.0
    %3685 = vmatpush1.msra.mxu0 0.0
    %3686 = vmatprep.subr.mxu0 0.0
    %3687 = vmatpush1.msra.mxu0 0.0
    %3688 = vmatprep.subr.mxu0 0.0
    %3689 = vmatpush1.msra.mxu0 0.0
    %3690 = vmatprep.subr.mxu0 0.0
    %3691 = vmatpush1.msra.mxu0 0.0
    %3692 = vmatprep.subr.mxu0 0.0
    %3693 = vmatpush1.msra.mxu0 0.0
    %3694 = vmatprep.subr.mxu0 0.0
    %3695 = vmatpush1.msra.mxu0 0.0
    %3696 = vmatprep.subr.mxu0 0.0
    %3697 = vmatpush1.msra.mxu0 0.0
    %3698 = vmatprep.subr.mxu0 0.0
    %3699 = vmatpush1.msra.mxu0 0.0
    %3700 = vmatprep.subr.mxu0 0.0
    %3701 = vmatpush1.msra.mxu0 0.0
    %3702 = vmatprep.subr.mxu0 0.0
    %3703 = vmatpush1.msra.mxu0 0.0
    %3704 = vmatprep.subr.mxu0 0.0
    %3705 = vmatpush1.msra.mxu0 0.0
    %3706 = vmatprep.subr.mxu0 0.0
    %3707 = vmatpush1.msra.mxu0 0.0
    %3708 = vmatprep.subr.mxu0 0.0
    %3709 = vmatpush1.msra.mxu0 0.0
    %3710 = vmatprep.subr.mxu0 0.0
    %3711 = vmatpush1.msra.mxu0 0.0
    %3712 = vmatprep.subr.mxu0 0.0
    %3713 = vmatpush1.msra.mxu0 0.0
    %3714 = vmatprep.subr.mxu0 0.0
    %3715 = vmatpush1.msra.mxu0 %v3679
    %3716 = vmatprep.subr.mxu0 0.0
    %3717 = vmatpush2.msra.mxu0 0.0
    %3718 = vmatprep.subr.mxu0 0.0
    %3719 = vmatpush2.msra.mxu0 0.0
    %3720 = vmatprep.subr.mxu0 0.0
    %3721 = vmatpush2.msra.mxu0 0.0
    %3722 = vmatprep.subr.mxu0 0.0
    %3723 = vmatpush2.msra.mxu0 0.0
    %3724 = vmatprep.subr.mxu0 0.0
    %3725 = vmatpush2.msra.mxu0 0.0
    %3726 = vmatprep.subr.mxu0 0.0
    %3727 = vmatpush2.msra.mxu0 0.0
    %3728 = vmatprep.subr.mxu0 0.0
    %3729 = vmatpush2.msra.mxu0 0.0
    %3730 = vmatprep.subr.mxu0 0.0
    %3731 = vmatpush2.msra.mxu0 0.0
    %3732 = vmatprep.subr.mxu0 0.0
    %3733 = vmatpush2.msra.mxu0 0.0
    %3734 = vmatprep.subr.mxu0 0.0
    %3735 = vmatpush2.msra.mxu0 0.0
    %3736 = vmatprep.subr.mxu0 0.0
    %3737 = vmatpush2.msra.mxu0 0.0
    %3738 = vmatprep.subr.mxu0 0.0
    %3739 = vmatpush2.msra.mxu0 0.0
    %3740 = vmatprep.subr.mxu0 0.0
    %3741 = vmatpush2.msra.mxu0 0.0
    %3742 = vmatprep.subr.mxu0 0.0
    %3743 = vmatpush2.msra.mxu0 0.0
    %3744 = vmatprep.subr.mxu0 0.0
    %3745 = vmatpush2.msra.mxu0 0.0
    %3746 = vmatprep.subr.mxu0 0.0
    %3747 = vmatpush2.msra.mxu0 0.0
    %3748 = vmatprep.mubr.f32.mxu0 0.0
    %3749 = vmatmul.mubr.f32.gmra.mxu0 %v3682
    %v3750 = vpop.f32.mrf.mxu0
    %v3751 = vadd.f32 0.0, %v3750
    %v3752 = vpop.f32.mrf.mxu0
    %3753 = vdwg.mxu0
    %3754 = vrot.lane.b32.xlu0 %v2259, 40
    %v3755 = vpop.permute.xlu0 %3754
    %v3758 = vsel %vm187, %v3677, 0
    %3760 = vmatprep.subr.mxu0 0.0
    %3761 = vmatpush1.msra.mxu0 0.0
    %3762 = vmatprep.subr.mxu0 0.0
    %3763 = vmatpush1.msra.mxu0 0.0
    %3764 = vmatprep.subr.mxu0 0.0
    %3765 = vmatpush1.msra.mxu0 0.0
    %3766 = vmatprep.subr.mxu0 0.0
    %3767 = vmatpush1.msra.mxu0 0.0
    %3768 = vmatprep.subr.mxu0 0.0
    %3769 = vmatpush1.msra.mxu0 0.0
    %3770 = vmatprep.subr.mxu0 0.0
    %3771 = vmatpush1.msra.mxu0 0.0
    %3772 = vmatprep.subr.mxu0 0.0
    %3773 = vmatpush1.msra.mxu0 0.0
    %3774 = vmatprep.subr.mxu0 0.0
    %3775 = vmatpush1.msra.mxu0 0.0
    %3776 = vmatprep.subr.mxu0 0.0
    %3777 = vmatpush1.msra.mxu0 0.0
    %3778 = vmatprep.subr.mxu0 0.0
    %3779 = vmatpush1.msra.mxu0 0.0
    %3780 = vmatprep.subr.mxu0 0.0
    %3781 = vmatpush1.msra.mxu0 0.0
    %3782 = vmatprep.subr.mxu0 0.0
    %3783 = vmatpush1.msra.mxu0 0.0
    %3784 = vmatprep.subr.mxu0 0.0
    %3785 = vmatpush1.msra.mxu0 0.0
    %3786 = vmatprep.subr.mxu0 0.0
    %3787 = vmatpush1.msra.mxu0 0.0
    %3788 = vmatprep.subr.mxu0 0.0
    %3789 = vmatpush1.msra.mxu0 0.0
    %3790 = vmatprep.subr.mxu0 0.0
    %3791 = vmatpush1.msra.mxu0 %v3755
    %3792 = vmatprep.subr.mxu0 0.0
    %3793 = vmatpush2.msra.mxu0 0.0
    %3794 = vmatprep.subr.mxu0 0.0
    %3795 = vmatpush2.msra.mxu0 0.0
    %3796 = vmatprep.subr.mxu0 0.0
    %3797 = vmatpush2.msra.mxu0 0.0
    %3798 = vmatprep.subr.mxu0 0.0
    %3799 = vmatpush2.msra.mxu0 0.0
    %3800 = vmatprep.subr.mxu0 0.0
    %3801 = vmatpush2.msra.mxu0 0.0
    %3802 = vmatprep.subr.mxu0 0.0
    %3803 = vmatpush2.msra.mxu0 0.0
    %3804 = vmatprep.subr.mxu0 0.0
    %3805 = vmatpush2.msra.mxu0 0.0
    %3806 = vmatprep.subr.mxu0 0.0
    %3807 = vmatpush2.msra.mxu0 0.0
    %3808 = vmatprep.subr.mxu0 0.0
    %3809 = vmatpush2.msra.mxu0 0.0
    %3810 = vmatprep.subr.mxu0 0.0
    %3811 = vmatpush2.msra.mxu0 0.0
    %3812 = vmatprep.subr.mxu0 0.0
    %3813 = vmatpush2.msra.mxu0 0.0
    %3814 = vmatprep.subr.mxu0 0.0
    %3815 = vmatpush2.msra.mxu0 0.0
    %3816 = vmatprep.subr.mxu0 0.0
    %3817 = vmatpush2.msra.mxu0 0.0
    %3818 = vmatprep.subr.mxu0 0.0
    %3819 = vmatpush2.msra.mxu0 0.0
    %3820 = vmatprep.subr.mxu0 0.0
    %3821 = vmatpush2.msra.mxu0 0.0
    %3822 = vmatprep.subr.mxu0 0.0
    %3823 = vmatpush2.msra.mxu0 0.0
    %3824 = vmatprep.mubr.f32.mxu0 0.0
    %3825 = vmatmul.mubr.f32.gmra.mxu0 %v3758
    %v3826 = vpop.f32.mrf.mxu0
    %v3827 = vadd.f32 0.0, %v3826
    %v3828 = vpop.f32.mrf.mxu0
    %3829 = vdwg.mxu0
    %v3831 = vsel %vm187, %v3751, 0
    %v3834 = vsel %vm187, %v3827, 0
    %3836 = vmatprep.subr.mxu0 0.0
    %3837 = vmatpush1.msra.mxu0 0.0
    %3838 = vmatprep.subr.mxu0 0.0
    %3839 = vmatpush1.msra.mxu0 0.0
    %3840 = vmatprep.subr.mxu0 0.0
    %3841 = vmatpush1.msra.mxu0 0.0
    %3842 = vmatprep.subr.mxu0 0.0
    %3843 = vmatpush1.msra.mxu0 0.0
    %3844 = vmatprep.subr.mxu0 0.0
    %3845 = vmatpush1.msra.mxu0 0.0
    %3846 = vmatprep.subr.mxu0 0.0
    %3847 = vmatpush1.msra.mxu0 0.0
    %3848 = vmatprep.subr.mxu0 0.0
    %3849 = vmatpush1.msra.mxu0 0.0
    %3850 = vmatprep.subr.mxu0 0.0
    %3851 = vmatpush1.msra.mxu0 0.0
    %3852 = vmatprep.subr.mxu0 0.0
    %3853 = vmatpush1.msra.mxu0 0.0
    %3854 = vmatprep.subr.mxu0 0.0
    %3855 = vmatpush1.msra.mxu0 0.0
    %3856 = vmatprep.subr.mxu0 0.0
    %3857 = vmatpush1.msra.mxu0 0.0
    %3858 = vmatprep.subr.mxu0 0.0
    %3859 = vmatpush1.msra.mxu0 0.0
    %3860 = vmatprep.subr.mxu0 0.0
    %3861 = vmatpush1.msra.mxu0 0.0
    %3862 = vmatprep.subr.mxu0 0.0
    %3863 = vmatpush1.msra.mxu0 0.0
    %3864 = vmatprep.subr.mxu0 0.0
    %3865 = vmatpush1.msra.mxu0 0.0
    %3866 = vmatprep.subr.mxu0 0.0
    %3867 = vmatpush1.msra.mxu0 %v2266
    %3868 = vmatprep.subr.mxu0 0.0
    %3869 = vmatpush2.msra.mxu0 0.0
    %3870 = vmatprep.subr.mxu0 0.0
    %3871 = vmatpush2.msra.mxu0 0.0
    %3872 = vmatprep.subr.mxu0 0.0
    %3873 = vmatpush2.msra.mxu0 0.0
    %3874 = vmatprep.subr.mxu0 0.0
    %3875 = vmatpush2.msra.mxu0 0.0
    %3876 = vmatprep.subr.mxu0 0.0
    %3877 = vmatpush2.msra.mxu0 0.0
    %3878 = vmatprep.subr.mxu0 0.0
    %3879 = vmatpush2.msra.mxu0 0.0
    %3880 = vmatprep.subr.mxu0 0.0
    %3881 = vmatpush2.msra.mxu0 0.0
    %3882 = vmatprep.subr.mxu0 0.0
    %3883 = vmatpush2.msra.mxu0 0.0
    %3884 = vmatprep.subr.mxu0 0.0
    %3885 = vmatpush2.msra.mxu0 0.0
    %3886 = vmatprep.subr.mxu0 0.0
    %3887 = vmatpush2.msra.mxu0 0.0
    %3888 = vmatprep.subr.mxu0 0.0
    %3889 = vmatpush2.msra.mxu0 0.0
    %3890 = vmatprep.subr.mxu0 0.0
    %3891 = vmatpush2.msra.mxu0 0.0
    %3892 = vmatprep.subr.mxu0 0.0
    %3893 = vmatpush2.msra.mxu0 0.0
    %3894 = vmatprep.subr.mxu0 0.0
    %3895 = vmatpush2.msra.mxu0 0.0
    %3896 = vmatprep.subr.mxu0 0.0
    %3897 = vmatpush2.msra.mxu0 0.0
    %3898 = vmatprep.subr.mxu0 0.0
    %3899 = vmatpush2.msra.mxu0 0.0
    %3900 = vmatprep.mubr.f32.mxu0 0.0
    %3901 = vmatmul.mubr.f32.gmra.mxu0 %v3831
    %v3902 = vpop.f32.mrf.mxu0
    %v3903 = vadd.f32 0.0, %v3902
    %v3904 = vpop.f32.mrf.mxu0
    %3905 = vmatprep.mubr.f32.mxu0 0.0
    %3906 = vmatmul.mubr.f32.gmra.mxu0 %v3834
    %v3907 = vpop.f32.mrf.mxu0
    %v3908 = vadd.f32 0.0, %v3907
    %v3909 = vpop.f32.mrf.mxu0
    %3910 = vdwg.mxu0
    %v3911 = vadd.f32 %v3498, %v3903
    %v3912 = vadd.f32 %v3499, %v3908
    %v3913 = vadd.f32 %v2126, %v3911
    %v3914 = vadd.f32 %v2127, %v3912
    %s3915 = scalar_lea.vmem %s5, 1
    %v3916 = vld [vmem:[%s3915] sm:$0x1]
    %v3918 = vlaneseq
    %v3919 = vshrl.u32 %v3918, 7
    %v3920 = vsub.s32 0, %v3919
    %v3921 = vrot.slane %v3916, %v3920
    %v3923 = vadd.f32 %v3913, %v3921
    %v3924 = vadd.f32 %v3914, %v3921
    %v3925 = vsel %vm48, %v3923, 0.0
    %3926 = vadd.xlane.f32.xlu0 %v3925
    %v3927 = vpop.xlane.xlu0 %3926
    %v3928 = vsel %vm48, %v3924, 0.0
    %3929 = vadd.xlane.f32.xlu0 %v3928
    %v3930 = vpop.xlane.xlu0 %3929
    %v3931 = vmul.f32 %v3927, %v55
    %v3932 = vmul.f32 %v3930, %v55
    %v3933 = vsub.f32 %v3923, %v3931
    %v3934 = vsub.f32 %v3924, %v3932
    %v3935 = vmul.f32 %v3933, %v3933
    %v3936 = vmul.f32 %v3934, %v3934
    %v3937 = vsel %vm48, %v3935, 0.0
    %3938 = vadd.xlane.f32.xlu0 %v3937
    %v3939 = vpop.xlane.xlu0 %3938
    %v3940 = vsel %vm48, %v3936, 0.0
    %3941 = vadd.xlane.f32.xlu0 %v3940
    %v3942 = vpop.xlane.xlu0 %3941
    %v3943 = vmul.f32 %v3939, %v55
    %v3944 = vmul.f32 %v3942, %v55
    %v3945 = vadd.f32 %v3943, 1e-05
    %v3946 = vadd.f32 %v3944, 1e-05
    %v3947 = vrsqrt.pop %v3945
    %v3948 = vrsqrt.pop %v3946
    %v3949 = vmul.f32 %v3933, %v3947
    %v3950 = vmul.f32 %v3934, %v3948
    %v3951 = vlaneseq
    %v3952 = vshrl.u32 %v3951, 7
    %v3953 = vsub.s32 2, %v3952
    %v3954 = vrot.slane %v2129, %v3953
    %v3955 = vmul.f32 %v3949, %v3954
    %v3956 = vmul.f32 %v3950, %v3954
    %v3957 = vlaneseq
    %v3958 = vshrl.u32 %v3957, 7
    %v3959 = vsub.s32 3, %v3958
    %v3960 = vrot.slane %v2129, %v3959
    %v3961 = vadd.f32 %v3955, %v3960
    %v3962 = vadd.f32 %v3956, %v3960
    %s3963 = scalar_lea.vmem %s6, 32
    %v3964 = vld [vmem:[%s3963] sm:$0xff]
    %v3965 = vld [vmem:[%s3963 + $0x8] sm:$0xff]
    %v3966 = vld [vmem:[%s3963 + $0x10] sm:$0xff]
    %v3967 = vld [vmem:[%s3963 + $0x18] sm:$0xff]
    %s3968 = scalar_lea.vmem %s7, 1
    %v3969 = vld [vmem:[%s3968] sm:$0x1]
    %v3971 = vlaneseq
    %v3972 = vshrl.u32 %v3971, 7
    %v3973 = vsub.s32 0, %v3972
    %v3974 = vrot.slane %v3969, %v3973
    %v3977 = vsel %vm48, %v3961, 0
    %v3980 = vsel %vm48, %v3962, 0
    %3982 = vmatprep.subr.mxu0 0.0
    %3983 = vmatpush1.msra.mxu0 0.0
    %3984 = vmatprep.subr.mxu0 0.0
    %3985 = vmatpush1.msra.mxu0 0.0
    %3986 = vmatprep.subr.mxu0 0.0
    %3987 = vmatpush1.msra.mxu0 0.0
    %3988 = vmatprep.subr.mxu0 0.0
    %3989 = vmatpush1.msra.mxu0 0.0
    %3990 = vmatprep.subr.mxu0 0.0
    %3991 = vmatpush1.msra.mxu0 0.0
    %3992 = vmatprep.subr.mxu0 0.0
    %3993 = vmatpush1.msra.mxu0 0.0
    %3994 = vmatprep.subr.mxu0 0.0
    %3995 = vmatpush1.msra.mxu0 0.0
    %3996 = vmatprep.subr.mxu0 0.0
    %3997 = vmatpush1.msra.mxu0 0.0
    %3998 = vmatprep.subr.mxu0 0.0
    %3999 = vmatpush1.msra.mxu0 0.0
    %4000 = vmatprep.subr.mxu0 0.0
    %4001 = vmatpush1.msra.mxu0 0.0
    %4002 = vmatprep.subr.mxu0 0.0
    %4003 = vmatpush1.msra.mxu0 0.0
    %4004 = vmatprep.subr.mxu0 0.0
    %4005 = vmatpush1.msra.mxu0 0.0
    %4006 = vmatprep.subr.mxu0 0.0
    %4007 = vmatpush1.msra.mxu0 %v3967
    %4008 = vmatprep.subr.mxu0 0.0
    %4009 = vmatpush1.msra.mxu0 %v3966
    %4010 = vmatprep.subr.mxu0 0.0
    %4011 = vmatpush1.msra.mxu0 %v3965
    %4012 = vmatprep.subr.mxu0 0.0
    %4013 = vmatpush1.msra.mxu0 %v3964
    %4014 = vmatprep.subr.mxu0 0.0
    %4015 = vmatpush2.msra.mxu0 0.0
    %4016 = vmatprep.subr.mxu0 0.0
    %4017 = vmatpush2.msra.mxu0 0.0
    %4018 = vmatprep.subr.mxu0 0.0
    %4019 = vmatpush2.msra.mxu0 0.0
    %4020 = vmatprep.subr.mxu0 0.0
    %4021 = vmatpush2.msra.mxu0 0.0
    %4022 = vmatprep.subr.mxu0 0.0
    %4023 = vmatpush2.msra.mxu0 0.0
    %4024 = vmatprep.subr.mxu0 0.0
    %4025 = vmatpush2.msra.mxu0 0.0
    %4026 = vmatprep.subr.mxu0 0.0
    %4027 = vmatpush2.msra.mxu0 0.0
    %4028 = vmatprep.subr.mxu0 0.0
    %4029 = vmatpush2.msra.mxu0 0.0
    %4030 = vmatprep.subr.mxu0 0.0
    %4031 = vmatpush2.msra.mxu0 0.0
    %4032 = vmatprep.subr.mxu0 0.0
    %4033 = vmatpush2.msra.mxu0 0.0
    %4034 = vmatprep.subr.mxu0 0.0
    %4035 = vmatpush2.msra.mxu0 0.0
    %4036 = vmatprep.subr.mxu0 0.0
    %4037 = vmatpush2.msra.mxu0 0.0
    %4038 = vmatprep.subr.mxu0 0.0
    %4039 = vmatpush2.msra.mxu0 0.0
    %4040 = vmatprep.subr.mxu0 0.0
    %4041 = vmatpush2.msra.mxu0 0.0
    %4042 = vmatprep.subr.mxu0 0.0
    %4043 = vmatpush2.msra.mxu0 0.0
    %4044 = vmatprep.subr.mxu0 0.0
    %4045 = vmatpush2.msra.mxu0 0.0
    %4046 = vmatprep.mubr.f32.mxu0 0.0
    %4047 = vmatmul.mubr.f32.gmra.mxu0 %v3977
    %v4048 = vpop.f32.mrf.mxu0
    %v4049 = vadd.f32 %v3974, %v4048
    %v4050 = vpop.f32.mrf.mxu0
    %4051 = vmatprep.mubr.f32.mxu0 0.0
    %4052 = vmatmul.mubr.f32.gmra.mxu0 %v3980
    %v4053 = vpop.f32.mrf.mxu0
    %v4054 = vadd.f32 %v3974, %v4053
    %v4055 = vpop.f32.mrf.mxu0
    %4056 = vdwg.mxu0
    %v4057 = vmul.f32 %v4049, 0.5
    %v4058 = vmul.f32 %v4054, 0.5
    %v4059 = vmul.f32 %v4049, 0.70710677
    %v4060 = vmul.f32 %v4054, 0.70710677
    %vm4061 = vcmp.ge.f32.partialorder %v4059, 0.0
    %vm4062 = vcmp.ge.f32.partialorder %v4060, 0.0
    %v4063 = vsel %vm4061, 1.0, -1.0
    %v4064 = vsel %vm4062, 1.0, -1.0
    %v4065 = vand.u32 2147483647, %v4059
    %v4066 = vand.u32 2147483647, %v4060
    %v4067 = vmul.f32 %v4065, 0.3275911
    %v4068 = vmul.f32 %v4066, 0.3275911
    %v4069 = vadd.f32 %v4067, 1.0
    %v4070 = vadd.f32 %v4068, 1.0
    %v4071 = vrcp.pop %v4069
    %v4072 = vmul.f32 1.0, %v4071
    %v4073 = vrcp.pop %v4070
    %v4074 = vmul.f32 1.0, %v4073
    %v4075 = vmul.f32 %v4072, 1.0614054
    %v4076 = vmul.f32 %v4074, 1.0614054
    %v4077 = vadd.f32 %v4075, -1.4531521
    %v4078 = vadd.f32 %v4076, -1.4531521
    %v4079 = vmul.f32 %v4077, %v4072
    %v4080 = vmul.f32 %v4078, %v4074
    %v4081 = vadd.f32 %v4079, 1.4214138
    %v4082 = vadd.f32 %v4080, 1.4214138
    %v4083 = vmul.f32 %v4081, %v4072
    %v4084 = vmul.f32 %v4082, %v4074
    %v4085 = vadd.f32 %v4083, -0.28449672
    %v4086 = vadd.f32 %v4084, -0.28449672
    %v4087 = vmul.f32 %v4085, %v4072
    %v4088 = vmul.f32 %v4086, %v4074
    %v4089 = vadd.f32 %v4087, 0.2548296
    %v4090 = vadd.f32 %v4088, 0.2548296
    %v4091 = vmul.f32 %v4089, %v4072
    %v4092 = vmul.f32 %v4090, %v4074
    %v4093 = vsub.f32 0.0, %v4065
    %v4094 = vsub.f32 0.0, %v4066
    %v4095 = vmul.f32 %v4093, %v4065
    %v4096 = vmul.f32 %v4094, %v4066
    %v4097 = vmul.f32 %v4095, 1.442695
    %v4098 = vpow.pop %v4097
    %v4099 = vmul.f32 %v4096, 1.442695
    %v4100 = vpow.pop %v4099
    %v4101 = vmul.f32 %v4091, %v4098
    %v4102 = vmul.f32 %v4092, %v4100
    %v4103 = vsub.f32 1.0, %v4101
    %v4104 = vsub.f32 1.0, %v4102
    %v4105 = vmul.f32 %v4063, %v4103
    %v4106 = vmul.f32 %v4064, %v4104
    %v4107 = vadd.f32 %v4105, 1.0
    %v4108 = vadd.f32 %v4106, 1.0
    %v4109 = vmul.f32 %v4057, %v4107
    %v4110 = vmul.f32 %v4058, %v4108
    %s4111 = scalar_lea.vmem %s8, 128
    %v4112 = vld [vmem:[%s4111] sm:$0xff]
    %v4113 = vld [vmem:[%s4111 + $0x8] sm:$0xff]
    %v4114 = vld [vmem:[%s4111 + $0x10] sm:$0xff]
    %v4115 = vld [vmem:[%s4111 + $0x18] sm:$0xff]
    %v4116 = vld [vmem:[%s4111 + $0x20] sm:$0xff]
    %v4117 = vld [vmem:[%s4111 + $0x28] sm:$0xff]
    %v4118 = vld [vmem:[%s4111 + $0x30] sm:$0xff]
    %v4119 = vld [vmem:[%s4111 + $0x38] sm:$0xff]
    %v4120 = vld [vmem:[%s4111 + $0x40] sm:$0xff]
    %v4121 = vld [vmem:[%s4111 + $0x48] sm:$0xff]
    %v4122 = vld [vmem:[%s4111 + $0x50] sm:$0xff]
    %v4123 = vld [vmem:[%s4111 + $0x58] sm:$0xff]
    %v4124 = vld [vmem:[%s4111 + $0x60] sm:$0xff]
    %v4125 = vld [vmem:[%s4111 + $0x68] sm:$0xff]
    %v4126 = vld [vmem:[%s4111 + $0x70] sm:$0xff]
    %v4127 = vld [vmem:[%s4111 + $0x78] sm:$0xff]
    %4128 = vmatprep.subr.mxu0 0.0
    %4129 = vmatpush1.msra.mxu0 %v4127
    %4130 = vmatprep.subr.mxu0 0.0
    %4131 = vmatpush1.msra.mxu0 %v4126
    %4132 = vmatprep.subr.mxu0 0.0
    %4133 = vmatpush1.msra.mxu0 %v4125
    %4134 = vmatprep.subr.mxu0 0.0
    %4135 = vmatpush1.msra.mxu0 %v4124
    %4136 = vmatprep.subr.mxu0 0.0
    %4137 = vmatpush1.msra.mxu0 %v4123
    %4138 = vmatprep.subr.mxu0 0.0
    %4139 = vmatpush1.msra.mxu0 %v4122
    %4140 = vmatprep.subr.mxu0 0.0
    %4141 = vmatpush1.msra.mxu0 %v4121
    %4142 = vmatprep.subr.mxu0 0.0
    %4143 = vmatpush1.msra.mxu0 %v4120
    %4144 = vmatprep.subr.mxu0 0.0
    %4145 = vmatpush1.msra.mxu0 %v4119
    %4146 = vmatprep.subr.mxu0 0.0
    %4147 = vmatpush1.msra.mxu0 %v4118
    %4148 = vmatprep.subr.mxu0 0.0
    %4149 = vmatpush1.msra.mxu0 %v4117
    %4150 = vmatprep.subr.mxu0 0.0
    %4151 = vmatpush1.msra.mxu0 %v4116
    %4152 = vmatprep.subr.mxu0 0.0
    %4153 = vmatpush1.msra.mxu0 %v4115
    %4154 = vmatprep.subr.mxu0 0.0
    %4155 = vmatpush1.msra.mxu0 %v4114
    %4156 = vmatprep.subr.mxu0 0.0
    %4157 = vmatpush1.msra.mxu0 %v4113
    %4158 = vmatprep.subr.mxu0 0.0
    %4159 = vmatpush1.msra.mxu0 %v4112
    %4160 = vmatprep.subr.mxu0 0.0
    %4161 = vmatpush2.msra.mxu0 0.0
    %4162 = vmatprep.subr.mxu0 0.0
    %4163 = vmatpush2.msra.mxu0 0.0
    %4164 = vmatprep.subr.mxu0 0.0
    %4165 = vmatpush2.msra.mxu0 0.0
    %4166 = vmatprep.subr.mxu0 0.0
    %4167 = vmatpush2.msra.mxu0 0.0
    %4168 = vmatprep.subr.mxu0 0.0
    %4169 = vmatpush2.msra.mxu0 0.0
    %4170 = vmatprep.subr.mxu0 0.0
    %4171 = vmatpush2.msra.mxu0 0.0
    %4172 = vmatprep.subr.mxu0 0.0
    %4173 = vmatpush2.msra.mxu0 0.0
    %4174 = vmatprep.subr.mxu0 0.0
    %4175 = vmatpush2.msra.mxu0 0.0
    %4176 = vmatprep.subr.mxu0 0.0
    %4177 = vmatpush2.msra.mxu0 0.0
    %4178 = vmatprep.subr.mxu0 0.0
    %4179 = vmatpush2.msra.mxu0 0.0
    %4180 = vmatprep.subr.mxu0 0.0
    %4181 = vmatpush2.msra.mxu0 0.0
    %4182 = vmatprep.subr.mxu0 0.0
    %4183 = vmatpush2.msra.mxu0 0.0
    %4184 = vmatprep.subr.mxu0 0.0
    %4185 = vmatpush2.msra.mxu0 0.0
    %4186 = vmatprep.subr.mxu0 0.0
    %4187 = vmatpush2.msra.mxu0 0.0
    %4188 = vmatprep.subr.mxu0 0.0
    %4189 = vmatpush2.msra.mxu0 0.0
    %4190 = vmatprep.subr.mxu0 0.0
    %4191 = vmatpush2.msra.mxu0 0.0
    %4192 = vmatprep.mubr.f32.mxu0 0.0
    %4193 = vmatmul.mubr.f32.gmra.mxu0 %v4109
    %v4194 = vpop.f32.mrf.mxu0
    %v4195 = vadd.f32 0.0, %v4194
    %v4196 = vpop.f32.mrf.mxu0
    %4197 = vmatprep.mubr.f32.mxu0 0.0
    %4198 = vmatmul.mubr.f32.gmra.mxu0 %v4110
    %v4199 = vpop.f32.mrf.mxu0
    %v4200 = vadd.f32 0.0, %v4199
    %v4201 = vpop.f32.mrf.mxu0
    %4202 = vdwg.mxu0
    %v4203 = vadd.f32 %v3923, %v4195
    %v4204 = vadd.f32 %v3924, %v4200
    %s4205 = scalar_lea.vmem %s9, 1
    %v4206 = vld [vmem:[%s4205] sm:$0x1]
    %v4208 = vlaneseq
    %v4209 = vshrl.u32 %v4208, 7
    %v4210 = vsub.s32 0, %v4209
    %v4211 = vrot.slane %v4206, %v4210
    %v4213 = vadd.f32 %v4203, %v4211
    %v4214 = vadd.f32 %v4204, %v4211
    %v4215 = vld [vmem:[%s10] sm:$0x1]
    %v4216 = vld [vmem:[%s11] sm:$0x1]
    %v4217 = vsel %vm48, %v4213, 0.0
    %4218 = vadd.xlane.f32.xlu0 %v4217
    %v4219 = vpop.xlane.xlu0 %4218
    %v4220 = vsel %vm48, %v4214, 0.0
    %4221 = vadd.xlane.f32.xlu0 %v4220
    %v4222 = vpop.xlane.xlu0 %4221
    %v4223 = vmul.f32 %v4219, %v55
    %v4224 = vmul.f32 %v4222, %v55
    %v4225 = vsub.f32 %v4213, %v4223
    %v4226 = vsub.f32 %v4214, %v4224
    %v4227 = vmul.f32 %v4225, %v4225
    %v4228 = vmul.f32 %v4226, %v4226
    %v4229 = vsel %vm48, %v4227, 0.0
    %4230 = vadd.xlane.f32.xlu0 %v4229
    %v4231 = vpop.xlane.xlu0 %4230
    %v4232 = vsel %vm48, %v4228, 0.0
    %4233 = vadd.xlane.f32.xlu0 %v4232
    %v4234 = vpop.xlane.xlu0 %4233
    %v4235 = vmul.f32 %v4231, %v55
    %v4236 = vmul.f32 %v4234, %v55
    %v4237 = vadd.f32 %v4235, 1e-05
    %v4238 = vadd.f32 %v4236, 1e-05
    %v4239 = vrsqrt.pop %v4237
    %v4240 = vrsqrt.pop %v4238
    %v4241 = vmul.f32 %v4225, %v4239
    %v4242 = vmul.f32 %v4226, %v4240
    %v4244 = vlaneseq
    %v4245 = vshrl.u32 %v4244, 7
    %v4246 = vsub.s32 0, %v4245
    %v4247 = vrot.slane %v4215, %v4246
    %v4249 = vmul.f32 %v4241, %v4247
    %v4250 = vmul.f32 %v4242, %v4247
    %v4252 = vlaneseq
    %v4253 = vshrl.u32 %v4252, 7
    %v4254 = vsub.s32 0, %v4253
    %v4255 = vrot.slane %v4216, %v4254
    %v4257 = vadd.f32 %v4249, %v4255
    %v4258 = vadd.f32 %v4250, %v4255
    %v4259 = vld [vmem:[%s12] sm:$0xff]
    %v4260 = vld [vmem:[%s12 + $0x8] sm:$0xff]
    %v4261 = vld [vmem:[%s12 + $0x10] sm:$0xff]
    %v4262 = vld [vmem:[%s12 + $0x18] sm:$0xff]
    %v4264 = vsel %vm48, %v4257, 0
    %v4267 = vsel %vm48, %v4258, 0
    %4269 = vmatprep.subr.mxu0 0.0
    %4270 = vmatpush1.msra.mxu0 0.0
    %4271 = vmatprep.subr.mxu0 0.0
    %4272 = vmatpush1.msra.mxu0 0.0
    %4273 = vmatprep.subr.mxu0 0.0
    %4274 = vmatpush1.msra.mxu0 0.0
    %4275 = vmatprep.subr.mxu0 0.0
    %4276 = vmatpush1.msra.mxu0 0.0
    %4277 = vmatprep.subr.mxu0 0.0
    %4278 = vmatpush1.msra.mxu0 0.0
    %4279 = vmatprep.subr.mxu0 0.0
    %4280 = vmatpush1.msra.mxu0 0.0
    %4281 = vmatprep.subr.mxu0 0.0
    %4282 = vmatpush1.msra.mxu0 0.0
    %4283 = vmatprep.subr.mxu0 0.0
    %4284 = vmatpush1.msra.mxu0 0.0
    %4285 = vmatprep.subr.mxu0 0.0
    %4286 = vmatpush1.msra.mxu0 0.0
    %4287 = vmatprep.subr.mxu0 0.0
    %4288 = vmatpush1.msra.mxu0 0.0
    %4289 = vmatprep.subr.mxu0 0.0
    %4290 = vmatpush1.msra.mxu0 0.0
    %4291 = vmatprep.subr.mxu0 0.0
    %4292 = vmatpush1.msra.mxu0 0.0
    %4293 = vmatprep.subr.mxu0 0.0
    %4294 = vmatpush1.msra.mxu0 %v4262
    %4295 = vmatprep.subr.mxu0 0.0
    %4296 = vmatpush1.msra.mxu0 %v4261
    %4297 = vmatprep.subr.mxu0 0.0
    %4298 = vmatpush1.msra.mxu0 %v4260
    %4299 = vmatprep.subr.mxu0 0.0
    %4300 = vmatpush1.msra.mxu0 %v4259
    %4301 = vmatprep.subr.mxu0 0.0
    %4302 = vmatpush2.msra.mxu0 0.0
    %4303 = vmatprep.subr.mxu0 0.0
    %4304 = vmatpush2.msra.mxu0 0.0
    %4305 = vmatprep.subr.mxu0 0.0
    %4306 = vmatpush2.msra.mxu0 0.0
    %4307 = vmatprep.subr.mxu0 0.0
    %4308 = vmatpush2.msra.mxu0 0.0
    %4309 = vmatprep.subr.mxu0 0.0
    %4310 = vmatpush2.msra.mxu0 0.0
    %4311 = vmatprep.subr.mxu0 0.0
    %4312 = vmatpush2.msra.mxu0 0.0
    %4313 = vmatprep.subr.mxu0 0.0
    %4314 = vmatpush2.msra.mxu0 0.0
    %4315 = vmatprep.subr.mxu0 0.0
    %4316 = vmatpush2.msra.mxu0 0.0
    %4317 = vmatprep.subr.mxu0 0.0
    %4318 = vmatpush2.msra.mxu0 0.0
    %4319 = vmatprep.subr.mxu0 0.0
    %4320 = vmatpush2.msra.mxu0 0.0
    %4321 = vmatprep.subr.mxu0 0.0
    %4322 = vmatpush2.msra.mxu0 0.0
    %4323 = vmatprep.subr.mxu0 0.0
    %4324 = vmatpush2.msra.mxu0 0.0
    %4325 = vmatprep.subr.mxu0 0.0
    %4326 = vmatpush2.msra.mxu0 0.0
    %4327 = vmatprep.subr.mxu0 0.0
    %4328 = vmatpush2.msra.mxu0 0.0
    %4329 = vmatprep.subr.mxu0 0.0
    %4330 = vmatpush2.msra.mxu0 0.0
    %4331 = vmatprep.subr.mxu0 0.0
    %4332 = vmatpush2.msra.mxu0 0.0
    %4333 = vmatprep.mubr.f32.mxu0 0.0
    %4334 = vmatmul.mubr.f32.gmra.mxu0 %v4264
    %v4335 = vpop.f32.mrf.mxu0
    %v4336 = vadd.f32 0.0, %v4335
    %v4337 = vpop.f32.mrf.mxu0
    %4338 = vmatprep.mubr.f32.mxu0 0.0
    %4339 = vmatmul.mubr.f32.gmra.mxu0 %v4267
    %v4340 = vpop.f32.mrf.mxu0
    %v4341 = vadd.f32 0.0, %v4340
    %v4342 = vpop.f32.mrf.mxu0
    %4343 = vdwg.mxu0
    %vm4344 = vcmask 130048
    %4345 = vst.msk [vmem:[#allocation2] sm:$0xff] %vm4344, %v4336
    %4346 = vst.msk [vmem:[#allocation2 + $0x8] sm:$0xff] %vm4344, %v4341
    // Predicated region
    $region54: #{tpu_custom_call.1} parent=1 // pred_check
      _
    $region55: #{tpu_custom_call.1} parent=1 // pred_check_branch
      %4348 = sbr.rel (0) target = $region57
    $region56: #{tpu_custom_call.1} parent=1 // pred_region
      %s4350 = ssub.s32 256, 256
      %4351 = vsyncadd [#allocation3], %s4350
      %s4352 = sshll.u32 [#allocation2], 4
      %s4353 = int_to_ptr.vmem [resolvable:$true] %s4352
      %4358 = dma.vmem_to_hbm [thread:$0]  %s4353, 256, %s13, [#allocation3], 128, 128, 8
    $region57: #{tpu_custom_call.1} parent=1 // pred_fallthru
      _
    // Predicated region
    $region58: #{tpu_custom_call.1} parent=1 // pred_check
      _
    $region59: #{tpu_custom_call.1} parent=1 // pred_check_branch
      %4360 = sbr.rel (0) target = $region61
    $region60: #{tpu_custom_call.1} parent=1 // pred_region
      %4361 = dma.done [#allocation3], 256
    $region61: #{tpu_custom_call.1} parent=1 // pred_fallthru
      _
    %4362 = vsyncpa [#allocation3], 1

</llo_original>
